<compile_context>
chip_gen: v6e
topology: v6e:2x2x1
jax: 0.10.0
libtpu: 0.0.40
codegen_flags: <defaults>
</compile_context>

<pallas_src>
import math

import jax
import jax.numpy as jnp
from jax import lax
from jax.experimental import pallas as pl
from jax.experimental.pallas import tpu as pltpu

NEG_SLOPE = 0.01                 # nn.LeakyReLU default
BN_EPS = 1e-5                    # nn.BatchNorm1d default eps
LOG_2PI = math.log(2.0 * math.pi)
QY_EPS = 1e-7                    # eps used on q_y in forward()
NSTAT = 8                        # per-sample stats lanes: [rec, qy_max, kld, clus, logq, 0, 0, 0]


# ---------------------------------------------------------------------------
# Shared helpers (pure jnp; used both inside the kernel and in the wrapper/ref)
# ---------------------------------------------------------------------------
def _leaky_relu(x):
    return jnp.where(x >= 0, x, NEG_SLOPE * x)


def _softplus(x):
    # numerically stable: max(x, 0) + log(1 + exp(-|x|))
    return jnp.maximum(x, 0.0) + jnp.log(1.0 + jnp.exp(-jnp.abs(x)))


def _softclip(t, lo, hi):
    # ut.softclip(tensor, -7, 7): two-sided soft clipping (min side then max side)
    r = lo + _softplus(t - lo)
    r = hi - _softplus(hi - r)
    return r


def _mlp(h, weights):
    """Linear (+ folded eval-BatchNorm) + LeakyReLU chain; plain Linear head.

    Weights are stored transposed as (in, out) in bf16 so both MXU operands are
    bf16; accumulation stays f32 via preferred_element_type. Biases are f32.
    """
    n = len(weights)
    for i, (w_ref, b_ref) in enumerate(weights):
        w = w_ref[...]
        h = jnp.dot(h.astype(w.dtype), w,
                    preferred_element_type=jnp.float32) + b_ref[...]
        if i < n - 1:
            h = _leaky_relu(h)
    return h


# ---------------------------------------------------------------------------
# Kernel factory
# ---------------------------------------------------------------------------
def _make_kernel(nz, ncls, n_qz, n_px, n_qy, n_ez):
    def kernel(*refs):
        it = iter(refs)
        x_ref = next(it)            # (TB, nx)
        noise_ref = next(it)        # (TB, nz)
        ls_ref = next(it)           # (1, nx)   softclip(logsigma_x, -7, 7)
        inv_sig_ref = next(it)      # (1, nx)   exp(-softclip(...))

        def take(n):
            return [(next(it), next(it)) for _ in range(n)]

        qz_w = take(n_qz)
        px_w = take(n_px)
        qy_w = take(n_qy)
        ez_w = take(n_ez)

        rec_ref = next(it)          # (TB, nx)
        lat_ref = next(it)          # (TB, 4*nz)  [mu | logvar | z | cz]
        qy_ref = next(it)           # (TB, ncls)
        stat_ref = next(it)         # (TB, NSTAT) per-sample loss partials

        x = x_ref[...]
        noise = noise_ref[...]

        # -------- Qz encoder: mu, logvar, reparameterized z --------
        q = _mlp(x, qz_w)                        # (TB, 2*nz) f32
        mu = q[:, :nz]
        logvar = q[:, nz:]
        z = mu + jnp.exp(0.5 * logvar) * noise

        # -------- Px decoder --------
        rec = _mlp(z, px_w)                      # (TB, nx) f32

        # -------- Qy head: q_y = softmax(exp(exp(tanh(Qy(x))))) --------
        hy = _mlp(x, qy_w)                       # (TB, ncls)
        u = jnp.exp(jnp.exp(jnp.tanh(hy)))
        u = u - jnp.max(u, axis=-1, keepdims=True)
        e = jnp.exp(u)
        q_y = e / jnp.sum(e, axis=-1, keepdims=True)
        q_y = QY_EPS / ncls + (1.0 - QY_EPS) * q_y

        # -------- Ez cluster embedding of q_y --------
        cz = _mlp(q_y, ez_w)                     # (TB, nz)

        # -------- per-sample loss partials (reduced over features only) --------
        diff = (x - rec) * inv_sig_ref[...]
        neg_logprob = 0.5 * diff * diff + ls_ref[...] + 0.5 * LOG_2PI   # -Normal.log_prob
        rec_row = jnp.sum(neg_logprob, axis=-1, keepdims=True)

        qymax_row = jnp.max(q_y, axis=-1, keepdims=True)

        expvar = jnp.exp(logvar)
        kld = -0.5 * (1.0 + logvar - mu * mu - expvar)
        kld_row = jnp.sum(kld, axis=-1, keepdims=True)

        d = cz - mu
        clus = 0.5 * (-1.0 - logvar + expvar + d * d)       # kld2normal, logvar2 = 0
        clus_row = jnp.sum(clus, axis=-1, keepdims=True)

        logq_row = jnp.sum(jnp.log(q_y), axis=-1, keepdims=True)

        # -------- streamed per-tile outputs (lane-packed latent slab) --------
        rec_ref[...] = rec
        lat_ref[:, 0:2 * nz] = q                 # mu | logvar
        lat_ref[:, 2 * nz:3 * nz] = z
        lat_ref[:, 3 * nz:] = cz
        qy_ref[...] = q_y

        lane = lax.broadcasted_iota(jnp.int32, stat_ref.shape, 1)
        packed = jnp.zeros(stat_ref.shape, jnp.float32)
        for j, v in enumerate((rec_row, qymax_row, kld_row, clus_row, logq_row)):
            packed = packed + jnp.where(lane == j, v, 0.0)
        stat_ref[...] = packed

    return kernel


# ---------------------------------------------------------------------------
# Wrapper
# ---------------------------------------------------------------------------
def _vmem_capacity_bytes():
    try:
        info = pltpu.get_tpu_info()
        cap = getattr(info, "vmem_capacity_bytes", None)
        if cap:
            return int(cap)
    except Exception:
        pass
    return 64 << 20   # conservative fallback (v7x per-TC VMEM)


def _pick_batch_tile(batch, max_tile, row_bytes, resident_bytes, budget):
    divs = [c for c in (512, 256, 128, 64, 32, 16, 8)
            if c <= max_tile and batch % c == 0]
    for cand in divs:                                   # largest tile that fits
        if resident_bytes + 2 * cand * row_bytes <= budget:
            return cand
    if divs:
        return divs[-1]
    return batch      # small / ragged batch: single tile


def vae_forward(x_img, noise, params, *, dscale=10.0, concentration=0.005,
                max_batch_tile=512):
    """Eval-mode VAE_Type1005.forward (y=None). Returns dict mirroring the module."""
    batch = x_img.shape[0]
    x = x_img.reshape(batch, -1).astype(jnp.float32)      # nn.Flatten()
    nx = x.shape[1]
    nz = noise.shape[1]
    qz, px, qy, ez = params["Qz"], params["Px"], params["Qy"], params["Ez"]
    ncls = int(qy[-1][1].shape[-1])
    nh = int(qz[0][0].shape[-1])

    # Hoisted once per call (2 tiny XLA ops) instead of once per batch tile.
    ls = _softclip(params["logsigma_x"].reshape(1, nx).astype(jnp.float32), -7.0, 7.0)
    inv_sigma = jnp.exp(-ls)

    # Dirichlet(alpha = concentration * ones(ncls)) log-normalizer (constant).
    dir_const = math.lgamma(ncls * concentration) - ncls * math.lgamma(concentration)

    # ---- bf16 weight residency + VMEM-budget-aware batch tile ----
    weight_bytes = 0
    for net in (qz, px, qy, ez):
        for w, b in net:
            weight_bytes += w.size * 2 + b.size * 4
    vmem_cap = _vmem_capacity_bytes()
    # rough per-sample footprint: streamed I/O rows + live f32/bf16 activations
    row_bytes = 4 * (3 * nx + 8 * nz + 3 * ncls + NSTAT) + 8 * nh
    tb = _pick_batch_tile(batch, max_batch_tile, row_bytes, weight_bytes,
                          int(0.6 * vmem_cap))
    grid = (batch // tb,)

    # ---- flatten inputs + matching BlockSpecs ----
    flat_inputs = [x, noise.astype(jnp.float32), ls, inv_sigma]
    in_specs = [
        pl.BlockSpec((tb, nx), lambda i: (i, 0)),
        pl.BlockSpec((tb, nz), lambda i: (i, 0)),
        pl.BlockSpec((1, nx), lambda i: (0, 0)),
        pl.BlockSpec((1, nx), lambda i: (0, 0)),
    ]
    for net in (qz, px, qy, ez):
        for w, b in net:
            wb = w.astype(jnp.bfloat16)            # bf16 weights: half HBM/VMEM, MXU-native
            bb = b.reshape(1, -1).astype(jnp.float32)
            flat_inputs += [wb, bb]
            in_specs += [
                pl.BlockSpec(wb.shape, lambda i: (0, 0)),  # weight-resident across grid
                pl.BlockSpec(bb.shape, lambda i: (0, 0)),
            ]

    out_shape = (
        jax.ShapeDtypeStruct((batch, nx), jnp.float32),       # rec
        jax.ShapeDtypeStruct((batch, 4 * nz), jnp.float32),   # [mu|logvar|z|cz]
        jax.ShapeDtypeStruct((batch, ncls), jnp.float32),     # q_y
        jax.ShapeDtypeStruct((batch, NSTAT), jnp.float32),    # per-sample loss partials
    )
    out_specs = [
        pl.BlockSpec((tb, nx), lambda i: (i, 0)),
        pl.BlockSpec((tb, 4 * nz), lambda i: (i, 0)),
        pl.BlockSpec((tb, ncls), lambda i: (i, 0)),
        pl.BlockSpec((tb, NSTAT), lambda i: (i, 0)),
    ]

    # ---- VMEM budget: resident weights + double-buffered streamed tiles ----
    tile_io_bytes = 4 * tb * (2 * nx + 5 * nz + ncls + NSTAT) + 8 * nx
    vmem_limit = weight_bytes + 4 * tile_io_bytes + (16 << 20)
    vmem_limit = max(32 << 20, min(vmem_limit, int(0.9 * vmem_cap)))

    flops = 0
    for net in (qz, px, qy, ez):
        for w, _ in net:
            flops += 2 * batch * int(w.shape[0]) * int(w.shape[1])
    cost = pl.CostEstimate(
        flops=int(flops),
        transcendentals=int(batch * (2 * nx + 6 * nz + 8 * ncls)),
        bytes_accessed=int(weight_bytes + 4 * batch * (2 * nx + 5 * nz + 2 * ncls + NSTAT)),
    )

    kernel = _make_kernel(nz, ncls, len(qz), len(px), len(qy), len(ez))

    rec, lat, q_y, stats = pl.pallas_call(
        kernel,
        out_shape=out_shape,
        grid_spec=pltpu.PrefetchScalarGridSpec(
            num_scalar_prefetch=0,
            grid=grid,
            in_specs=in_specs,
            out_specs=out_specs,
        ),
        compiler_params=pltpu.CompilerParams(
            dimension_semantics=("parallel",),   # no carried state -> megacore-shardable
            vmem_limit_bytes=vmem_limit,
        ),
        cost_estimate=cost,
    )(*flat_inputs)

    mu = lat[:, :nz]
    logvar = lat[:, nz:2 * nz]
    z = lat[:, 2 * nz:3 * nz]
    cz = lat[:, 3 * nz:]

    # ---- tiny wrapper-side reduction of the per-sample loss partials ----
    loss_rec = jnp.mean(stats[:, 0])
    loss_cat = -10.0 * jnp.mean(stats[:, 1])
    loss_z = jnp.mean(stats[:, 2])
    loss_cluster = jnp.mean(stats[:, 3])
    loss_q = -((concentration - 1.0) * jnp.mean(stats[:, 4]) + dir_const)
    m = jnp.mean(q_y, axis=0)                              # q_y.mean(0)
    loss_l = jnp.sum(m * (jnp.log(m) + math.log(float(ncls))))   # y=None branch
    num_clusters = jnp.sum((jnp.max(q_y, axis=0) > 0.5).astype(jnp.float32))
    total = loss_rec + float(ncls) * loss_l + loss_cluster + float(dscale) * loss_q

    losses = {"rec": loss_rec, "cat": loss_cat, "z": loss_z, "l": loss_l,
              "cluster": loss_cluster, "loss_q": loss_q,
              "total_loss": total, "num_clusters": num_clusters}
    return {"z": z, "mu": mu, "logvar": logvar, "rec": rec,
            "q_y": q_y, "cz": cz, "losses": losses}


# ---------------------------------------------------------------------------
# Pure-JAX reference (same bf16 weight/activation quantization) for validation
# ---------------------------------------------------------------------------
def vae_forward_ref(x_img, noise, params, *, dscale=10.0, concentration=0.005):
    batch = x_img.shape[0]
    x = x_img.reshape(batch, -1).astype(jnp.float32)
    nz = noise.shape[1]
    qz, px, qy, ez = params["Qz"], params["Px"], params["Qy"], params["Ez"]
    ncls = int(qy[-1][1].shape[-1])

    def mlp(h, net):
        n = len(net)
        for i, (w, b) in enumerate(net):
            h = jnp.dot(h.astype(jnp.bfloat16), w.astype(jnp.bfloat16),
                        preferred_element_type=jnp.float32) + b.reshape(1, -1)
            if i < n - 1:
                h = _leaky_relu(h)
        return h

    q = mlp(x, qz)
    mu, logvar = q[:, :nz], q[:, nz:]
    z = mu + jnp.exp(0.5 * logvar) * noise
    rec = mlp(z, px)
    hy = mlp(x, qy)
    u = jnp.exp(jnp.exp(jnp.tanh(hy)))
    u = u - jnp.max(u, axis=-1, keepdims=True)
    e = jnp.exp(u)
    q_y = e / jnp.sum(e, axis=-1, keepdims=True)
    q_y = QY_EPS / ncls + (1.0 - QY_EPS) * q_y
    cz = mlp(q_y, ez)

    ls = _softclip(params["logsigma_x"].reshape(1, -1).astype(jnp.float32), -7.0, 7.0)
    diff = (x - rec) * jnp.exp(-ls)
    loss_rec = jnp.mean(jnp.sum(0.5 * diff * diff + ls + 0.5 * LOG_2PI, axis=-1))
    loss_cat = -10.0 * jnp.mean(jnp.max(q_y, axis=-1))
    loss_z = jnp.mean(jnp.sum(-0.5 * (1 + logvar - mu * mu - jnp.exp(logvar)), axis=-1))
    d = cz - mu
    loss_cluster = jnp.mean(jnp.sum(0.5 * (-1 - logvar + jnp.exp(logvar) + d * d), axis=-1))
    dir_const = math.lgamma(ncls * concentration) - ncls * math.lgamma(concentration)
    loss_q = -((concentration - 1.0) * jnp.mean(jnp.sum(jnp.log(q_y), axis=-1)) + dir_const)
    m = jnp.mean(q_y, axis=0)
    loss_l = jnp.sum(m * (jnp.log(m) + math.log(float(ncls))))
    total = loss_rec + float(ncls) * loss_l + loss_cluster + float(dscale) * loss_q
    num_clusters = jnp.sum((jnp.max(q_y, axis=0) > 0.5).astype(jnp.float32))
    losses = {"rec": loss_rec, "cat": loss_cat, "z": loss_z, "l": loss_l,
              "cluster": loss_cluster, "loss_q": loss_q,
              "total_loss": total, "num_clusters": num_clusters}
    return {"z": z, "mu": mu, "logvar": logvar, "rec": rec,
            "q_y": q_y, "cz": cz, "losses": losses}


# ---------------------------------------------------------------------------
# Deterministic parameter init: nn.Linear default U(+-1/sqrt(fan_in)); eval-mode
# BatchNorm1d (gamma=1, beta=0, running stats 0/1) folded into the hidden linears.
# ---------------------------------------------------------------------------
def init_mlp(key, dims, *, batchnorm=True):
    params = []
    n = len(dims) - 1
    for i in range(n):
        key, kw, kb = jax.random.split(key, 3)
        fan_in, fan_out = dims[i], dims[i + 1]
        bound = 1.0 / math.sqrt(fan_in)
        w = jax.random.uniform(kw, (fan_in, fan_out), jnp.float32, -bound, bound)
        b = jax.random.uniform(kb, (fan_out,), jnp.float32, -bound, bound)
        if batchnorm and i < n - 1:
            scale = 1.0 / math.sqrt(1.0 + BN_EPS)
            w = w * scale
            b = b * scale
        params.append((w, b))
    return key, params


if __name__ == "__main__":
    # Small shapes consistent with the module (nx=28**2, nh=3024, nz=200,
    # nclasses=10, numhidden=3 scaled down): image (B,1,16,16) -> nx=256,
    # nh=128, nz=64, nclasses=10, numhidden=2, batch=16 (two batch tiles of 8).
    batch, nx, nh, nz, ncls, numhidden = 16, 256, 128, 64, 10, 2

    key = jax.random.PRNGKey(0)
    key, kx, kn = jax.random.split(key, 3)
    x_img = jax.random.uniform(kx, (batch, 1, 16, 16), jnp.float32)
    noise = jax.random.normal(kn, (batch, nz), jnp.float32)   # torch.randn_like(mu)

    key, qz_p = init_mlp(key, [nx] + numhidden * [nh] + [2 * nz])
    key, px_p = init_mlp(key, [nz] + numhidden * [nh] + [nx])
    key, qy_p = init_mlp(key, [nx] + numhidden * [nh] + [ncls])
    key, ez_p = init_mlp(key, [ncls] + numhidden * [nh] + [nz])
    params = {"Qz": qz_p, "Px": px_p, "Qy": qy_p, "Ez": ez_p,
              "logsigma_x": jnp.zeros((nx,), jnp.float32)}

    out = vae_forward(x_img, noise, params, max_batch_tile=8)
    out = jax.block_until_ready(out)
    ref = jax.block_until_ready(vae_forward_ref(x_img, noise, params))

    assert out["rec"].shape == (batch, nx)
    assert out["z"].shape == (batch, nz)
    assert out["mu"].shape == (batch, nz)
    assert out["logvar"].shape == (batch, nz)
    assert out["q_y"].shape == (batch, ncls)
    assert out["cz"].shape == (batch, nz)

    for name in ("rec", "mu", "logvar", "z", "q_y", "cz"):
        assert bool(jnp.all(jnp.isfinite(out[name]))), name
        assert bool(jnp.allclose(out[name], ref[name], rtol=5e-2, atol=5e-2)), name
    for name, v in out["losses"].items():
        assert bool(jnp.isfinite(v)), name
        if name != "num_clusters":
            assert bool(jnp.allclose(v, ref["losses"][name], rtol=5e-2, atol=5e-2)), name

    print("KERNEL_OK")
</pallas_src>

<mosaic_0001>
module attributes {stable_mosaic.version = 11 : i64} {
  func.func @kernel(%arg0: i32, %arg1: memref<8x256xf32, #tpu.memory_space<vmem>>, %arg2: memref<8x64xf32, #tpu.memory_space<vmem>>, %arg3: memref<1x256xf32, #tpu.memory_space<vmem>>, %arg4: memref<1x256xf32, #tpu.memory_space<vmem>>, %arg5: memref<256x128xbf16, #tpu.memory_space<vmem>>, %arg6: memref<1x128xf32, #tpu.memory_space<vmem>>, %arg7: memref<128x128xbf16, #tpu.memory_space<vmem>>, %arg8: memref<1x128xf32, #tpu.memory_space<vmem>>, %arg9: memref<128x128xbf16, #tpu.memory_space<vmem>>, %arg10: memref<1x128xf32, #tpu.memory_space<vmem>>, %arg11: memref<64x128xbf16, #tpu.memory_space<vmem>>, %arg12: memref<1x128xf32, #tpu.memory_space<vmem>>, %arg13: memref<128x128xbf16, #tpu.memory_space<vmem>>, %arg14: memref<1x128xf32, #tpu.memory_space<vmem>>, %arg15: memref<128x256xbf16, #tpu.memory_space<vmem>>, %arg16: memref<1x256xf32, #tpu.memory_space<vmem>>, %arg17: memref<256x128xbf16, #tpu.memory_space<vmem>>, %arg18: memref<1x128xf32, #tpu.memory_space<vmem>>, %arg19: memref<128x128xbf16, #tpu.memory_space<vmem>>, %arg20: memref<1x128xf32, #tpu.memory_space<vmem>>, %arg21: memref<128x10xbf16, #tpu.memory_space<vmem>>, %arg22: memref<1x10xf32, #tpu.memory_space<vmem>>, %arg23: memref<10x128xbf16, #tpu.memory_space<vmem>>, %arg24: memref<1x128xf32, #tpu.memory_space<vmem>>, %arg25: memref<128x128xbf16, #tpu.memory_space<vmem>>, %arg26: memref<1x128xf32, #tpu.memory_space<vmem>>, %arg27: memref<128x64xbf16, #tpu.memory_space<vmem>>, %arg28: memref<1x64xf32, #tpu.memory_space<vmem>>, %arg29: memref<8x256xf32, #tpu.memory_space<vmem>>, %arg30: memref<8x256xf32, #tpu.memory_space<vmem>>, %arg31: memref<8x10xf32, #tpu.memory_space<vmem>>, %arg32: memref<8x8xf32, #tpu.memory_space<vmem>>) attributes {dimension_semantics = [#tpu.dimension_semantics<parallel>], iteration_bounds = array<i64: 2>, scalar_prefetch = 0 : i64, scratch_operands = 0 : i64, tpu.core_type = #tpu.core_type<tc>, window_params = [{transform_indices = @transform_0, window_bounds = array<i64: 8, 256>}, {transform_indices = @transform_1, window_bounds = array<i64: 8, 64>}, {pipeline_mode = #tpu.pipeline_mode<synchronous>, transform_indices = @transform_2, window_bounds = array<i64: 1, 256>}, {pipeline_mode = #tpu.pipeline_mode<synchronous>, transform_indices = @transform_3, window_bounds = array<i64: 1, 256>}, {pipeline_mode = #tpu.pipeline_mode<synchronous>, transform_indices = @transform_4, window_bounds = array<i64: 256, 128>}, {pipeline_mode = #tpu.pipeline_mode<synchronous>, transform_indices = @transform_5, window_bounds = array<i64: 1, 128>}, {pipeline_mode = #tpu.pipeline_mode<synchronous>, transform_indices = @transform_6, window_bounds = array<i64: 128, 128>}, {pipeline_mode = #tpu.pipeline_mode<synchronous>, transform_indices = @transform_7, window_bounds = array<i64: 1, 128>}, {pipeline_mode = #tpu.pipeline_mode<synchronous>, transform_indices = @transform_8, window_bounds = array<i64: 128, 128>}, {pipeline_mode = #tpu.pipeline_mode<synchronous>, transform_indices = @transform_9, window_bounds = array<i64: 1, 128>}, {pipeline_mode = #tpu.pipeline_mode<synchronous>, transform_indices = @transform_10, window_bounds = array<i64: 64, 128>}, {pipeline_mode = #tpu.pipeline_mode<synchronous>, transform_indices = @transform_11, window_bounds = array<i64: 1, 128>}, {pipeline_mode = #tpu.pipeline_mode<synchronous>, transform_indices = @transform_12, window_bounds = array<i64: 128, 128>}, {pipeline_mode = #tpu.pipeline_mode<synchronous>, transform_indices = @transform_13, window_bounds = array<i64: 1, 128>}, {pipeline_mode = #tpu.pipeline_mode<synchronous>, transform_indices = @transform_14, window_bounds = array<i64: 128, 256>}, {pipeline_mode = #tpu.pipeline_mode<synchronous>, transform_indices = @transform_15, window_bounds = array<i64: 1, 256>}, {pipeline_mode = #tpu.pipeline_mode<synchronous>, transform_indices = @transform_16, window_bounds = array<i64: 256, 128>}, {pipeline_mode = #tpu.pipeline_mode<synchronous>, transform_indices = @transform_17, window_bounds = array<i64: 1, 128>}, {pipeline_mode = #tpu.pipeline_mode<synchronous>, transform_indices = @transform_18, window_bounds = array<i64: 128, 128>}, {pipeline_mode = #tpu.pipeline_mode<synchronous>, transform_indices = @transform_19, window_bounds = array<i64: 1, 128>}, {pipeline_mode = #tpu.pipeline_mode<synchronous>, transform_indices = @transform_20, window_bounds = array<i64: 128, 10>}, {pipeline_mode = #tpu.pipeline_mode<synchronous>, transform_indices = @transform_21, window_bounds = array<i64: 1, 10>}, {pipeline_mode = #tpu.pipeline_mode<synchronous>, transform_indices = @transform_22, window_bounds = array<i64: 10, 128>}, {pipeline_mode = #tpu.pipeline_mode<synchronous>, transform_indices = @transform_23, window_bounds = array<i64: 1, 128>}, {pipeline_mode = #tpu.pipeline_mode<synchronous>, transform_indices = @transform_24, window_bounds = array<i64: 128, 128>}, {pipeline_mode = #tpu.pipeline_mode<synchronous>, transform_indices = @transform_25, window_bounds = array<i64: 1, 128>}, {pipeline_mode = #tpu.pipeline_mode<synchronous>, transform_indices = @transform_26, window_bounds = array<i64: 128, 64>}, {pipeline_mode = #tpu.pipeline_mode<synchronous>, transform_indices = @transform_27, window_bounds = array<i64: 1, 64>}, {transform_indices = @transform_28, window_bounds = array<i64: 8, 256>}, {transform_indices = @transform_29, window_bounds = array<i64: 8, 256>}, {transform_indices = @transform_30, window_bounds = array<i64: 8, 10>}, {transform_indices = @transform_31, window_bounds = array<i64: 8, 8>}]} {
    %c0 = arith.constant 0 : index
    %c0_0 = arith.constant 0 : index
    %0 = vector.load %arg1[%c0, %c0_0] : memref<8x256xf32, #tpu.memory_space<vmem>>, vector<8x256xf32>
    %c0_1 = arith.constant 0 : index
    %c0_2 = arith.constant 0 : index
    %1 = vector.load %arg2[%c0_1, %c0_2] : memref<8x64xf32, #tpu.memory_space<vmem>>, vector<8x64xf32>
    %c0_3 = arith.constant 0 : index
    %c0_4 = arith.constant 0 : index
    %2 = vector.load %arg5[%c0_3, %c0_4] : memref<256x128xbf16, #tpu.memory_space<vmem>>, vector<256x128xbf16>
    %3 = arith.truncf %0 : vector<8x256xf32> to vector<8x256xbf16>
    %cst = arith.constant dense<0.000000e+00> : vector<8x128xf32>
    %4 = tpu.matmul %3, %2, %cst {dimension_numbers = #tpu.dot_dimension_numbers<[1], [0], [0], [1], [0, 0, 1, 1], [], []>} : vector<8x256xbf16>, vector<256x128xbf16>, vector<8x128xf32> -> vector<8x128xf32>
    %c0_5 = arith.constant 0 : index
    %c0_6 = arith.constant 0 : index
    %5 = vector.load %arg6[%c0_5, %c0_6] : memref<1x128xf32, #tpu.memory_space<vmem>>, vector<1x128xf32>
    %6 = vector.broadcast %5 : vector<1x128xf32> to vector<8x128xf32>
    %7 = arith.addf %4, %6 : vector<8x128xf32>
    %cst_7 = arith.constant 0.000000e+00 : f32
    %8 = vector.broadcast %cst_7 : f32 to vector<8x128xf32>
    %9 = arith.cmpf oge, %7, %8 : vector<8x128xf32>
    %cst_8 = arith.constant 0.00999999977 : f32
    %10 = vector.broadcast %cst_8 : f32 to vector<8x128xf32>
    %11 = arith.mulf %10, %7 : vector<8x128xf32>
    %12 = arith.select %9, %7, %11 : vector<8x128xi1>, vector<8x128xf32>
    %c0_9 = arith.constant 0 : index
    %c0_10 = arith.constant 0 : index
    %13 = vector.load %arg7[%c0_9, %c0_10] : memref<128x128xbf16, #tpu.memory_space<vmem>>, vector<128x128xbf16>
    %14 = arith.truncf %12 : vector<8x128xf32> to vector<8x128xbf16>
    %cst_11 = arith.constant dense<0.000000e+00> : vector<8x128xf32>
    %15 = tpu.matmul %14, %13, %cst_11 {dimension_numbers = #tpu.dot_dimension_numbers<[1], [0], [0], [1], [0, 0, 1, 1], [], []>} : vector<8x128xbf16>, vector<128x128xbf16>, vector<8x128xf32> -> vector<8x128xf32>
    %c0_12 = arith.constant 0 : index
    %c0_13 = arith.constant 0 : index
    %16 = vector.load %arg8[%c0_12, %c0_13] : memref<1x128xf32, #tpu.memory_space<vmem>>, vector<1x128xf32>
    %17 = vector.broadcast %16 : vector<1x128xf32> to vector<8x128xf32>
    %18 = arith.addf %15, %17 : vector<8x128xf32>
    %cst_14 = arith.constant 0.000000e+00 : f32
    %19 = vector.broadcast %cst_14 : f32 to vector<8x128xf32>
    %20 = arith.cmpf oge, %18, %19 : vector<8x128xf32>
    %cst_15 = arith.constant 0.00999999977 : f32
    %21 = vector.broadcast %cst_15 : f32 to vector<8x128xf32>
    %22 = arith.mulf %21, %18 : vector<8x128xf32>
    %23 = arith.select %20, %18, %22 : vector<8x128xi1>, vector<8x128xf32>
    %c0_16 = arith.constant 0 : index
    %c0_17 = arith.constant 0 : index
    %24 = vector.load %arg9[%c0_16, %c0_17] : memref<128x128xbf16, #tpu.memory_space<vmem>>, vector<128x128xbf16>
    %25 = arith.truncf %23 : vector<8x128xf32> to vector<8x128xbf16>
    %cst_18 = arith.constant dense<0.000000e+00> : vector<8x128xf32>
    %26 = tpu.matmul %25, %24, %cst_18 {dimension_numbers = #tpu.dot_dimension_numbers<[1], [0], [0], [1], [0, 0, 1, 1], [], []>} : vector<8x128xbf16>, vector<128x128xbf16>, vector<8x128xf32> -> vector<8x128xf32>
    %c0_19 = arith.constant 0 : index
    %c0_20 = arith.constant 0 : index
    %27 = vector.load %arg10[%c0_19, %c0_20] : memref<1x128xf32, #tpu.memory_space<vmem>>, vector<1x128xf32>
    %28 = vector.broadcast %27 : vector<1x128xf32> to vector<8x128xf32>
    %29 = arith.addf %26, %28 : vector<8x128xf32>
    %30 = vector.extract_strided_slice %29 {offsets = [0, 0], sizes = [8, 64], strides = [1, 1]} : vector<8x128xf32> to vector<8x64xf32>
    %31 = vector.extract_strided_slice %29 {offsets = [0, 64], sizes = [8, 64], strides = [1, 1]} : vector<8x128xf32> to vector<8x64xf32>
    %cst_21 = arith.constant 5.000000e-01 : f32
    %32 = vector.broadcast %cst_21 : f32 to vector<8x64xf32>
    %33 = arith.mulf %32, %31 : vector<8x64xf32>
    %34 = math.exp %33 : vector<8x64xf32>
    %35 = arith.mulf %34, %1 : vector<8x64xf32>
    %36 = arith.addf %30, %35 : vector<8x64xf32>
    %c0_22 = arith.constant 0 : index
    %c0_23 = arith.constant 0 : index
    %37 = vector.load %arg11[%c0_22, %c0_23] : memref<64x128xbf16, #tpu.memory_space<vmem>>, vector<64x128xbf16>
    %38 = arith.truncf %36 : vector<8x64xf32> to vector<8x64xbf16>
    %cst_24 = arith.constant dense<0.000000e+00> : vector<8x128xf32>
    %39 = tpu.matmul %38, %37, %cst_24 {dimension_numbers = #tpu.dot_dimension_numbers<[1], [0], [0], [1], [0, 0, 1, 1], [], []>} : vector<8x64xbf16>, vector<64x128xbf16>, vector<8x128xf32> -> vector<8x128xf32>
    %c0_25 = arith.constant 0 : index
    %c0_26 = arith.constant 0 : index
    %40 = vector.load %arg12[%c0_25, %c0_26] : memref<1x128xf32, #tpu.memory_space<vmem>>, vector<1x128xf32>
    %41 = vector.broadcast %40 : vector<1x128xf32> to vector<8x128xf32>
    %42 = arith.addf %39, %41 : vector<8x128xf32>
    %cst_27 = arith.constant 0.000000e+00 : f32
    %43 = vector.broadcast %cst_27 : f32 to vector<8x128xf32>
    %44 = arith.cmpf oge, %42, %43 : vector<8x128xf32>
    %cst_28 = arith.constant 0.00999999977 : f32
    %45 = vector.broadcast %cst_28 : f32 to vector<8x128xf32>
    %46 = arith.mulf %45, %42 : vector<8x128xf32>
    %47 = arith.select %44, %42, %46 : vector<8x128xi1>, vector<8x128xf32>
    %c0_29 = arith.constant 0 : index
    %c0_30 = arith.constant 0 : index
    %48 = vector.load %arg13[%c0_29, %c0_30] : memref<128x128xbf16, #tpu.memory_space<vmem>>, vector<128x128xbf16>
    %49 = arith.truncf %47 : vector<8x128xf32> to vector<8x128xbf16>
    %cst_31 = arith.constant dense<0.000000e+00> : vector<8x128xf32>
    %50 = tpu.matmul %49, %48, %cst_31 {dimension_numbers = #tpu.dot_dimension_numbers<[1], [0], [0], [1], [0, 0, 1, 1], [], []>} : vector<8x128xbf16>, vector<128x128xbf16>, vector<8x128xf32> -> vector<8x128xf32>
    %c0_32 = arith.constant 0 : index
    %c0_33 = arith.constant 0 : index
    %51 = vector.load %arg14[%c0_32, %c0_33] : memref<1x128xf32, #tpu.memory_space<vmem>>, vector<1x128xf32>
    %52 = vector.broadcast %51 : vector<1x128xf32> to vector<8x128xf32>
    %53 = arith.addf %50, %52 : vector<8x128xf32>
    %cst_34 = arith.constant 0.000000e+00 : f32
    %54 = vector.broadcast %cst_34 : f32 to vector<8x128xf32>
    %55 = arith.cmpf oge, %53, %54 : vector<8x128xf32>
    %cst_35 = arith.constant 0.00999999977 : f32
    %56 = vector.broadcast %cst_35 : f32 to vector<8x128xf32>
    %57 = arith.mulf %56, %53 : vector<8x128xf32>
    %58 = arith.select %55, %53, %57 : vector<8x128xi1>, vector<8x128xf32>
    %c0_36 = arith.constant 0 : index
    %c0_37 = arith.constant 0 : index
    %59 = vector.load %arg15[%c0_36, %c0_37] : memref<128x256xbf16, #tpu.memory_space<vmem>>, vector<128x256xbf16>
    %60 = arith.truncf %58 : vector<8x128xf32> to vector<8x128xbf16>
    %cst_38 = arith.constant dense<0.000000e+00> : vector<8x256xf32>
    %61 = tpu.matmul %60, %59, %cst_38 {dimension_numbers = #tpu.dot_dimension_numbers<[1], [0], [0], [1], [0, 0, 1, 1], [], []>} : vector<8x128xbf16>, vector<128x256xbf16>, vector<8x256xf32> -> vector<8x256xf32>
    %c0_39 = arith.constant 0 : index
    %c0_40 = arith.constant 0 : index
    %62 = vector.load %arg16[%c0_39, %c0_40] : memref<1x256xf32, #tpu.memory_space<vmem>>, vector<1x256xf32>
    %63 = vector.broadcast %62 : vector<1x256xf32> to vector<8x256xf32>
    %64 = arith.addf %61, %63 : vector<8x256xf32>
    %c0_41 = arith.constant 0 : index
    %c0_42 = arith.constant 0 : index
    %65 = vector.load %arg17[%c0_41, %c0_42] : memref<256x128xbf16, #tpu.memory_space<vmem>>, vector<256x128xbf16>
    %66 = arith.truncf %0 : vector<8x256xf32> to vector<8x256xbf16>
    %cst_43 = arith.constant dense<0.000000e+00> : vector<8x128xf32>
    %67 = tpu.matmul %66, %65, %cst_43 {dimension_numbers = #tpu.dot_dimension_numbers<[1], [0], [0], [1], [0, 0, 1, 1], [], []>} : vector<8x256xbf16>, vector<256x128xbf16>, vector<8x128xf32> -> vector<8x128xf32>
    %c0_44 = arith.constant 0 : index
    %c0_45 = arith.constant 0 : index
    %68 = vector.load %arg18[%c0_44, %c0_45] : memref<1x128xf32, #tpu.memory_space<vmem>>, vector<1x128xf32>
    %69 = vector.broadcast %68 : vector<1x128xf32> to vector<8x128xf32>
    %70 = arith.addf %67, %69 : vector<8x128xf32>
    %cst_46 = arith.constant 0.000000e+00 : f32
    %71 = vector.broadcast %cst_46 : f32 to vector<8x128xf32>
    %72 = arith.cmpf oge, %70, %71 : vector<8x128xf32>
    %cst_47 = arith.constant 0.00999999977 : f32
    %73 = vector.broadcast %cst_47 : f32 to vector<8x128xf32>
    %74 = arith.mulf %73, %70 : vector<8x128xf32>
    %75 = arith.select %72, %70, %74 : vector<8x128xi1>, vector<8x128xf32>
    %c0_48 = arith.constant 0 : index
    %c0_49 = arith.constant 0 : index
    %76 = vector.load %arg19[%c0_48, %c0_49] : memref<128x128xbf16, #tpu.memory_space<vmem>>, vector<128x128xbf16>
    %77 = arith.truncf %75 : vector<8x128xf32> to vector<8x128xbf16>
    %cst_50 = arith.constant dense<0.000000e+00> : vector<8x128xf32>
    %78 = tpu.matmul %77, %76, %cst_50 {dimension_numbers = #tpu.dot_dimension_numbers<[1], [0], [0], [1], [0, 0, 1, 1], [], []>} : vector<8x128xbf16>, vector<128x128xbf16>, vector<8x128xf32> -> vector<8x128xf32>
    %c0_51 = arith.constant 0 : index
    %c0_52 = arith.constant 0 : index
    %79 = vector.load %arg20[%c0_51, %c0_52] : memref<1x128xf32, #tpu.memory_space<vmem>>, vector<1x128xf32>
    %80 = vector.broadcast %79 : vector<1x128xf32> to vector<8x128xf32>
    %81 = arith.addf %78, %80 : vector<8x128xf32>
    %cst_53 = arith.constant 0.000000e+00 : f32
    %82 = vector.broadcast %cst_53 : f32 to vector<8x128xf32>
    %83 = arith.cmpf oge, %81, %82 : vector<8x128xf32>
    %cst_54 = arith.constant 0.00999999977 : f32
    %84 = vector.broadcast %cst_54 : f32 to vector<8x128xf32>
    %85 = arith.mulf %84, %81 : vector<8x128xf32>
    %86 = arith.select %83, %81, %85 : vector<8x128xi1>, vector<8x128xf32>
    %c0_55 = arith.constant 0 : index
    %c0_56 = arith.constant 0 : index
    %87 = vector.load %arg21[%c0_55, %c0_56] : memref<128x10xbf16, #tpu.memory_space<vmem>>, vector<128x10xbf16>
    %88 = arith.truncf %86 : vector<8x128xf32> to vector<8x128xbf16>
    %cst_57 = arith.constant dense<0.000000e+00> : vector<8x10xf32>
    %89 = tpu.matmul %88, %87, %cst_57 {dimension_numbers = #tpu.dot_dimension_numbers<[1], [0], [0], [1], [0, 0, 1, 1], [], []>} : vector<8x128xbf16>, vector<128x10xbf16>, vector<8x10xf32> -> vector<8x10xf32>
    %c0_58 = arith.constant 0 : index
    %c0_59 = arith.constant 0 : index
    %90 = vector.load %arg22[%c0_58, %c0_59] : memref<1x10xf32, #tpu.memory_space<vmem>>, vector<1x10xf32>
    %91 = vector.broadcast %90 : vector<1x10xf32> to vector<8x10xf32>
    %92 = arith.addf %89, %91 : vector<8x10xf32>
    %93 = math.tanh %92 : vector<8x10xf32>
    %94 = math.exp %93 : vector<8x10xf32>
    %95 = math.exp %94 : vector<8x10xf32>
    %cst_60 = arith.constant dense<0xFF800000> : vector<8xf32>
    %96 = vector.multi_reduction <maximumf>, %95, %cst_60 [1] : vector<8x10xf32> to vector<8xf32>
    %97 = vector.shape_cast %96 : vector<8xf32> to vector<8x1xf32>
    %98 = vector.broadcast %97 : vector<8x1xf32> to vector<8x10xf32>
    %99 = arith.subf %95, %98 : vector<8x10xf32>
    %100 = math.exp %99 : vector<8x10xf32>
    %cst_61 = arith.constant dense<0.000000e+00> : vector<8xf32>
    %101 = vector.multi_reduction <add>, %100, %cst_61 [1] : vector<8x10xf32> to vector<8xf32>
    %102 = vector.shape_cast %101 : vector<8xf32> to vector<8x1xf32>
    %103 = vector.broadcast %102 : vector<8x1xf32> to vector<8x10xf32>
    %104 = arith.divf %100, %103 : vector<8x10xf32>
    %cst_62 = arith.constant 0.99999988 : f32
    %105 = vector.broadcast %cst_62 : f32 to vector<8x10xf32>
    %106 = arith.mulf %105, %104 : vector<8x10xf32>
    %cst_63 = arith.constant 9.99999993E-9 : f32
    %107 = vector.broadcast %cst_63 : f32 to vector<8x10xf32>
    %108 = arith.addf %107, %106 : vector<8x10xf32>
    %c0_64 = arith.constant 0 : index
    %c0_65 = arith.constant 0 : index
    %109 = vector.load %arg23[%c0_64, %c0_65] : memref<10x128xbf16, #tpu.memory_space<vmem>>, vector<10x128xbf16>
    %110 = arith.truncf %108 : vector<8x10xf32> to vector<8x10xbf16>
    %cst_66 = arith.constant dense<0.000000e+00> : vector<8x128xf32>
    %111 = tpu.matmul %110, %109, %cst_66 {dimension_numbers = #tpu.dot_dimension_numbers<[1], [0], [0], [1], [0, 0, 1, 1], [], []>} : vector<8x10xbf16>, vector<10x128xbf16>, vector<8x128xf32> -> vector<8x128xf32>
    %c0_67 = arith.constant 0 : index
    %c0_68 = arith.constant 0 : index
    %112 = vector.load %arg24[%c0_67, %c0_68] : memref<1x128xf32, #tpu.memory_space<vmem>>, vector<1x128xf32>
    %113 = vector.broadcast %112 : vector<1x128xf32> to vector<8x128xf32>
    %114 = arith.addf %111, %113 : vector<8x128xf32>
    %cst_69 = arith.constant 0.000000e+00 : f32
    %115 = vector.broadcast %cst_69 : f32 to vector<8x128xf32>
    %116 = arith.cmpf oge, %114, %115 : vector<8x128xf32>
    %cst_70 = arith.constant 0.00999999977 : f32
    %117 = vector.broadcast %cst_70 : f32 to vector<8x128xf32>
    %118 = arith.mulf %117, %114 : vector<8x128xf32>
    %119 = arith.select %116, %114, %118 : vector<8x128xi1>, vector<8x128xf32>
    %c0_71 = arith.constant 0 : index
    %c0_72 = arith.constant 0 : index
    %120 = vector.load %arg25[%c0_71, %c0_72] : memref<128x128xbf16, #tpu.memory_space<vmem>>, vector<128x128xbf16>
    %121 = arith.truncf %119 : vector<8x128xf32> to vector<8x128xbf16>
    %cst_73 = arith.constant dense<0.000000e+00> : vector<8x128xf32>
    %122 = tpu.matmul %121, %120, %cst_73 {dimension_numbers = #tpu.dot_dimension_numbers<[1], [0], [0], [1], [0, 0, 1, 1], [], []>} : vector<8x128xbf16>, vector<128x128xbf16>, vector<8x128xf32> -> vector<8x128xf32>
    %c0_74 = arith.constant 0 : index
    %c0_75 = arith.constant 0 : index
    %123 = vector.load %arg26[%c0_74, %c0_75] : memref<1x128xf32, #tpu.memory_space<vmem>>, vector<1x128xf32>
    %124 = vector.broadcast %123 : vector<1x128xf32> to vector<8x128xf32>
    %125 = arith.addf %122, %124 : vector<8x128xf32>
    %cst_76 = arith.constant 0.000000e+00 : f32
    %126 = vector.broadcast %cst_76 : f32 to vector<8x128xf32>
    %127 = arith.cmpf oge, %125, %126 : vector<8x128xf32>
    %cst_77 = arith.constant 0.00999999977 : f32
    %128 = vector.broadcast %cst_77 : f32 to vector<8x128xf32>
    %129 = arith.mulf %128, %125 : vector<8x128xf32>
    %130 = arith.select %127, %125, %129 : vector<8x128xi1>, vector<8x128xf32>
    %c0_78 = arith.constant 0 : index
    %c0_79 = arith.constant 0 : index
    %131 = vector.load %arg27[%c0_78, %c0_79] : memref<128x64xbf16, #tpu.memory_space<vmem>>, vector<128x64xbf16>
    %132 = arith.truncf %130 : vector<8x128xf32> to vector<8x128xbf16>
    %cst_80 = arith.constant dense<0.000000e+00> : vector<8x64xf32>
    %133 = tpu.matmul %132, %131, %cst_80 {dimension_numbers = #tpu.dot_dimension_numbers<[1], [0], [0], [1], [0, 0, 1, 1], [], []>} : vector<8x128xbf16>, vector<128x64xbf16>, vector<8x64xf32> -> vector<8x64xf32>
    %c0_81 = arith.constant 0 : index
    %c0_82 = arith.constant 0 : index
    %134 = vector.load %arg28[%c0_81, %c0_82] : memref<1x64xf32, #tpu.memory_space<vmem>>, vector<1x64xf32>
    %135 = vector.broadcast %134 : vector<1x64xf32> to vector<8x64xf32>
    %136 = arith.addf %133, %135 : vector<8x64xf32>
    %137 = arith.subf %0, %64 : vector<8x256xf32>
    %c0_83 = arith.constant 0 : index
    %c0_84 = arith.constant 0 : index
    %138 = vector.load %arg4[%c0_83, %c0_84] : memref<1x256xf32, #tpu.memory_space<vmem>>, vector<1x256xf32>
    %139 = vector.broadcast %138 : vector<1x256xf32> to vector<8x256xf32>
    %140 = arith.mulf %137, %139 : vector<8x256xf32>
    %cst_85 = arith.constant 5.000000e-01 : f32
    %141 = vector.broadcast %cst_85 : f32 to vector<8x256xf32>
    %142 = arith.mulf %141, %140 : vector<8x256xf32>
    %143 = arith.mulf %142, %140 : vector<8x256xf32>
    %c0_86 = arith.constant 0 : index
    %c0_87 = arith.constant 0 : index
    %144 = vector.load %arg3[%c0_86, %c0_87] : memref<1x256xf32, #tpu.memory_space<vmem>>, vector<1x256xf32>
    %145 = vector.broadcast %144 : vector<1x256xf32> to vector<8x256xf32>
    %146 = arith.addf %143, %145 : vector<8x256xf32>
    %cst_88 = arith.constant 0.918938517 : f32
    %147 = vector.broadcast %cst_88 : f32 to vector<8x256xf32>
    %148 = arith.addf %146, %147 : vector<8x256xf32>
    %cst_89 = arith.constant dense<0.000000e+00> : vector<8xf32>
    %149 = vector.multi_reduction <add>, %148, %cst_89 [1] : vector<8x256xf32> to vector<8xf32>
    %150 = vector.shape_cast %149 : vector<8xf32> to vector<8x1xf32>
    %cst_90 = arith.constant dense<0xFF800000> : vector<8xf32>
    %151 = vector.multi_reduction <maximumf>, %108, %cst_90 [1] : vector<8x10xf32> to vector<8xf32>
    %152 = vector.shape_cast %151 : vector<8xf32> to vector<8x1xf32>
    %153 = math.exp %31 : vector<8x64xf32>
    %cst_91 = arith.constant 1.000000e+00 : f32
    %154 = vector.broadcast %cst_91 : f32 to vector<8x64xf32>
    %155 = arith.addf %154, %31 : vector<8x64xf32>
    %156 = arith.mulf %30, %30 : vector<8x64xf32>
    %157 = arith.subf %155, %156 : vector<8x64xf32>
    %158 = arith.subf %157, %153 : vector<8x64xf32>
    %cst_92 = arith.constant -5.000000e-01 : f32
    %159 = vector.broadcast %cst_92 : f32 to vector<8x64xf32>
    %160 = arith.mulf %159, %158 : vector<8x64xf32>
    %cst_93 = arith.constant dense<0.000000e+00> : vector<8xf32>
    %161 = vector.multi_reduction <add>, %160, %cst_93 [1] : vector<8x64xf32> to vector<8xf32>
    %162 = vector.shape_cast %161 : vector<8xf32> to vector<8x1xf32>
    %163 = arith.subf %136, %30 : vector<8x64xf32>
    %cst_94 = arith.constant -1.000000e+00 : f32
    %164 = vector.broadcast %cst_94 : f32 to vector<8x64xf32>
    %165 = arith.subf %164, %31 : vector<8x64xf32>
    %166 = arith.addf %165, %153 : vector<8x64xf32>
    %167 = arith.mulf %163, %163 : vector<8x64xf32>
    %168 = arith.addf %166, %167 : vector<8x64xf32>
    %cst_95 = arith.constant 5.000000e-01 : f32
    %169 = vector.broadcast %cst_95 : f32 to vector<8x64xf32>
    %170 = arith.mulf %169, %168 : vector<8x64xf32>
    %cst_96 = arith.constant dense<0.000000e+00> : vector<8xf32>
    %171 = vector.multi_reduction <add>, %170, %cst_96 [1] : vector<8x64xf32> to vector<8xf32>
    %172 = vector.shape_cast %171 : vector<8xf32> to vector<8x1xf32>
    %173 = math.log %108 : vector<8x10xf32>
    %cst_97 = arith.constant dense<0.000000e+00> : vector<8xf32>
    %174 = vector.multi_reduction <add>, %173, %cst_97 [1] : vector<8x10xf32> to vector<8xf32>
    %175 = vector.shape_cast %174 : vector<8xf32> to vector<8x1xf32>
    %c0_98 = arith.constant 0 : index
    %c0_99 = arith.constant 0 : index
    %176 = vector.load %arg29[%c0_98, %c0_99] : memref<8x256xf32, #tpu.memory_space<vmem>>, vector<8x256xf32>
    tpu.vector_store %arg29[%c0_98, %c0_99], %64 {strides = array<i32>} : memref<8x256xf32, #tpu.memory_space<vmem>>, vector<8x256xf32>,
    %c0_100 = arith.constant 0 : index
    %c0_101 = arith.constant 0 : index
    %177 = vector.load %arg30[%c0_100, %c0_101] : memref<8x256xf32, #tpu.memory_space<vmem>>, vector<8x128xf32>
    tpu.vector_store %arg30[%c0_100, %c0_101], %29 {strides = array<i32>} : memref<8x256xf32, #tpu.memory_space<vmem>>, vector<8x128xf32>,
    %c0_102 = arith.constant 0 : index
    %c128 = arith.constant 128 : index
    %178 = vector.load %arg30[%c0_102, %c128] : memref<8x256xf32, #tpu.memory_space<vmem>>, vector<8x64xf32>
    tpu.vector_store %arg30[%c0_102, %c128], %36 {strides = array<i32>} : memref<8x256xf32, #tpu.memory_space<vmem>>, vector<8x64xf32>,
    %c0_103 = arith.constant 0 : index
    %c192 = arith.constant 192 : index
    %179 = vector.load %arg30[%c0_103, %c192] : memref<8x256xf32, #tpu.memory_space<vmem>>, vector<8x64xf32>
    tpu.vector_store %arg30[%c0_103, %c192], %136 {strides = array<i32>} : memref<8x256xf32, #tpu.memory_space<vmem>>, vector<8x64xf32>,
    %c0_104 = arith.constant 0 : index
    %c0_105 = arith.constant 0 : index
    %180 = vector.load %arg31[%c0_104, %c0_105] : memref<8x10xf32, #tpu.memory_space<vmem>>, vector<8x10xf32>
    tpu.vector_store %arg31[%c0_104, %c0_105], %108 {strides = array<i32>} : memref<8x10xf32, #tpu.memory_space<vmem>>, vector<8x10xf32>,
    %181 = tpu.iota {dimensions = array<i32: 1>} : vector<8x8xi32>
    %cst_106 = arith.constant 0.000000e+00 : f32
    %182 = vector.broadcast %cst_106 : f32 to vector<8x8xf32>
    %c0_i32 = arith.constant 0 : i32
    %183 = vector.broadcast %c0_i32 : i32 to vector<8x8xi32>
    %184 = arith.cmpi eq, %181, %183 : vector<8x8xi32>
    %cst_107 = arith.constant 0.000000e+00 : f32
    %185 = vector.shape_cast %150 : vector<8x1xf32> to vector<8x1xf32>
    %186 = vector.broadcast %185 : vector<8x1xf32> to vector<8x8xf32>
    %187 = vector.broadcast %cst_107 : f32 to vector<8x8xf32>
    %188 = arith.select %184, %186, %187 : vector<8x8xi1>, vector<8x8xf32>
    %189 = arith.addf %182, %188 : vector<8x8xf32>
    %c1_i32 = arith.constant 1 : i32
    %190 = vector.broadcast %c1_i32 : i32 to vector<8x8xi32>
    %191 = arith.cmpi eq, %181, %190 : vector<8x8xi32>
    %cst_108 = arith.constant 0.000000e+00 : f32
    %192 = vector.shape_cast %152 : vector<8x1xf32> to vector<8x1xf32>
    %193 = vector.broadcast %192 : vector<8x1xf32> to vector<8x8xf32>
    %194 = vector.broadcast %cst_108 : f32 to vector<8x8xf32>
    %195 = arith.select %191, %193, %194 : vector<8x8xi1>, vector<8x8xf32>
    %196 = arith.addf %189, %195 : vector<8x8xf32>
    %c2_i32 = arith.constant 2 : i32
    %197 = vector.broadcast %c2_i32 : i32 to vector<8x8xi32>
    %198 = arith.cmpi eq, %181, %197 : vector<8x8xi32>
    %cst_109 = arith.constant 0.000000e+00 : f32
    %199 = vector.shape_cast %162 : vector<8x1xf32> to vector<8x1xf32>
    %200 = vector.broadcast %199 : vector<8x1xf32> to vector<8x8xf32>
    %201 = vector.broadcast %cst_109 : f32 to vector<8x8xf32>
    %202 = arith.select %198, %200, %201 : vector<8x8xi1>, vector<8x8xf32>
    %203 = arith.addf %196, %202 : vector<8x8xf32>
    %c3_i32 = arith.constant 3 : i32
    %204 = vector.broadcast %c3_i32 : i32 to vector<8x8xi32>
    %205 = arith.cmpi eq, %181, %204 : vector<8x8xi32>
    %cst_110 = arith.constant 0.000000e+00 : f32
    %206 = vector.shape_cast %172 : vector<8x1xf32> to vector<8x1xf32>
    %207 = vector.broadcast %206 : vector<8x1xf32> to vector<8x8xf32>
    %208 = vector.broadcast %cst_110 : f32 to vector<8x8xf32>
    %209 = arith.select %205, %207, %208 : vector<8x8xi1>, vector<8x8xf32>
    %210 = arith.addf %203, %209 : vector<8x8xf32>
    %c4_i32 = arith.constant 4 : i32
    %211 = vector.broadcast %c4_i32 : i32 to vector<8x8xi32>
    %212 = arith.cmpi eq, %181, %211 : vector<8x8xi32>
    %cst_111 = arith.constant 0.000000e+00 : f32
    %213 = vector.shape_cast %175 : vector<8x1xf32> to vector<8x1xf32>
    %214 = vector.broadcast %213 : vector<8x1xf32> to vector<8x8xf32>
    %215 = vector.broadcast %cst_111 : f32 to vector<8x8xf32>
    %216 = arith.select %212, %214, %215 : vector<8x8xi1>, vector<8x8xf32>
    %217 = arith.addf %210, %216 : vector<8x8xf32>
    %c0_112 = arith.constant 0 : index
    %c0_113 = arith.constant 0 : index
    %218 = vector.load %arg32[%c0_112, %c0_113] : memref<8x8xf32, #tpu.memory_space<vmem>>, vector<8x8xf32>
    tpu.vector_store %arg32[%c0_112, %c0_113], %217 {strides = array<i32>} : memref<8x8xf32, #tpu.memory_space<vmem>>, vector<8x8xf32>,
    return
  }
  func.func @transform_0(%arg0: i32) -> (i32, i32) {
    %c0_i32 = arith.constant 0 : i32
    %c0_i32_0 = arith.constant 0 : i32
    return %arg0, %c0_i32 : i32, i32
  }
  func.func @transform_1(%arg0: i32) -> (i32, i32) {
    %c0_i32 = arith.constant 0 : i32
    %c0_i32_0 = arith.constant 0 : i32
    return %arg0, %c0_i32 : i32, i32
  }
  func.func @transform_2(%arg0: i32) -> (i32, i32) {
    %c0_i32 = arith.constant 0 : i32
    %c0_i32_0 = arith.constant 0 : i32
    %c0_i32_1 = arith.constant 0 : i32
    return %c0_i32, %c0_i32_0 : i32, i32
  }
  func.func @transform_3(%arg0: i32) -> (i32, i32) {
    %c0_i32 = arith.constant 0 : i32
    %c0_i32_0 = arith.constant 0 : i32
    %c0_i32_1 = arith.constant 0 : i32
    return %c0_i32, %c0_i32_0 : i32, i32
  }
  func.func @transform_4(%arg0: i32) -> (i32, i32) {
    %c0_i32 = arith.constant 0 : i32
    %c0_i32_0 = arith.constant 0 : i32
    %c0_i32_1 = arith.constant 0 : i32
    return %c0_i32, %c0_i32_0 : i32, i32
  }
  func.func @transform_5(%arg0: i32) -> (i32, i32) {
    %c0_i32 = arith.constant 0 : i32
    %c0_i32_0 = arith.constant 0 : i32
    %c0_i32_1 = arith.constant 0 : i32
    return %c0_i32, %c0_i32_0 : i32, i32
  }
  func.func @transform_6(%arg0: i32) -> (i32, i32) {
    %c0_i32 = arith.constant 0 : i32
    %c0_i32_0 = arith.constant 0 : i32
    %c0_i32_1 = arith.constant 0 : i32
    return %c0_i32, %c0_i32_0 : i32, i32
  }
  func.func @transform_7(%arg0: i32) -> (i32, i32) {
    %c0_i32 = arith.constant 0 : i32
    %c0_i32_0 = arith.constant 0 : i32
    %c0_i32_1 = arith.constant 0 : i32
    return %c0_i32, %c0_i32_0 : i32, i32
  }
  func.func @transform_8(%arg0: i32) -> (i32, i32) {
    %c0_i32 = arith.constant 0 : i32
    %c0_i32_0 = arith.constant 0 : i32
    %c0_i32_1 = arith.constant 0 : i32
    return %c0_i32, %c0_i32_0 : i32, i32
  }
  func.func @transform_9(%arg0: i32) -> (i32, i32) {
    %c0_i32 = arith.constant 0 : i32
    %c0_i32_0 = arith.constant 0 : i32
    %c0_i32_1 = arith.constant 0 : i32
    return %c0_i32, %c0_i32_0 : i32, i32
  }
  func.func @transform_10(%arg0: i32) -> (i32, i32) {
    %c0_i32 = arith.constant 0 : i32
    %c0_i32_0 = arith.constant 0 : i32
    %c0_i32_1 = arith.constant 0 : i32
    return %c0_i32, %c0_i32_0 : i32, i32
  }
  func.func @transform_11(%arg0: i32) -> (i32, i32) {
    %c0_i32 = arith.constant 0 : i32
    %c0_i32_0 = arith.constant 0 : i32
    %c0_i32_1 = arith.constant 0 : i32
    return %c0_i32, %c0_i32_0 : i32, i32
  }
  func.func @transform_12(%arg0: i32) -> (i32, i32) {
    %c0_i32 = arith.constant 0 : i32
    %c0_i32_0 = arith.constant 0 : i32
    %c0_i32_1 = arith.constant 0 : i32
    return %c0_i32, %c0_i32_0 : i32, i32
  }
  func.func @transform_13(%arg0: i32) -> (i32, i32) {
    %c0_i32 = arith.constant 0 : i32
    %c0_i32_0 = arith.constant 0 : i32
    %c0_i32_1 = arith.constant 0 : i32
    return %c0_i32, %c0_i32_0 : i32, i32
  }
  func.func @transform_14(%arg0: i32) -> (i32, i32) {
    %c0_i32 = arith.constant 0 : i32
    %c0_i32_0 = arith.constant 0 : i32
    %c0_i32_1 = arith.constant 0 : i32
    return %c0_i32, %c0_i32_0 : i32, i32
  }
  func.func @transform_15(%arg0: i32) -> (i32, i32) {
    %c0_i32 = arith.constant 0 : i32
    %c0_i32_0 = arith.constant 0 : i32
    %c0_i32_1 = arith.constant 0 : i32
    return %c0_i32, %c0_i32_0 : i32, i32
  }
  func.func @transform_16(%arg0: i32) -> (i32, i32) {
    %c0_i32 = arith.constant 0 : i32
    %c0_i32_0 = arith.constant 0 : i32
    %c0_i32_1 = arith.constant 0 : i32
    return %c0_i32, %c0_i32_0 : i32, i32
  }
  func.func @transform_17(%arg0: i32) -> (i32, i32) {
    %c0_i32 = arith.constant 0 : i32
    %c0_i32_0 = arith.constant 0 : i32
    %c0_i32_1 = arith.constant 0 : i32
    return %c0_i32, %c0_i32_0 : i32, i32
  }
  func.func @transform_18(%arg0: i32) -> (i32, i32) {
    %c0_i32 = arith.constant 0 : i32
    %c0_i32_0 = arith.constant 0 : i32
    %c0_i32_1 = arith.constant 0 : i32
    return %c0_i32, %c0_i32_0 : i32, i32
  }
  func.func @transform_19(%arg0: i32) -> (i32, i32) {
    %c0_i32 = arith.constant 0 : i32
    %c0_i32_0 = arith.constant 0 : i32
    %c0_i32_1 = arith.constant 0 : i32
    return %c0_i32, %c0_i32_0 : i32, i32
  }
  func.func @transform_20(%arg0: i32) -> (i32, i32) {
    %c0_i32 = arith.constant 0 : i32
    %c0_i32_0 = arith.constant 0 : i32
    %c0_i32_1 = arith.constant 0 : i32
    return %c0_i32, %c0_i32_0 : i32, i32
  }
  func.func @transform_21(%arg0: i32) -> (i32, i32) {
    %c0_i32 = arith.constant 0 : i32
    %c0_i32_0 = arith.constant 0 : i32
    %c0_i32_1 = arith.constant 0 : i32
    return %c0_i32, %c0_i32_0 : i32, i32
  }
  func.func @transform_22(%arg0: i32) -> (i32, i32) {
    %c0_i32 = arith.constant 0 : i32
    %c0_i32_0 = arith.constant 0 : i32
    %c0_i32_1 = arith.constant 0 : i32
    return %c0_i32, %c0_i32_0 : i32, i32
  }
  func.func @transform_23(%arg0: i32) -> (i32, i32) {
    %c0_i32 = arith.constant 0 : i32
    %c0_i32_0 = arith.constant 0 : i32
    %c0_i32_1 = arith.constant 0 : i32
    return %c0_i32, %c0_i32_0 : i32, i32
  }
  func.func @transform_24(%arg0: i32) -> (i32, i32) {
    %c0_i32 = arith.constant 0 : i32
    %c0_i32_0 = arith.constant 0 : i32
    %c0_i32_1 = arith.constant 0 : i32
    return %c0_i32, %c0_i32_0 : i32, i32
  }
  func.func @transform_25(%arg0: i32) -> (i32, i32) {
    %c0_i32 = arith.constant 0 : i32
    %c0_i32_0 = arith.constant 0 : i32
    %c0_i32_1 = arith.constant 0 : i32
    return %c0_i32, %c0_i32_0 : i32, i32
  }
  func.func @transform_26(%arg0: i32) -> (i32, i32) {
    %c0_i32 = arith.constant 0 : i32
    %c0_i32_0 = arith.constant 0 : i32
    %c0_i32_1 = arith.constant 0 : i32
    return %c0_i32, %c0_i32_0 : i32, i32
  }
  func.func @transform_27(%arg0: i32) -> (i32, i32) {
    %c0_i32 = arith.constant 0 : i32
    %c0_i32_0 = arith.constant 0 : i32
    %c0_i32_1 = arith.constant 0 : i32
    return %c0_i32, %c0_i32_0 : i32, i32
  }
  func.func @transform_28(%arg0: i32) -> (i32, i32) {
    %c0_i32 = arith.constant 0 : i32
    %c0_i32_0 = arith.constant 0 : i32
    return %arg0, %c0_i32 : i32, i32
  }
  func.func @transform_29(%arg0: i32) -> (i32, i32) {
    %c0_i32 = arith.constant 0 : i32
    %c0_i32_0 = arith.constant 0 : i32
    return %arg0, %c0_i32 : i32, i32
  }
  func.func @transform_30(%arg0: i32) -> (i32, i32) {
    %c0_i32 = arith.constant 0 : i32
    %c0_i32_0 = arith.constant 0 : i32
    return %arg0, %c0_i32 : i32, i32
  }
  func.func @transform_31(%arg0: i32) -> (i32, i32) {
    %c0_i32 = arith.constant 0 : i32
    %c0_i32_0 = arith.constant 0 : i32
    return %arg0, %c0_i32 : i32, i32
  }
}

</mosaic_0001>

<llo_original>
// kernel: tpu_custom_call.1
$region0: #{tpu_custom_call.1}
  #allocation0 [shape = 'u32[]', space=smem, size = 0x4, offset = 0x4, fixed_abs, tag = 'smem constant byte address 0x4 - core index']
  #allocation1 [shape = 'u32[144,128]{1,0:T(1,128)}', space=vmem, size = 0x12000, scoped, tag = 'internal scratch']
  %s0 = inlined_call_operand.smem [shape: u32[32], index: -1, kind: input, shape index: {}]
  %s1 = sld [smem:[%s0]]
  %s2 = scalar_lea.smem %s0, 1
  %s3 = sld [smem:[%s2]]
  %s4 = scalar_lea.smem %s0, 2
  %s5 = sld [smem:[%s4]]
  %s6 = scalar_lea.smem %s0, 3
  %s7 = sld [smem:[%s6]]
  %s8 = scalar_lea.smem %s0, 4
  %s9 = sld [smem:[%s8]]
  %s10 = scalar_lea.smem %s0, 5
  %s11 = sld [smem:[%s10]]
  %s12 = scalar_lea.smem %s0, 6
  %s13 = sld [smem:[%s12]]
  %s14 = scalar_lea.smem %s0, 7
  %s15 = sld [smem:[%s14]]
  %s16 = scalar_lea.smem %s0, 8
  %s17 = sld [smem:[%s16]]
  %s18 = scalar_lea.smem %s0, 9
  %s19 = sld [smem:[%s18]]
  %s20 = scalar_lea.smem %s0, 10
  %s21 = sld [smem:[%s20]]
  %s22 = scalar_lea.smem %s0, 11
  %s23 = sld [smem:[%s22]]
  %s24 = scalar_lea.smem %s0, 12
  %s25 = sld [smem:[%s24]]
  %s26 = scalar_lea.smem %s0, 13
  %s27 = sld [smem:[%s26]]
  %s28 = scalar_lea.smem %s0, 14
  %s29 = sld [smem:[%s28]]
  %s30 = scalar_lea.smem %s0, 15
  %s31 = sld [smem:[%s30]]
  %s32 = scalar_lea.smem %s0, 16
  %s33 = sld [smem:[%s32]]
  %s34 = scalar_lea.smem %s0, 17
  %s35 = sld [smem:[%s34]]
  %s36 = scalar_lea.smem %s0, 18
  %s37 = sld [smem:[%s36]]
  %s38 = scalar_lea.smem %s0, 19
  %s39 = sld [smem:[%s38]]
  %s40 = scalar_lea.smem %s0, 20
  %s41 = sld [smem:[%s40]]
  %s42 = scalar_lea.smem %s0, 21
  %s43 = sld [smem:[%s42]]
  %s44 = scalar_lea.smem %s0, 22
  %s45 = sld [smem:[%s44]]
  %s46 = scalar_lea.smem %s0, 23
  %s47 = sld [smem:[%s46]]
  %s48 = scalar_lea.smem %s0, 24
  %s49 = sld [smem:[%s48]]
  %s50 = scalar_lea.smem %s0, 25
  %s51 = sld [smem:[%s50]]
  %s52 = scalar_lea.smem %s0, 26
  %s53 = sld [smem:[%s52]]
  %s54 = scalar_lea.smem %s0, 27
  %s55 = sld [smem:[%s54]]
  %s56 = scalar_lea.smem %s0, 28
  %s57 = sld [smem:[%s56]]
  %s58 = scalar_lea.smem %s0, 29
  %s59 = sld [smem:[%s58]]
  %s60 = scalar_lea.smem %s0, 30
  %s61 = sld [smem:[%s60]]
  %s62 = scalar_lea.smem %s0, 31
  %s63 = sld [smem:[%s62]]
  %64 = xla_tuple %s57, %s59, %s61, %s63
  %s65 = sld [smem:[#allocation0]]
  $region245: #{tpu_custom_call.1} parent=0
    _
  %s67 = ssub.s32 1, %s65
  %s68 = scalar_select 0, %s67, %s65
  $region1: #{tpu_custom_call.1} parent=0
    #allocation2 [shape = 'u8[16384]{0}', space=vmem, size = 0x4000, scoped, tag = 'input window, operand 0']
    #allocation3 [shape = 's32[2]{0}', space=sflag, size = 0x8, scoped, tag = 'scoped memory for tpu_custom_call.1']
    #allocation4 [shape = 's32[2]{0}', space=sflag, size = 0x8, scoped, tag = 'scoped memory for tpu_custom_call.1']
    #allocation5 [shape = 'u8[8192]{0}', space=vmem, size = 0x2000, scoped, tag = 'input window, operand 1']
    #allocation6 [shape = 's32[2]{0}', space=sflag, size = 0x8, scoped, tag = 'scoped memory for tpu_custom_call.1']
    #allocation7 [shape = 'u8[1024]{0}', space=vmem, size = 0x400, scoped, tag = 'input window, operand 2, single buffered']
    #allocation8 [shape = 'u8[1024]{0}', space=vmem, size = 0x400, scoped, tag = 'input window, operand 3, single buffered']
    #allocation9 [shape = 's32[1]{0}', space=sflag, size = 0x4, scoped, tag = 'scoped memory for tpu_custom_call.1']
    #allocation10 [shape = 'u8[512]{0}', space=vmem, size = 0x400, scoped, tag = 'input window, operand 5, single buffered']
    #allocation11 [shape = 'u8[32768]{0}', space=vmem, size = 0x8000, scoped, tag = 'input window, operand 6, single buffered']
    #allocation12 [shape = 's32[1]{0}', space=sflag, size = 0x4, scoped, tag = 'scoped memory for tpu_custom_call.1']
    #allocation13 [shape = 'u8[512]{0}', space=vmem, size = 0x400, scoped, tag = 'input window, operand 7, single buffered']
    #allocation14 [shape = 'u8[32768]{0}', space=vmem, size = 0x8000, scoped, tag = 'input window, operand 8, single buffered']
    #allocation15 [shape = 's32[1]{0}', space=sflag, size = 0x4, scoped, tag = 'scoped memory for tpu_custom_call.1']
    #allocation16 [shape = 'u8[512]{0}', space=vmem, size = 0x400, scoped, tag = 'input window, operand 9, single buffered']
    #allocation17 [shape = 'u8[16384]{0}', space=vmem, size = 0x4000, scoped, tag = 'input window, operand 10, single buffered']
    #allocation18 [shape = 's32[1]{0}', space=sflag, size = 0x4, scoped, tag = 'scoped memory for tpu_custom_call.1']
    #allocation19 [shape = 'u8[512]{0}', space=vmem, size = 0x400, scoped, tag = 'input window, operand 11, single buffered']
    #allocation20 [shape = 'u8[32768]{0}', space=vmem, size = 0x8000, scoped, tag = 'input window, operand 12, single buffered']
    #allocation21 [shape = 's32[1]{0}', space=sflag, size = 0x4, scoped, tag = 'scoped memory for tpu_custom_call.1']
    #allocation22 [shape = 'u8[512]{0}', space=vmem, size = 0x400, scoped, tag = 'input window, operand 13, single buffered']
    #allocation23 [shape = 'u8[65536]{0}', space=vmem, size = 0x10000, scoped, tag = 'input window, operand 14, single buffered']
    #allocation24 [shape = 's32[1]{0}', space=sflag, size = 0x4, scoped, tag = 'scoped memory for tpu_custom_call.1']
    #allocation25 [shape = 'u8[1024]{0}', space=vmem, size = 0x400, scoped, tag = 'input window, operand 15, single buffered']
    #allocation26 [shape = 'u8[65536]{0}', space=vmem, size = 0x10000, scoped, tag = 'input window, operand 16, single buffered']
    #allocation27 [shape = 's32[1]{0}', space=sflag, size = 0x4, scoped, tag = 'scoped memory for tpu_custom_call.1']
    #allocation28 [shape = 'u8[512]{0}', space=vmem, size = 0x400, scoped, tag = 'input window, operand 17, single buffered']
    #allocation29 [shape = 'u8[512]{0}', space=vmem, size = 0x400, scoped, tag = 'input window, operand 19, single buffered']
    #allocation30 [shape = 's32[1]{0}', space=sflag, size = 0x4, scoped, tag = 'scoped memory for tpu_custom_call.1']
    #allocation31 [shape = 'u8[32768]{0}', space=vmem, size = 0x8000, scoped, tag = 'input window, operand 24, single buffered']
    #allocation32 [shape = 'u8[16384]{0}', space=vmem, size = 0x4000, scoped, tag = 'output window, operand 0']
    #allocation33 [shape = 'u8[16384]{0}', space=vmem, size = 0x4000, scoped, tag = 'output window, operand 1']
    #allocation34 [shape = 's32[2]{0}', space=sflag, size = 0x8, scoped, tag = 'scoped memory for tpu_custom_call.1']
    #allocation35 [shape = 'u8[8192]{0}', space=vmem, size = 0x2000, scoped, tag = 'output window, operand 2']
    %69 = vsyncpa [#allocation3], 0
    %s70 = scalar_lea.sflag [#allocation3], 1
    %71 = vsyncpa %s70, 0
    %72 = vsyncpa [#allocation6], 0
    %s73 = scalar_lea.sflag [#allocation6], 1
    %74 = vsyncpa %s73, 0
    %75 = vsyncpa [#allocation9], 0
    %76 = vsyncpa [#allocation12], 0
    %77 = vsyncpa [#allocation15], 0
    %78 = vsyncpa [#allocation18], 0
    %79 = vsyncpa [#allocation21], 0
    %80 = vsyncpa [#allocation24], 0
    %81 = vsyncpa [#allocation27], 0
    %82 = vsyncpa [#allocation30], 0
    %83 = vsyncpa [#allocation4], 0
    %s84 = scalar_lea.sflag [#allocation4], 1
    %85 = vsyncpa %s84, 0
    %86 = vsyncpa [#allocation34], 0
    %s87 = scalar_lea.sflag [#allocation34], 1
    %88 = vsyncpa %s87, 0
    loop: start=0, step=1, limit=4
    $region2: #{tpu_custom_call.1} parent=1 // loop_pre_header
      _
    $region3: #{tpu_custom_call.1} parent=1 // loop_header
      %s90 = sphi 0, %s94
      %p91 = scmp.ge.s32.totalorder %s90, 4
      %s100 = sphi 0, %s102
      %s103 = sphi 0, %s100
      %s104 = sphi 0, %s103
      %s120 = sphi 0, %s104
      %s126 = sphi 0, %s128
      %s129 = sphi 0, %s126
      %s130 = sphi 0, %s129
      %s146 = sphi 0, %s130
      %s150 = sphi 0, %s150
      %s152 = sphi 0, %s150
      %s153 = sphi 0, %s152
      %s167 = sphi 0, %s153
      %s171 = sphi 0, %s171
      %s173 = sphi 0, %s171
      %s174 = sphi 0, %s173
      %s188 = sphi 0, %s174
      %s192 = sphi 0, %s192
      %s194 = sphi 0, %s192
      %s195 = sphi 0, %s194
      %s209 = sphi 0, %s195
      %s213 = sphi 0, %s213
      %s215 = sphi 0, %s213
      %s216 = sphi 0, %s215
      %s230 = sphi 0, %s216
      %s234 = sphi 0, %s234
      %s236 = sphi 0, %s234
      %s237 = sphi 0, %s236
      %s251 = sphi 0, %s237
      %s255 = sphi 0, %s255
      %s257 = sphi 0, %s255
      %s258 = sphi 0, %s257
      %s272 = sphi 0, %s258
      %s276 = sphi 0, %s276
      %s278 = sphi 0, %s276
      %s279 = sphi 0, %s278
      %s293 = sphi 0, %s279
      %s297 = sphi 0, %s297
      %s299 = sphi 0, %s297
      %s300 = sphi 0, %s299
      %s314 = sphi 0, %s300
      %s318 = sphi 0, %s318
      %s320 = sphi 0, %s318
      %s321 = sphi 0, %s320
      %s335 = sphi 0, %s321
      %s339 = sphi 0, %s339
      %s341 = sphi 0, %s339
      %s342 = sphi 0, %s341
      %s356 = sphi 0, %s342
      %s360 = sphi 0, %s360
      %s362 = sphi 0, %s360
      %s363 = sphi 0, %s362
      %s377 = sphi 0, %s363
      %s381 = sphi 0, %s381
      %s383 = sphi 0, %s381
      %s384 = sphi 0, %s383
      %s398 = sphi 0, %s384
      %s402 = sphi 0, %s402
      %s404 = sphi 0, %s402
      %s405 = sphi 0, %s404
      %s419 = sphi 0, %s405
      %s423 = sphi 0, %s423
      %s425 = sphi 0, %s423
      %s426 = sphi 0, %s425
      %s440 = sphi 0, %s426
      %s444 = sphi 0, %s444
      %s446 = sphi 0, %s444
      %s447 = sphi 0, %s446
      %s461 = sphi 0, %s447
      %s465 = sphi 0, %s465
      %s467 = sphi 0, %s465
      %s468 = sphi 0, %s467
      %s482 = sphi 0, %s468
      %s486 = sphi 0, %s486
      %s488 = sphi 0, %s486
      %s489 = sphi 0, %s488
      %s503 = sphi 0, %s489
      %s507 = sphi 0, %s507
      %s509 = sphi 0, %s507
      %s510 = sphi 0, %s509
      %s524 = sphi 0, %s510
      %s528 = sphi 0, %s528
      %s530 = sphi 0, %s528
      %s531 = sphi 0, %s530
      %s545 = sphi 0, %s531
      %s549 = sphi 0, %s549
      %s551 = sphi 0, %s549
      %s552 = sphi 0, %s551
      %s566 = sphi 0, %s552
      %s570 = sphi 0, %s570
      %s572 = sphi 0, %s570
      %s573 = sphi 0, %s572
      %s587 = sphi 0, %s573
      %s591 = sphi 0, %s591
      %s593 = sphi 0, %s591
      %s594 = sphi 0, %s593
      %s608 = sphi 0, %s594
      %s612 = sphi 0, %s612
      %s614 = sphi 0, %s612
      %s615 = sphi 0, %s614
      %s629 = sphi 0, %s615
      %s633 = sphi 0, %s633
      %s635 = sphi 0, %s633
      %s636 = sphi 0, %s635
      %s650 = sphi 0, %s636
      %s654 = sphi 0, %s654
      %s656 = sphi 0, %s654
      %s657 = sphi 0, %s656
      %s671 = sphi 0, %s657
      %s675 = sphi 0, %s675
      %s677 = sphi 0, %s675
      %s678 = sphi 0, %s677
      %s692 = sphi 0, %s678
      %s698 = sphi 0, %s700
      %s701 = sphi 0, %s698
      %s702 = sphi 0, %s701
      %s718 = sphi 0, %s702
      %s724 = sphi 0, %s726
      %s727 = sphi 0, %s724
      %s728 = sphi 0, %s727
      %s744 = sphi 0, %s728
      %s750 = sphi 0, %s752
      %s753 = sphi 0, %s750
      %s754 = sphi 0, %s753
      %s770 = sphi 0, %s754
      %s776 = sphi 0, %s778
      %s779 = sphi 0, %s776
      %s780 = sphi 0, %s779
      %s796 = sphi 0, %s780
    $region4: #{tpu_custom_call.1} parent=1 // loop_header_branch
      %93 = sbr.rel (%p91) target = $region8
    $region5: #{tpu_custom_call.1} parent=1 // loop_body
      %s95 = ssub.s32 %s90, 1
      %s96 = ssub.s32 %s90, 2
      %s97 = sadd.s32 %s90, 1
      %s98 = ssub.s32 %s90, %s97
      %p99 = scmp.eq.s32.totalorder %s98, 0
      %s101 = sadd.s32 %s100, 1
      %s102 = scalar_select %p99, %s100, %s101
      %p105 = pneg %p99
      %p106 = scmp.eq.s32.totalorder %s90, 1
      %p107 = por %p105, %p106
      %p108 = scmp.ne.s32.totalorder %s100, %s103
      %p109 = scmp.eq.s32.totalorder %s90, 0
      %p110 = por %p108, %p109
      %p111 = scmp.ne.s32.totalorder %s100, %s103
      %p112 = scmp.eq.s32.totalorder %s95, 1
      %p113 = por %p111, %p112
      %p114 = scmp.ne.s32.totalorder %s103, %s104
      %p115 = scmp.eq.s32.totalorder %s95, 0
      %p116 = por %p114, %p115
      %p117 = scmp.ne.s32.totalorder %s103, %s104
      %p118 = scmp.eq.s32.totalorder %s96, 1
      %p119 = por %p117, %p118
      %p121 = scmp.ne.s32.totalorder %s104, %s120
      %p122 = scmp.eq.s32.totalorder %s96, 0
      %p123 = por %p121, %p122
      %s124 = ssub.s32 %s90, %s97
      %p125 = scmp.eq.s32.totalorder %s124, 0
      %s127 = sadd.s32 %s126, 1
      %s128 = scalar_select %p125, %s126, %s127
      %p131 = pneg %p125
      %p132 = scmp.eq.s32.totalorder %s90, 1
      %p133 = por %p131, %p132
      %p134 = scmp.ne.s32.totalorder %s126, %s129
      %p135 = scmp.eq.s32.totalorder %s90, 0
      %p136 = por %p134, %p135
      %p137 = scmp.ne.s32.totalorder %s126, %s129
      %p138 = scmp.eq.s32.totalorder %s95, 1
      %p139 = por %p137, %p138
      %p140 = scmp.ne.s32.totalorder %s129, %s130
      %p141 = scmp.eq.s32.totalorder %s95, 0
      %p142 = por %p140, %p141
      %p143 = scmp.ne.s32.totalorder %s129, %s130
      %p144 = scmp.eq.s32.totalorder %s96, 1
      %p145 = por %p143, %p144
      %p147 = scmp.ne.s32.totalorder %s130, %s146
      %p148 = scmp.eq.s32.totalorder %s96, 0
      %p149 = por %p147, %p148
      %s151 = sadd.s32 %s150, 1
      %p154 = scmp.eq.s32.totalorder %s90, 1
      %p155 = scmp.ne.s32.totalorder %s150, %s152
      %p156 = scmp.eq.s32.totalorder %s90, 0
      %p157 = por %p155, %p156
      %p158 = scmp.ne.s32.totalorder %s150, %s152
      %p159 = scmp.eq.s32.totalorder %s95, 1
      %p160 = por %p158, %p159
      %p161 = scmp.ne.s32.totalorder %s152, %s153
      %p162 = scmp.eq.s32.totalorder %s95, 0
      %p163 = por %p161, %p162
      %p164 = scmp.ne.s32.totalorder %s152, %s153
      %p165 = scmp.eq.s32.totalorder %s96, 1
      %p166 = por %p164, %p165
      %p168 = scmp.ne.s32.totalorder %s153, %s167
      %p169 = scmp.eq.s32.totalorder %s96, 0
      %p170 = por %p168, %p169
      %s172 = sadd.s32 %s171, 1
      %p175 = scmp.eq.s32.totalorder %s90, 1
      %p176 = scmp.ne.s32.totalorder %s171, %s173
      %p177 = scmp.eq.s32.totalorder %s90, 0
      %p178 = por %p176, %p177
      %p179 = scmp.ne.s32.totalorder %s171, %s173
      %p180 = scmp.eq.s32.totalorder %s95, 1
      %p181 = por %p179, %p180
      %p182 = scmp.ne.s32.totalorder %s173, %s174
      %p183 = scmp.eq.s32.totalorder %s95, 0
      %p184 = por %p182, %p183
      %p185 = scmp.ne.s32.totalorder %s173, %s174
      %p186 = scmp.eq.s32.totalorder %s96, 1
      %p187 = por %p185, %p186
      %p189 = scmp.ne.s32.totalorder %s174, %s188
      %p190 = scmp.eq.s32.totalorder %s96, 0
      %p191 = por %p189, %p190
      %s193 = sadd.s32 %s192, 1
      %p196 = scmp.eq.s32.totalorder %s90, 1
      %p197 = scmp.ne.s32.totalorder %s192, %s194
      %p198 = scmp.eq.s32.totalorder %s90, 0
      %p199 = por %p197, %p198
      %p200 = scmp.ne.s32.totalorder %s192, %s194
      %p201 = scmp.eq.s32.totalorder %s95, 1
      %p202 = por %p200, %p201
      %p203 = scmp.ne.s32.totalorder %s194, %s195
      %p204 = scmp.eq.s32.totalorder %s95, 0
      %p205 = por %p203, %p204
      %p206 = scmp.ne.s32.totalorder %s194, %s195
      %p207 = scmp.eq.s32.totalorder %s96, 1
      %p208 = por %p206, %p207
      %p210 = scmp.ne.s32.totalorder %s195, %s209
      %p211 = scmp.eq.s32.totalorder %s96, 0
      %p212 = por %p210, %p211
      %s214 = sadd.s32 %s213, 1
      %p217 = scmp.eq.s32.totalorder %s90, 1
      %p218 = scmp.ne.s32.totalorder %s213, %s215
      %p219 = scmp.eq.s32.totalorder %s90, 0
      %p220 = por %p218, %p219
      %p221 = scmp.ne.s32.totalorder %s213, %s215
      %p222 = scmp.eq.s32.totalorder %s95, 1
      %p223 = por %p221, %p222
      %p224 = scmp.ne.s32.totalorder %s215, %s216
      %p225 = scmp.eq.s32.totalorder %s95, 0
      %p226 = por %p224, %p225
      %p227 = scmp.ne.s32.totalorder %s215, %s216
      %p228 = scmp.eq.s32.totalorder %s96, 1
      %p229 = por %p227, %p228
      %p231 = scmp.ne.s32.totalorder %s216, %s230
      %p232 = scmp.eq.s32.totalorder %s96, 0
      %p233 = por %p231, %p232
      %s235 = sadd.s32 %s234, 1
      %p238 = scmp.eq.s32.totalorder %s90, 1
      %p239 = scmp.ne.s32.totalorder %s234, %s236
      %p240 = scmp.eq.s32.totalorder %s90, 0
      %p241 = por %p239, %p240
      %p242 = scmp.ne.s32.totalorder %s234, %s236
      %p243 = scmp.eq.s32.totalorder %s95, 1
      %p244 = por %p242, %p243
      %p245 = scmp.ne.s32.totalorder %s236, %s237
      %p246 = scmp.eq.s32.totalorder %s95, 0
      %p247 = por %p245, %p246
      %p248 = scmp.ne.s32.totalorder %s236, %s237
      %p249 = scmp.eq.s32.totalorder %s96, 1
      %p250 = por %p248, %p249
      %p252 = scmp.ne.s32.totalorder %s237, %s251
      %p253 = scmp.eq.s32.totalorder %s96, 0
      %p254 = por %p252, %p253
      %s256 = sadd.s32 %s255, 1
      %p259 = scmp.eq.s32.totalorder %s90, 1
      %p260 = scmp.ne.s32.totalorder %s255, %s257
      %p261 = scmp.eq.s32.totalorder %s90, 0
      %p262 = por %p260, %p261
      %p263 = scmp.ne.s32.totalorder %s255, %s257
      %p264 = scmp.eq.s32.totalorder %s95, 1
      %p265 = por %p263, %p264
      %p266 = scmp.ne.s32.totalorder %s257, %s258
      %p267 = scmp.eq.s32.totalorder %s95, 0
      %p268 = por %p266, %p267
      %p269 = scmp.ne.s32.totalorder %s257, %s258
      %p270 = scmp.eq.s32.totalorder %s96, 1
      %p271 = por %p269, %p270
      %p273 = scmp.ne.s32.totalorder %s258, %s272
      %p274 = scmp.eq.s32.totalorder %s96, 0
      %p275 = por %p273, %p274
      %s277 = sadd.s32 %s276, 1
      %p280 = scmp.eq.s32.totalorder %s90, 1
      %p281 = scmp.ne.s32.totalorder %s276, %s278
      %p282 = scmp.eq.s32.totalorder %s90, 0
      %p283 = por %p281, %p282
      %p284 = scmp.ne.s32.totalorder %s276, %s278
      %p285 = scmp.eq.s32.totalorder %s95, 1
      %p286 = por %p284, %p285
      %p287 = scmp.ne.s32.totalorder %s278, %s279
      %p288 = scmp.eq.s32.totalorder %s95, 0
      %p289 = por %p287, %p288
      %p290 = scmp.ne.s32.totalorder %s278, %s279
      %p291 = scmp.eq.s32.totalorder %s96, 1
      %p292 = por %p290, %p291
      %p294 = scmp.ne.s32.totalorder %s279, %s293
      %p295 = scmp.eq.s32.totalorder %s96, 0
      %p296 = por %p294, %p295
      %s298 = sadd.s32 %s297, 1
      %p301 = scmp.eq.s32.totalorder %s90, 1
      %p302 = scmp.ne.s32.totalorder %s297, %s299
      %p303 = scmp.eq.s32.totalorder %s90, 0
      %p304 = por %p302, %p303
      %p305 = scmp.ne.s32.totalorder %s297, %s299
      %p306 = scmp.eq.s32.totalorder %s95, 1
      %p307 = por %p305, %p306
      %p308 = scmp.ne.s32.totalorder %s299, %s300
      %p309 = scmp.eq.s32.totalorder %s95, 0
      %p310 = por %p308, %p309
      %p311 = scmp.ne.s32.totalorder %s299, %s300
      %p312 = scmp.eq.s32.totalorder %s96, 1
      %p313 = por %p311, %p312
      %p315 = scmp.ne.s32.totalorder %s300, %s314
      %p316 = scmp.eq.s32.totalorder %s96, 0
      %p317 = por %p315, %p316
      %s319 = sadd.s32 %s318, 1
      %p322 = scmp.eq.s32.totalorder %s90, 1
      %p323 = scmp.ne.s32.totalorder %s318, %s320
      %p324 = scmp.eq.s32.totalorder %s90, 0
      %p325 = por %p323, %p324
      %p326 = scmp.ne.s32.totalorder %s318, %s320
      %p327 = scmp.eq.s32.totalorder %s95, 1
      %p328 = por %p326, %p327
      %p329 = scmp.ne.s32.totalorder %s320, %s321
      %p330 = scmp.eq.s32.totalorder %s95, 0
      %p331 = por %p329, %p330
      %p332 = scmp.ne.s32.totalorder %s320, %s321
      %p333 = scmp.eq.s32.totalorder %s96, 1
      %p334 = por %p332, %p333
      %p336 = scmp.ne.s32.totalorder %s321, %s335
      %p337 = scmp.eq.s32.totalorder %s96, 0
      %p338 = por %p336, %p337
      %s340 = sadd.s32 %s339, 1
      %p343 = scmp.eq.s32.totalorder %s90, 1
      %p344 = scmp.ne.s32.totalorder %s339, %s341
      %p345 = scmp.eq.s32.totalorder %s90, 0
      %p346 = por %p344, %p345
      %p347 = scmp.ne.s32.totalorder %s339, %s341
      %p348 = scmp.eq.s32.totalorder %s95, 1
      %p349 = por %p347, %p348
      %p350 = scmp.ne.s32.totalorder %s341, %s342
      %p351 = scmp.eq.s32.totalorder %s95, 0
      %p352 = por %p350, %p351
      %p353 = scmp.ne.s32.totalorder %s341, %s342
      %p354 = scmp.eq.s32.totalorder %s96, 1
      %p355 = por %p353, %p354
      %p357 = scmp.ne.s32.totalorder %s342, %s356
      %p358 = scmp.eq.s32.totalorder %s96, 0
      %p359 = por %p357, %p358
      %s361 = sadd.s32 %s360, 1
      %p364 = scmp.eq.s32.totalorder %s90, 1
      %p365 = scmp.ne.s32.totalorder %s360, %s362
      %p366 = scmp.eq.s32.totalorder %s90, 0
      %p367 = por %p365, %p366
      %p368 = scmp.ne.s32.totalorder %s360, %s362
      %p369 = scmp.eq.s32.totalorder %s95, 1
      %p370 = por %p368, %p369
      %p371 = scmp.ne.s32.totalorder %s362, %s363
      %p372 = scmp.eq.s32.totalorder %s95, 0
      %p373 = por %p371, %p372
      %p374 = scmp.ne.s32.totalorder %s362, %s363
      %p375 = scmp.eq.s32.totalorder %s96, 1
      %p376 = por %p374, %p375
      %p378 = scmp.ne.s32.totalorder %s363, %s377
      %p379 = scmp.eq.s32.totalorder %s96, 0
      %p380 = por %p378, %p379
      %s382 = sadd.s32 %s381, 1
      %p385 = scmp.eq.s32.totalorder %s90, 1
      %p386 = scmp.ne.s32.totalorder %s381, %s383
      %p387 = scmp.eq.s32.totalorder %s90, 0
      %p388 = por %p386, %p387
      %p389 = scmp.ne.s32.totalorder %s381, %s383
      %p390 = scmp.eq.s32.totalorder %s95, 1
      %p391 = por %p389, %p390
      %p392 = scmp.ne.s32.totalorder %s383, %s384
      %p393 = scmp.eq.s32.totalorder %s95, 0
      %p394 = por %p392, %p393
      %p395 = scmp.ne.s32.totalorder %s383, %s384
      %p396 = scmp.eq.s32.totalorder %s96, 1
      %p397 = por %p395, %p396
      %p399 = scmp.ne.s32.totalorder %s384, %s398
      %p400 = scmp.eq.s32.totalorder %s96, 0
      %p401 = por %p399, %p400
      %s403 = sadd.s32 %s402, 1
      %p406 = scmp.eq.s32.totalorder %s90, 1
      %p407 = scmp.ne.s32.totalorder %s402, %s404
      %p408 = scmp.eq.s32.totalorder %s90, 0
      %p409 = por %p407, %p408
      %p410 = scmp.ne.s32.totalorder %s402, %s404
      %p411 = scmp.eq.s32.totalorder %s95, 1
      %p412 = por %p410, %p411
      %p413 = scmp.ne.s32.totalorder %s404, %s405
      %p414 = scmp.eq.s32.totalorder %s95, 0
      %p415 = por %p413, %p414
      %p416 = scmp.ne.s32.totalorder %s404, %s405
      %p417 = scmp.eq.s32.totalorder %s96, 1
      %p418 = por %p416, %p417
      %p420 = scmp.ne.s32.totalorder %s405, %s419
      %p421 = scmp.eq.s32.totalorder %s96, 0
      %p422 = por %p420, %p421
      %s424 = sadd.s32 %s423, 1
      %p427 = scmp.eq.s32.totalorder %s90, 1
      %p428 = scmp.ne.s32.totalorder %s423, %s425
      %p429 = scmp.eq.s32.totalorder %s90, 0
      %p430 = por %p428, %p429
      %p431 = scmp.ne.s32.totalorder %s423, %s425
      %p432 = scmp.eq.s32.totalorder %s95, 1
      %p433 = por %p431, %p432
      %p434 = scmp.ne.s32.totalorder %s425, %s426
      %p435 = scmp.eq.s32.totalorder %s95, 0
      %p436 = por %p434, %p435
      %p437 = scmp.ne.s32.totalorder %s425, %s426
      %p438 = scmp.eq.s32.totalorder %s96, 1
      %p439 = por %p437, %p438
      %p441 = scmp.ne.s32.totalorder %s426, %s440
      %p442 = scmp.eq.s32.totalorder %s96, 0
      %p443 = por %p441, %p442
      %s445 = sadd.s32 %s444, 1
      %p448 = scmp.eq.s32.totalorder %s90, 1
      %p449 = scmp.ne.s32.totalorder %s444, %s446
      %p450 = scmp.eq.s32.totalorder %s90, 0
      %p451 = por %p449, %p450
      %p452 = scmp.ne.s32.totalorder %s444, %s446
      %p453 = scmp.eq.s32.totalorder %s95, 1
      %p454 = por %p452, %p453
      %p455 = scmp.ne.s32.totalorder %s446, %s447
      %p456 = scmp.eq.s32.totalorder %s95, 0
      %p457 = por %p455, %p456
      %p458 = scmp.ne.s32.totalorder %s446, %s447
      %p459 = scmp.eq.s32.totalorder %s96, 1
      %p460 = por %p458, %p459
      %p462 = scmp.ne.s32.totalorder %s447, %s461
      %p463 = scmp.eq.s32.totalorder %s96, 0
      %p464 = por %p462, %p463
      %s466 = sadd.s32 %s465, 1
      %p469 = scmp.eq.s32.totalorder %s90, 1
      %p470 = scmp.ne.s32.totalorder %s465, %s467
      %p471 = scmp.eq.s32.totalorder %s90, 0
      %p472 = por %p470, %p471
      %p473 = scmp.ne.s32.totalorder %s465, %s467
      %p474 = scmp.eq.s32.totalorder %s95, 1
      %p475 = por %p473, %p474
      %p476 = scmp.ne.s32.totalorder %s467, %s468
      %p477 = scmp.eq.s32.totalorder %s95, 0
      %p478 = por %p476, %p477
      %p479 = scmp.ne.s32.totalorder %s467, %s468
      %p480 = scmp.eq.s32.totalorder %s96, 1
      %p481 = por %p479, %p480
      %p483 = scmp.ne.s32.totalorder %s468, %s482
      %p484 = scmp.eq.s32.totalorder %s96, 0
      %p485 = por %p483, %p484
      %s487 = sadd.s32 %s486, 1
      %p490 = scmp.eq.s32.totalorder %s90, 1
      %p491 = scmp.ne.s32.totalorder %s486, %s488
      %p492 = scmp.eq.s32.totalorder %s90, 0
      %p493 = por %p491, %p492
      %p494 = scmp.ne.s32.totalorder %s486, %s488
      %p495 = scmp.eq.s32.totalorder %s95, 1
      %p496 = por %p494, %p495
      %p497 = scmp.ne.s32.totalorder %s488, %s489
      %p498 = scmp.eq.s32.totalorder %s95, 0
      %p499 = por %p497, %p498
      %p500 = scmp.ne.s32.totalorder %s488, %s489
      %p501 = scmp.eq.s32.totalorder %s96, 1
      %p502 = por %p500, %p501
      %p504 = scmp.ne.s32.totalorder %s489, %s503
      %p505 = scmp.eq.s32.totalorder %s96, 0
      %p506 = por %p504, %p505
      %s508 = sadd.s32 %s507, 1
      %p511 = scmp.eq.s32.totalorder %s90, 1
      %p512 = scmp.ne.s32.totalorder %s507, %s509
      %p513 = scmp.eq.s32.totalorder %s90, 0
      %p514 = por %p512, %p513
      %p515 = scmp.ne.s32.totalorder %s507, %s509
      %p516 = scmp.eq.s32.totalorder %s95, 1
      %p517 = por %p515, %p516
      %p518 = scmp.ne.s32.totalorder %s509, %s510
      %p519 = scmp.eq.s32.totalorder %s95, 0
      %p520 = por %p518, %p519
      %p521 = scmp.ne.s32.totalorder %s509, %s510
      %p522 = scmp.eq.s32.totalorder %s96, 1
      %p523 = por %p521, %p522
      %p525 = scmp.ne.s32.totalorder %s510, %s524
      %p526 = scmp.eq.s32.totalorder %s96, 0
      %p527 = por %p525, %p526
      %s529 = sadd.s32 %s528, 1
      %p532 = scmp.eq.s32.totalorder %s90, 1
      %p533 = scmp.ne.s32.totalorder %s528, %s530
      %p534 = scmp.eq.s32.totalorder %s90, 0
      %p535 = por %p533, %p534
      %p536 = scmp.ne.s32.totalorder %s528, %s530
      %p537 = scmp.eq.s32.totalorder %s95, 1
      %p538 = por %p536, %p537
      %p539 = scmp.ne.s32.totalorder %s530, %s531
      %p540 = scmp.eq.s32.totalorder %s95, 0
      %p541 = por %p539, %p540
      %p542 = scmp.ne.s32.totalorder %s530, %s531
      %p543 = scmp.eq.s32.totalorder %s96, 1
      %p544 = por %p542, %p543
      %p546 = scmp.ne.s32.totalorder %s531, %s545
      %p547 = scmp.eq.s32.totalorder %s96, 0
      %p548 = por %p546, %p547
      %s550 = sadd.s32 %s549, 1
      %p553 = scmp.eq.s32.totalorder %s90, 1
      %p554 = scmp.ne.s32.totalorder %s549, %s551
      %p555 = scmp.eq.s32.totalorder %s90, 0
      %p556 = por %p554, %p555
      %p557 = scmp.ne.s32.totalorder %s549, %s551
      %p558 = scmp.eq.s32.totalorder %s95, 1
      %p559 = por %p557, %p558
      %p560 = scmp.ne.s32.totalorder %s551, %s552
      %p561 = scmp.eq.s32.totalorder %s95, 0
      %p562 = por %p560, %p561
      %p563 = scmp.ne.s32.totalorder %s551, %s552
      %p564 = scmp.eq.s32.totalorder %s96, 1
      %p565 = por %p563, %p564
      %p567 = scmp.ne.s32.totalorder %s552, %s566
      %p568 = scmp.eq.s32.totalorder %s96, 0
      %p569 = por %p567, %p568
      %s571 = sadd.s32 %s570, 1
      %p574 = scmp.eq.s32.totalorder %s90, 1
      %p575 = scmp.ne.s32.totalorder %s570, %s572
      %p576 = scmp.eq.s32.totalorder %s90, 0
      %p577 = por %p575, %p576
      %p578 = scmp.ne.s32.totalorder %s570, %s572
      %p579 = scmp.eq.s32.totalorder %s95, 1
      %p580 = por %p578, %p579
      %p581 = scmp.ne.s32.totalorder %s572, %s573
      %p582 = scmp.eq.s32.totalorder %s95, 0
      %p583 = por %p581, %p582
      %p584 = scmp.ne.s32.totalorder %s572, %s573
      %p585 = scmp.eq.s32.totalorder %s96, 1
      %p586 = por %p584, %p585
      %p588 = scmp.ne.s32.totalorder %s573, %s587
      %p589 = scmp.eq.s32.totalorder %s96, 0
      %p590 = por %p588, %p589
      %s592 = sadd.s32 %s591, 1
      %p595 = scmp.eq.s32.totalorder %s90, 1
      %p596 = scmp.ne.s32.totalorder %s591, %s593
      %p597 = scmp.eq.s32.totalorder %s90, 0
      %p598 = por %p596, %p597
      %p599 = scmp.ne.s32.totalorder %s591, %s593
      %p600 = scmp.eq.s32.totalorder %s95, 1
      %p601 = por %p599, %p600
      %p602 = scmp.ne.s32.totalorder %s593, %s594
      %p603 = scmp.eq.s32.totalorder %s95, 0
      %p604 = por %p602, %p603
      %p605 = scmp.ne.s32.totalorder %s593, %s594
      %p606 = scmp.eq.s32.totalorder %s96, 1
      %p607 = por %p605, %p606
      %p609 = scmp.ne.s32.totalorder %s594, %s608
      %p610 = scmp.eq.s32.totalorder %s96, 0
      %p611 = por %p609, %p610
      %s613 = sadd.s32 %s612, 1
      %p616 = scmp.eq.s32.totalorder %s90, 1
      %p617 = scmp.ne.s32.totalorder %s612, %s614
      %p618 = scmp.eq.s32.totalorder %s90, 0
      %p619 = por %p617, %p618
      %p620 = scmp.ne.s32.totalorder %s612, %s614
      %p621 = scmp.eq.s32.totalorder %s95, 1
      %p622 = por %p620, %p621
      %p623 = scmp.ne.s32.totalorder %s614, %s615
      %p624 = scmp.eq.s32.totalorder %s95, 0
      %p625 = por %p623, %p624
      %p626 = scmp.ne.s32.totalorder %s614, %s615
      %p627 = scmp.eq.s32.totalorder %s96, 1
      %p628 = por %p626, %p627
      %p630 = scmp.ne.s32.totalorder %s615, %s629
      %p631 = scmp.eq.s32.totalorder %s96, 0
      %p632 = por %p630, %p631
      %s634 = sadd.s32 %s633, 1
      %p637 = scmp.eq.s32.totalorder %s90, 1
      %p638 = scmp.ne.s32.totalorder %s633, %s635
      %p639 = scmp.eq.s32.totalorder %s90, 0
      %p640 = por %p638, %p639
      %p641 = scmp.ne.s32.totalorder %s633, %s635
      %p642 = scmp.eq.s32.totalorder %s95, 1
      %p643 = por %p641, %p642
      %p644 = scmp.ne.s32.totalorder %s635, %s636
      %p645 = scmp.eq.s32.totalorder %s95, 0
      %p646 = por %p644, %p645
      %p647 = scmp.ne.s32.totalorder %s635, %s636
      %p648 = scmp.eq.s32.totalorder %s96, 1
      %p649 = por %p647, %p648
      %p651 = scmp.ne.s32.totalorder %s636, %s650
      %p652 = scmp.eq.s32.totalorder %s96, 0
      %p653 = por %p651, %p652
      %s655 = sadd.s32 %s654, 1
      %p658 = scmp.eq.s32.totalorder %s90, 1
      %p659 = scmp.ne.s32.totalorder %s654, %s656
      %p660 = scmp.eq.s32.totalorder %s90, 0
      %p661 = por %p659, %p660
      %p662 = scmp.ne.s32.totalorder %s654, %s656
      %p663 = scmp.eq.s32.totalorder %s95, 1
      %p664 = por %p662, %p663
      %p665 = scmp.ne.s32.totalorder %s656, %s657
      %p666 = scmp.eq.s32.totalorder %s95, 0
      %p667 = por %p665, %p666
      %p668 = scmp.ne.s32.totalorder %s656, %s657
      %p669 = scmp.eq.s32.totalorder %s96, 1
      %p670 = por %p668, %p669
      %p672 = scmp.ne.s32.totalorder %s657, %s671
      %p673 = scmp.eq.s32.totalorder %s96, 0
      %p674 = por %p672, %p673
      %s676 = sadd.s32 %s675, 1
      %p679 = scmp.eq.s32.totalorder %s90, 1
      %p680 = scmp.ne.s32.totalorder %s675, %s677
      %p681 = scmp.eq.s32.totalorder %s90, 0
      %p682 = por %p680, %p681
      %p683 = scmp.ne.s32.totalorder %s675, %s677
      %p684 = scmp.eq.s32.totalorder %s95, 1
      %p685 = por %p683, %p684
      %p686 = scmp.ne.s32.totalorder %s677, %s678
      %p687 = scmp.eq.s32.totalorder %s95, 0
      %p688 = por %p686, %p687
      %p689 = scmp.ne.s32.totalorder %s677, %s678
      %p690 = scmp.eq.s32.totalorder %s96, 1
      %p691 = por %p689, %p690
      %p693 = scmp.ne.s32.totalorder %s678, %s692
      %p694 = scmp.eq.s32.totalorder %s96, 0
      %p695 = por %p693, %p694
      %s696 = ssub.s32 %s90, %s97
      %p697 = scmp.eq.s32.totalorder %s696, 0
      %s699 = sadd.s32 %s698, 1
      %s700 = scalar_select %p697, %s698, %s699
      %p703 = pneg %p697
      %p704 = scmp.eq.s32.totalorder %s90, 1
      %p705 = por %p703, %p704
      %p706 = scmp.ne.s32.totalorder %s698, %s701
      %p707 = scmp.eq.s32.totalorder %s90, 0
      %p708 = por %p706, %p707
      %p709 = scmp.ne.s32.totalorder %s698, %s701
      %p710 = scmp.eq.s32.totalorder %s95, 1
      %p711 = por %p709, %p710
      %p712 = scmp.ne.s32.totalorder %s701, %s702
      %p713 = scmp.eq.s32.totalorder %s95, 0
      %p714 = por %p712, %p713
      %p715 = scmp.ne.s32.totalorder %s701, %s702
      %p716 = scmp.eq.s32.totalorder %s96, 1
      %p717 = por %p715, %p716
      %p719 = scmp.ne.s32.totalorder %s702, %s718
      %p720 = scmp.eq.s32.totalorder %s96, 0
      %p721 = por %p719, %p720
      %s722 = ssub.s32 %s90, %s97
      %p723 = scmp.eq.s32.totalorder %s722, 0
      %s725 = sadd.s32 %s724, 1
      %s726 = scalar_select %p723, %s724, %s725
      %p729 = pneg %p723
      %p730 = scmp.eq.s32.totalorder %s90, 1
      %p731 = por %p729, %p730
      %p732 = scmp.ne.s32.totalorder %s724, %s727
      %p733 = scmp.eq.s32.totalorder %s90, 0
      %p734 = por %p732, %p733
      %p735 = scmp.ne.s32.totalorder %s724, %s727
      %p736 = scmp.eq.s32.totalorder %s95, 1
      %p737 = por %p735, %p736
      %p738 = scmp.ne.s32.totalorder %s727, %s728
      %p739 = scmp.eq.s32.totalorder %s95, 0
      %p740 = por %p738, %p739
      %p741 = scmp.ne.s32.totalorder %s727, %s728
      %p742 = scmp.eq.s32.totalorder %s96, 1
      %p743 = por %p741, %p742
      %p745 = scmp.ne.s32.totalorder %s728, %s744
      %p746 = scmp.eq.s32.totalorder %s96, 0
      %p747 = por %p745, %p746
      %s748 = ssub.s32 %s90, %s97
      %p749 = scmp.eq.s32.totalorder %s748, 0
      %s751 = sadd.s32 %s750, 1
      %s752 = scalar_select %p749, %s750, %s751
      %p755 = pneg %p749
      %p756 = scmp.eq.s32.totalorder %s90, 1
      %p757 = por %p755, %p756
      %p758 = scmp.ne.s32.totalorder %s750, %s753
      %p759 = scmp.eq.s32.totalorder %s90, 0
      %p760 = por %p758, %p759
      %p761 = scmp.ne.s32.totalorder %s750, %s753
      %p762 = scmp.eq.s32.totalorder %s95, 1
      %p763 = por %p761, %p762
      %p764 = scmp.ne.s32.totalorder %s753, %s754
      %p765 = scmp.eq.s32.totalorder %s95, 0
      %p766 = por %p764, %p765
      %p767 = scmp.ne.s32.totalorder %s753, %s754
      %p768 = scmp.eq.s32.totalorder %s96, 1
      %p769 = por %p767, %p768
      %p771 = scmp.ne.s32.totalorder %s754, %s770
      %p772 = scmp.eq.s32.totalorder %s96, 0
      %p773 = por %p771, %p772
      %s774 = ssub.s32 %s90, %s97
      %p775 = scmp.eq.s32.totalorder %s774, 0
      %s777 = sadd.s32 %s776, 1
      %s778 = scalar_select %p775, %s776, %s777
      %p781 = pneg %p775
      %p782 = scmp.eq.s32.totalorder %s90, 1
      %p783 = por %p781, %p782
      %p784 = scmp.ne.s32.totalorder %s776, %s779
      %p785 = scmp.eq.s32.totalorder %s90, 0
      %p786 = por %p784, %p785
      %p787 = scmp.ne.s32.totalorder %s776, %s779
      %p788 = scmp.eq.s32.totalorder %s95, 1
      %p789 = por %p787, %p788
      %p790 = scmp.ne.s32.totalorder %s779, %s780
      %p791 = scmp.eq.s32.totalorder %s95, 0
      %p792 = por %p790, %p791
      %p793 = scmp.ne.s32.totalorder %s779, %s780
      %p794 = scmp.eq.s32.totalorder %s96, 1
      %p795 = por %p793, %p794
      %p797 = scmp.ne.s32.totalorder %s780, %s796
      %p798 = scmp.eq.s32.totalorder %s96, 0
      %p799 = por %p797, %p798
      %p800 = scmp.le.s32.totalorder 1, %s90
      %p801 = scmp.lt.s32.totalorder %s90, 3
      %p802 = pnand %p800, %p801
      %p803 = pneg %p802
      // Predicated region
      $region9: #{tpu_custom_call.1} parent=5 // pred_check
        _
      $region10: #{tpu_custom_call.1} parent=5 // pred_check_branch
        %805 = sbr.rel (%p802) target = $region12
      $region11: #{tpu_custom_call.1} parent=5 // pred_region
        %s806 = ssub.s32 %s90, 1
        // Predicated region
        $region13: #{tpu_custom_call.1} parent=11 // pred_check
          %p807 = pneg %p163
        $region14: #{tpu_custom_call.1} parent=11 // pred_check_branch
          %809 = sbr.rel (%p807) target = $region16
        $region15: #{tpu_custom_call.1} parent=11 // pred_region
          %s811 = ssub.s32 32, 32
          %812 = vsyncadd [#allocation6], %s811
          %s814 = sshll.u32 [#allocation7], 4
          %s815 = int_to_ptr.vmem [resolvable:$true] %s814
          %817 = dma.hbm_to_vmem [thread:$0]  %s5, 32, %s815, [#allocation6]
        $region16: #{tpu_custom_call.1} parent=11 // pred_fallthru
          _
        // Predicated region
        $region17: #{tpu_custom_call.1} parent=11 // pred_check
          %p818 = pneg %p184
        $region18: #{tpu_custom_call.1} parent=11 // pred_check_branch
          %820 = sbr.rel (%p818) target = $region20
        $region19: #{tpu_custom_call.1} parent=11 // pred_region
          %s822 = ssub.s32 32, 32
          %823 = vsyncadd [#allocation9], %s822
          %s825 = sshll.u32 [#allocation8], 4
          %s826 = int_to_ptr.vmem [resolvable:$true] %s825
          %828 = dma.hbm_to_vmem [thread:$0]  %s7, 32, %s826, [#allocation9]
        $region20: #{tpu_custom_call.1} parent=11 // pred_fallthru
          _
        // Predicated region
        $region21: #{tpu_custom_call.1} parent=11 // pred_check
          %p829 = pneg %p205
        $region22: #{tpu_custom_call.1} parent=11 // pred_check_branch
          %831 = sbr.rel (%p829) target = $region24
        $region23: #{tpu_custom_call.1} parent=11 // pred_region
          _
        $region24: #{tpu_custom_call.1} parent=11 // pred_fallthru
          _
        // Predicated region
        $region25: #{tpu_custom_call.1} parent=11 // pred_check
          %p832 = pneg %p226
        $region26: #{tpu_custom_call.1} parent=11 // pred_check_branch
          %834 = sbr.rel (%p832) target = $region28
        $region27: #{tpu_custom_call.1} parent=11 // pred_region
          %s836 = ssub.s32 16, 16
          %837 = vsyncadd [#allocation9], %s836
          %s839 = sshll.u32 [#allocation10], 4
          %s840 = int_to_ptr.vmem [resolvable:$true] %s839
          %842 = dma.hbm_to_vmem [thread:$0]  %s11, 16, %s840, [#allocation9]
        $region28: #{tpu_custom_call.1} parent=11 // pred_fallthru
          _
        // Predicated region
        $region29: #{tpu_custom_call.1} parent=11 // pred_check
          %p843 = pneg %p247
        $region30: #{tpu_custom_call.1} parent=11 // pred_check_branch
          %845 = sbr.rel (%p843) target = $region32
        $region31: #{tpu_custom_call.1} parent=11 // pred_region
          %s847 = ssub.s32 1024, 1024
          %848 = vsyncadd [#allocation12], %s847
          %s849 = sshll.u32 [#allocation11], 4
          %s850 = int_to_ptr.vmem [resolvable:$true] %s849
          %855 = dma.hbm_to_vmem [thread:$0]  %s13, 1024, %s850, [#allocation12], 64, 64, 4
        $region32: #{tpu_custom_call.1} parent=11 // pred_fallthru
          _
        // Predicated region
        $region33: #{tpu_custom_call.1} parent=11 // pred_check
          %p856 = pneg %p268
        $region34: #{tpu_custom_call.1} parent=11 // pred_check_branch
          %858 = sbr.rel (%p856) target = $region36
        $region35: #{tpu_custom_call.1} parent=11 // pred_region
          %s860 = ssub.s32 16, 16
          %861 = vsyncadd [#allocation12], %s860
          %s863 = sshll.u32 [#allocation13], 4
          %s864 = int_to_ptr.vmem [resolvable:$true] %s863
          %866 = dma.hbm_to_vmem [thread:$0]  %s15, 16, %s864, [#allocation12]
        $region36: #{tpu_custom_call.1} parent=11 // pred_fallthru
          _
        // Predicated region
        $region37: #{tpu_custom_call.1} parent=11 // pred_check
          %p867 = pneg %p289
        $region38: #{tpu_custom_call.1} parent=11 // pred_check_branch
          %869 = sbr.rel (%p867) target = $region40
        $region39: #{tpu_custom_call.1} parent=11 // pred_region
          %s871 = ssub.s32 1024, 1024
          %872 = vsyncadd [#allocation15], %s871
          %s873 = sshll.u32 [#allocation14], 4
          %s874 = int_to_ptr.vmem [resolvable:$true] %s873
          %879 = dma.hbm_to_vmem [thread:$0]  %s17, 1024, %s874, [#allocation15], 64, 64, 4
        $region40: #{tpu_custom_call.1} parent=11 // pred_fallthru
          _
        // Predicated region
        $region41: #{tpu_custom_call.1} parent=11 // pred_check
          %p880 = pneg %p310
        $region42: #{tpu_custom_call.1} parent=11 // pred_check_branch
          %882 = sbr.rel (%p880) target = $region44
        $region43: #{tpu_custom_call.1} parent=11 // pred_region
          %s884 = ssub.s32 16, 16
          %885 = vsyncadd [#allocation15], %s884
          %s887 = sshll.u32 [#allocation16], 4
          %s888 = int_to_ptr.vmem [resolvable:$true] %s887
          %890 = dma.hbm_to_vmem [thread:$0]  %s19, 16, %s888, [#allocation15]
        $region44: #{tpu_custom_call.1} parent=11 // pred_fallthru
          _
        // Predicated region
        $region45: #{tpu_custom_call.1} parent=11 // pred_check
          %p891 = pneg %p331
        $region46: #{tpu_custom_call.1} parent=11 // pred_check_branch
          %893 = sbr.rel (%p891) target = $region48
        $region47: #{tpu_custom_call.1} parent=11 // pred_region
          %s895 = ssub.s32 512, 512
          %896 = vsyncadd [#allocation18], %s895
          %s897 = sshll.u32 [#allocation17], 4
          %s898 = int_to_ptr.vmem [resolvable:$true] %s897
          %903 = dma.hbm_to_vmem [thread:$0]  %s21, 512, %s898, [#allocation18], 64, 64, 4
        $region48: #{tpu_custom_call.1} parent=11 // pred_fallthru
          _
        // Predicated region
        $region49: #{tpu_custom_call.1} parent=11 // pred_check
          %p904 = pneg %p352
        $region50: #{tpu_custom_call.1} parent=11 // pred_check_branch
          %906 = sbr.rel (%p904) target = $region52
        $region51: #{tpu_custom_call.1} parent=11 // pred_region
          %s908 = ssub.s32 16, 16
          %909 = vsyncadd [#allocation18], %s908
          %s911 = sshll.u32 [#allocation19], 4
          %s912 = int_to_ptr.vmem [resolvable:$true] %s911
          %914 = dma.hbm_to_vmem [thread:$0]  %s23, 16, %s912, [#allocation18]
        $region52: #{tpu_custom_call.1} parent=11 // pred_fallthru
          _
        // Predicated region
        $region53: #{tpu_custom_call.1} parent=11 // pred_check
          %p915 = pneg %p373
        $region54: #{tpu_custom_call.1} parent=11 // pred_check_branch
          %917 = sbr.rel (%p915) target = $region56
        $region55: #{tpu_custom_call.1} parent=11 // pred_region
          %s919 = ssub.s32 1024, 1024
          %920 = vsyncadd [#allocation21], %s919
          %s921 = sshll.u32 [#allocation20], 4
          %s922 = int_to_ptr.vmem [resolvable:$true] %s921
          %927 = dma.hbm_to_vmem [thread:$0]  %s25, 1024, %s922, [#allocation21], 64, 64, 4
        $region56: #{tpu_custom_call.1} parent=11 // pred_fallthru
          _
        // Predicated region
        $region57: #{tpu_custom_call.1} parent=11 // pred_check
          %p928 = pneg %p394
        $region58: #{tpu_custom_call.1} parent=11 // pred_check_branch
          %930 = sbr.rel (%p928) target = $region60
        $region59: #{tpu_custom_call.1} parent=11 // pred_region
          %s932 = ssub.s32 16, 16
          %933 = vsyncadd [#allocation21], %s932
          %s935 = sshll.u32 [#allocation22], 4
          %s936 = int_to_ptr.vmem [resolvable:$true] %s935
          %938 = dma.hbm_to_vmem [thread:$0]  %s27, 16, %s936, [#allocation21]
        $region60: #{tpu_custom_call.1} parent=11 // pred_fallthru
          _
        // Predicated region
        $region61: #{tpu_custom_call.1} parent=11 // pred_check
          %p939 = pneg %p415
        $region62: #{tpu_custom_call.1} parent=11 // pred_check_branch
          %941 = sbr.rel (%p939) target = $region64
        $region63: #{tpu_custom_call.1} parent=11 // pred_region
          %s943 = ssub.s32 2048, 2048
          %944 = vsyncadd [#allocation24], %s943
          %s945 = sshll.u32 [#allocation23], 4
          %s946 = int_to_ptr.vmem [resolvable:$true] %s945
          %951 = dma.hbm_to_vmem [thread:$0]  %s29, 2048, %s946, [#allocation24], 128, 128, 8
        $region64: #{tpu_custom_call.1} parent=11 // pred_fallthru
          _
        // Predicated region
        $region65: #{tpu_custom_call.1} parent=11 // pred_check
          %p952 = pneg %p436
        $region66: #{tpu_custom_call.1} parent=11 // pred_check_branch
          %954 = sbr.rel (%p952) target = $region68
        $region67: #{tpu_custom_call.1} parent=11 // pred_region
          %s956 = ssub.s32 32, 32
          %957 = vsyncadd [#allocation24], %s956
          %s959 = sshll.u32 [#allocation25], 4
          %s960 = int_to_ptr.vmem [resolvable:$true] %s959
          %962 = dma.hbm_to_vmem [thread:$0]  %s31, 32, %s960, [#allocation24]
        $region68: #{tpu_custom_call.1} parent=11 // pred_fallthru
          _
        // Predicated region
        $region69: #{tpu_custom_call.1} parent=11 // pred_check
          %p963 = pneg %p457
        $region70: #{tpu_custom_call.1} parent=11 // pred_check_branch
          %965 = sbr.rel (%p963) target = $region72
        $region71: #{tpu_custom_call.1} parent=11 // pred_region
          %s967 = ssub.s32 2048, 2048
          %968 = vsyncadd [#allocation27], %s967
          %s969 = sshll.u32 [#allocation26], 4
          %s970 = int_to_ptr.vmem [resolvable:$true] %s969
          %975 = dma.hbm_to_vmem [thread:$0]  %s33, 2048, %s970, [#allocation27], 64, 64, 4
        $region72: #{tpu_custom_call.1} parent=11 // pred_fallthru
          _
        // Predicated region
        $region73: #{tpu_custom_call.1} parent=11 // pred_check
          %p976 = pneg %p478
        $region74: #{tpu_custom_call.1} parent=11 // pred_check_branch
          %978 = sbr.rel (%p976) target = $region76
        $region75: #{tpu_custom_call.1} parent=11 // pred_region
          %s980 = ssub.s32 16, 16
          %981 = vsyncadd [#allocation27], %s980
          %s983 = sshll.u32 [#allocation28], 4
          %s984 = int_to_ptr.vmem [resolvable:$true] %s983
          %986 = dma.hbm_to_vmem [thread:$0]  %s35, 16, %s984, [#allocation27]
        $region76: #{tpu_custom_call.1} parent=11 // pred_fallthru
          _
        // Predicated region
        $region77: #{tpu_custom_call.1} parent=11 // pred_check
          %p987 = pneg %p499
        $region78: #{tpu_custom_call.1} parent=11 // pred_check_branch
          %989 = sbr.rel (%p987) target = $region80
        $region79: #{tpu_custom_call.1} parent=11 // pred_region
          _
        $region80: #{tpu_custom_call.1} parent=11 // pred_fallthru
          _
        // Predicated region
        $region81: #{tpu_custom_call.1} parent=11 // pred_check
          %p990 = pneg %p520
        $region82: #{tpu_custom_call.1} parent=11 // pred_check_branch
          %992 = sbr.rel (%p990) target = $region84
        $region83: #{tpu_custom_call.1} parent=11 // pred_region
          %s994 = ssub.s32 16, 16
          %995 = vsyncadd [#allocation30], %s994
          %s997 = sshll.u32 [#allocation29], 4
          %s998 = int_to_ptr.vmem [resolvable:$true] %s997
          %1000 = dma.hbm_to_vmem [thread:$0]  %s39, 16, %s998, [#allocation30]
        $region84: #{tpu_custom_call.1} parent=11 // pred_fallthru
          _
        // Predicated region
        $region85: #{tpu_custom_call.1} parent=11 // pred_check
          %p1001 = pneg %p541
        $region86: #{tpu_custom_call.1} parent=11 // pred_check_branch
          %1003 = sbr.rel (%p1001) target = $region88
        $region87: #{tpu_custom_call.1} parent=11 // pred_region
          _
        $region88: #{tpu_custom_call.1} parent=11 // pred_fallthru
          _
        // Predicated region
        $region89: #{tpu_custom_call.1} parent=11 // pred_check
          %p1004 = pneg %p562
        $region90: #{tpu_custom_call.1} parent=11 // pred_check_branch
          %1006 = sbr.rel (%p1004) target = $region92
        $region91: #{tpu_custom_call.1} parent=11 // pred_region
          _
        $region92: #{tpu_custom_call.1} parent=11 // pred_fallthru
          _
        // Predicated region
        $region93: #{tpu_custom_call.1} parent=11 // pred_check
          %p1007 = pneg %p583
        $region94: #{tpu_custom_call.1} parent=11 // pred_check_branch
          %1009 = sbr.rel (%p1007) target = $region96
        $region95: #{tpu_custom_call.1} parent=11 // pred_region
          _
        $region96: #{tpu_custom_call.1} parent=11 // pred_fallthru
          _
        // Predicated region
        $region97: #{tpu_custom_call.1} parent=11 // pred_check
          %p1010 = pneg %p604
        $region98: #{tpu_custom_call.1} parent=11 // pred_check_branch
          %1012 = sbr.rel (%p1010) target = $region100
        $region99: #{tpu_custom_call.1} parent=11 // pred_region
          _
        $region100: #{tpu_custom_call.1} parent=11 // pred_fallthru
          _
        // Predicated region
        $region101: #{tpu_custom_call.1} parent=11 // pred_check
          %p1013 = pneg %p625
        $region102: #{tpu_custom_call.1} parent=11 // pred_check_branch
          %1015 = sbr.rel (%p1013) target = $region104
        $region103: #{tpu_custom_call.1} parent=11 // pred_region
          %s1017 = ssub.s32 1024, 1024
          %1018 = vsyncadd [#allocation30], %s1017
          %s1019 = sshll.u32 [#allocation31], 4
          %s1020 = int_to_ptr.vmem [resolvable:$true] %s1019
          %1025 = dma.hbm_to_vmem [thread:$0]  %s49, 1024, %s1020, [#allocation30], 64, 64, 4
        $region104: #{tpu_custom_call.1} parent=11 // pred_fallthru
          _
        // Predicated region
        $region105: #{tpu_custom_call.1} parent=11 // pred_check
          %p1026 = pneg %p646
        $region106: #{tpu_custom_call.1} parent=11 // pred_check_branch
          %1028 = sbr.rel (%p1026) target = $region108
        $region107: #{tpu_custom_call.1} parent=11 // pred_region
          _
        $region108: #{tpu_custom_call.1} parent=11 // pred_fallthru
          _
        // Predicated region
        $region109: #{tpu_custom_call.1} parent=11 // pred_check
          %p1029 = pneg %p667
        $region110: #{tpu_custom_call.1} parent=11 // pred_check_branch
          %1031 = sbr.rel (%p1029) target = $region112
        $region111: #{tpu_custom_call.1} parent=11 // pred_region
          _
        $region112: #{tpu_custom_call.1} parent=11 // pred_fallthru
          _
        // Predicated region
        $region113: #{tpu_custom_call.1} parent=11 // pred_check
          %p1032 = pneg %p688
        $region114: #{tpu_custom_call.1} parent=11 // pred_check_branch
          %1034 = sbr.rel (%p1032) target = $region116
        $region115: #{tpu_custom_call.1} parent=11 // pred_region
          _
        $region116: #{tpu_custom_call.1} parent=11 // pred_fallthru
          _
      $region12: #{tpu_custom_call.1} parent=5 // pred_fallthru
        _
      %p1035 = scmp.lt.s32.totalorder %s90, 2
      // Predicated region
      $region117: #{tpu_custom_call.1} parent=5 // pred_check
        %p1036 = pneg %p1035
      $region118: #{tpu_custom_call.1} parent=5 // pred_check_branch
        %1038 = sbr.rel (%p1036) target = $region120
      $region119: #{tpu_custom_call.1} parent=5 // pred_region
        // Predicated region
        $region121: #{tpu_custom_call.1} parent=119 // pred_check
          %p1039 = pneg %p110
        $region122: #{tpu_custom_call.1} parent=119 // pred_check_branch
          %1041 = sbr.rel (%p1039) target = $region124
        $region123: #{tpu_custom_call.1} parent=119 // pred_region
          %s1042 = sand.u32 %s100, 1
          %s1043 = scalar_lea.sflag [#allocation3], %s1042
          %s1044 = sand.u32 %s100, 1
          %s1045 = smul.addr %s1044, 16
          %s1046 = scalar_lea.vmem [#allocation2], %s1045
          %s1048 = ssub.s32 256, 256
          %1049 = vsyncadd %s1043, %s1048
          %s1050 = smul.addr %s90, 2
          %s1051 = smul.addr %s1050, 128
          %s1052 = scalar_lea.hbm %s1, %s1051
          %s1054 = sshll.u32 %s1046, 4
          %s1055 = int_to_ptr.vmem [resolvable:$true] %s1054
          %1057 = dma.hbm_to_vmem [thread:$0]  %s1052, 256, %s1055, %s1043
        $region124: #{tpu_custom_call.1} parent=119 // pred_fallthru
          _
        // Predicated region
        $region125: #{tpu_custom_call.1} parent=119 // pred_check
          %p1058 = pneg %p136
        $region126: #{tpu_custom_call.1} parent=119 // pred_check_branch
          %1060 = sbr.rel (%p1058) target = $region128
        $region127: #{tpu_custom_call.1} parent=119 // pred_region
          %s1061 = sand.u32 %s90, 1
          %s1062 = scalar_lea.sflag [#allocation6], %s1061
          %s1063 = sand.u32 %s126, 1
          %s1064 = smul.addr %s1063, 8
          %s1065 = scalar_lea.vmem [#allocation5], %s1064
          %s1067 = ssub.s32 128, 128
          %1068 = vsyncadd %s1062, %s1067
          %s1069 = smul.addr %s90, 128
          %s1070 = scalar_lea.hbm %s3, %s1069
          %s1072 = sshll.u32 %s1065, 4
          %s1073 = int_to_ptr.vmem [resolvable:$true] %s1072
          %1075 = dma.hbm_to_vmem [thread:$0]  %s1070, 128, %s1073, %s1062
        $region128: #{tpu_custom_call.1} parent=119 // pred_fallthru
          _
      $region120: #{tpu_custom_call.1} parent=5 // pred_fallthru
        _
      %p1076 = scmp.le.s32.totalorder 1, %s90
      %p1077 = scmp.lt.s32.totalorder %s90, 3
      %p1078 = pnand %p1076, %p1077
      %p1079 = pneg %p1078
      // Predicated region
      $region129: #{tpu_custom_call.1} parent=5 // pred_check
        _
      $region130: #{tpu_custom_call.1} parent=5 // pred_check_branch
        %1081 = sbr.rel (%p1078) target = $region132
      $region131: #{tpu_custom_call.1} parent=5 // pred_region
        %s1082 = ssub.s32 %s90, 1
        %s1083 = sand.u32 %s103, 1
        %s1084 = scalar_lea.sflag [#allocation3], %s1083
        %s1085 = sand.u32 %s103, 1
        %s1086 = smul.addr %s1085, 16
        %s1087 = scalar_lea.vmem [#allocation2], %s1086
        // Predicated region
        $region133: #{tpu_custom_call.1} parent=131 // pred_check
          %p1088 = pneg %p116
        $region134: #{tpu_custom_call.1} parent=131 // pred_check_branch
          %1090 = sbr.rel (%p1088) target = $region136
        $region135: #{tpu_custom_call.1} parent=131 // pred_region
          %1091 = dma.done %s1084, 256
        $region136: #{tpu_custom_call.1} parent=131 // pred_fallthru
          _
        %s1092 = sand.u32 %s95, 1
        %s1093 = scalar_lea.sflag [#allocation6], %s1092
        %s1094 = sand.u32 %s129, 1
        %s1095 = smul.addr %s1094, 8
        %s1096 = scalar_lea.vmem [#allocation5], %s1095
        // Predicated region
        $region137: #{tpu_custom_call.1} parent=131 // pred_check
          %p1097 = pneg %p142
        $region138: #{tpu_custom_call.1} parent=131 // pred_check_branch
          %1099 = sbr.rel (%p1097) target = $region140
        $region139: #{tpu_custom_call.1} parent=131 // pred_region
          %1100 = dma.done %s1093, 128
        $region140: #{tpu_custom_call.1} parent=131 // pred_fallthru
          _
        // Predicated region
        $region141: #{tpu_custom_call.1} parent=131 // pred_check
          %p1101 = pneg %p163
        $region142: #{tpu_custom_call.1} parent=131 // pred_check_branch
          %1103 = sbr.rel (%p1101) target = $region144
        $region143: #{tpu_custom_call.1} parent=131 // pred_region
          %1104 = dma.done [#allocation6], 32
        $region144: #{tpu_custom_call.1} parent=131 // pred_fallthru
          _
        // Predicated region
        $region145: #{tpu_custom_call.1} parent=131 // pred_check
          %p1105 = pneg %p184
        $region146: #{tpu_custom_call.1} parent=131 // pred_check_branch
          %1107 = sbr.rel (%p1105) target = $region148
        $region147: #{tpu_custom_call.1} parent=131 // pred_region
          %1108 = dma.done [#allocation9], 32
        $region148: #{tpu_custom_call.1} parent=131 // pred_fallthru
          _
        // Predicated region
        $region149: #{tpu_custom_call.1} parent=131 // pred_check
          %p1109 = pneg %p226
        $region150: #{tpu_custom_call.1} parent=131 // pred_check_branch
          %1111 = sbr.rel (%p1109) target = $region152
        $region151: #{tpu_custom_call.1} parent=131 // pred_region
          %1112 = dma.done [#allocation9], 16
        $region152: #{tpu_custom_call.1} parent=131 // pred_fallthru
          _
        // Predicated region
        $region153: #{tpu_custom_call.1} parent=131 // pred_check
          %p1113 = pneg %p247
        $region154: #{tpu_custom_call.1} parent=131 // pred_check_branch
          %1115 = sbr.rel (%p1113) target = $region156
        $region155: #{tpu_custom_call.1} parent=131 // pred_region
          %1116 = dma.done [#allocation12], 1024
        $region156: #{tpu_custom_call.1} parent=131 // pred_fallthru
          _
        // Predicated region
        $region157: #{tpu_custom_call.1} parent=131 // pred_check
          %p1117 = pneg %p268
        $region158: #{tpu_custom_call.1} parent=131 // pred_check_branch
          %1119 = sbr.rel (%p1117) target = $region160
        $region159: #{tpu_custom_call.1} parent=131 // pred_region
          %1120 = dma.done [#allocation12], 16
        $region160: #{tpu_custom_call.1} parent=131 // pred_fallthru
          _
        // Predicated region
        $region161: #{tpu_custom_call.1} parent=131 // pred_check
          %p1121 = pneg %p289
        $region162: #{tpu_custom_call.1} parent=131 // pred_check_branch
          %1123 = sbr.rel (%p1121) target = $region164
        $region163: #{tpu_custom_call.1} parent=131 // pred_region
          %1124 = dma.done [#allocation15], 1024
        $region164: #{tpu_custom_call.1} parent=131 // pred_fallthru
          _
        // Predicated region
        $region165: #{tpu_custom_call.1} parent=131 // pred_check
          %p1125 = pneg %p310
        $region166: #{tpu_custom_call.1} parent=131 // pred_check_branch
          %1127 = sbr.rel (%p1125) target = $region168
        $region167: #{tpu_custom_call.1} parent=131 // pred_region
          %1128 = dma.done [#allocation15], 16
        $region168: #{tpu_custom_call.1} parent=131 // pred_fallthru
          _
        // Predicated region
        $region169: #{tpu_custom_call.1} parent=131 // pred_check
          %p1129 = pneg %p331
        $region170: #{tpu_custom_call.1} parent=131 // pred_check_branch
          %1131 = sbr.rel (%p1129) target = $region172
        $region171: #{tpu_custom_call.1} parent=131 // pred_region
          %1132 = dma.done [#allocation18], 512
        $region172: #{tpu_custom_call.1} parent=131 // pred_fallthru
          _
        // Predicated region
        $region173: #{tpu_custom_call.1} parent=131 // pred_check
          %p1133 = pneg %p352
        $region174: #{tpu_custom_call.1} parent=131 // pred_check_branch
          %1135 = sbr.rel (%p1133) target = $region176
        $region175: #{tpu_custom_call.1} parent=131 // pred_region
          %1136 = dma.done [#allocation18], 16
        $region176: #{tpu_custom_call.1} parent=131 // pred_fallthru
          _
        // Predicated region
        $region177: #{tpu_custom_call.1} parent=131 // pred_check
          %p1137 = pneg %p373
        $region178: #{tpu_custom_call.1} parent=131 // pred_check_branch
          %1139 = sbr.rel (%p1137) target = $region180
        $region179: #{tpu_custom_call.1} parent=131 // pred_region
          %1140 = dma.done [#allocation21], 1024
        $region180: #{tpu_custom_call.1} parent=131 // pred_fallthru
          _
        // Predicated region
        $region181: #{tpu_custom_call.1} parent=131 // pred_check
          %p1141 = pneg %p394
        $region182: #{tpu_custom_call.1} parent=131 // pred_check_branch
          %1143 = sbr.rel (%p1141) target = $region184
        $region183: #{tpu_custom_call.1} parent=131 // pred_region
          %1144 = dma.done [#allocation21], 16
        $region184: #{tpu_custom_call.1} parent=131 // pred_fallthru
          _
        // Predicated region
        $region185: #{tpu_custom_call.1} parent=131 // pred_check
          %p1145 = pneg %p415
        $region186: #{tpu_custom_call.1} parent=131 // pred_check_branch
          %1147 = sbr.rel (%p1145) target = $region188
        $region187: #{tpu_custom_call.1} parent=131 // pred_region
          %1148 = dma.done [#allocation24], 2048
        $region188: #{tpu_custom_call.1} parent=131 // pred_fallthru
          _
        // Predicated region
        $region189: #{tpu_custom_call.1} parent=131 // pred_check
          %p1149 = pneg %p436
        $region190: #{tpu_custom_call.1} parent=131 // pred_check_branch
          %1151 = sbr.rel (%p1149) target = $region192
        $region191: #{tpu_custom_call.1} parent=131 // pred_region
          %1152 = dma.done [#allocation24], 32
        $region192: #{tpu_custom_call.1} parent=131 // pred_fallthru
          _
        // Predicated region
        $region193: #{tpu_custom_call.1} parent=131 // pred_check
          %p1153 = pneg %p457
        $region194: #{tpu_custom_call.1} parent=131 // pred_check_branch
          %1155 = sbr.rel (%p1153) target = $region196
        $region195: #{tpu_custom_call.1} parent=131 // pred_region
          %1156 = dma.done [#allocation27], 2048
        $region196: #{tpu_custom_call.1} parent=131 // pred_fallthru
          _
        // Predicated region
        $region197: #{tpu_custom_call.1} parent=131 // pred_check
          %p1157 = pneg %p478
        $region198: #{tpu_custom_call.1} parent=131 // pred_check_branch
          %1159 = sbr.rel (%p1157) target = $region200
        $region199: #{tpu_custom_call.1} parent=131 // pred_region
          %1160 = dma.done [#allocation27], 16
        $region200: #{tpu_custom_call.1} parent=131 // pred_fallthru
          _
        // Predicated region
        $region201: #{tpu_custom_call.1} parent=131 // pred_check
          %p1161 = pneg %p520
        $region202: #{tpu_custom_call.1} parent=131 // pred_check_branch
          %1163 = sbr.rel (%p1161) target = $region204
        $region203: #{tpu_custom_call.1} parent=131 // pred_region
          %1164 = dma.done [#allocation30], 16
        $region204: #{tpu_custom_call.1} parent=131 // pred_fallthru
          _
        // Predicated region
        $region205: #{tpu_custom_call.1} parent=131 // pred_check
          %p1165 = pneg %p625
        $region206: #{tpu_custom_call.1} parent=131 // pred_check_branch
          %1167 = sbr.rel (%p1165) target = $region208
        $region207: #{tpu_custom_call.1} parent=131 // pred_region
          %1168 = dma.done [#allocation30], 1024
        $region208: #{tpu_custom_call.1} parent=131 // pred_fallthru
          _
        %s1169 = sand.u32 %s103, 1
        %s1170 = scalar_lea.sflag [#allocation3], %s1169
        %s1171 = sand.u32 %s103, 1
        %s1172 = smul.addr %s1171, 16
        %s1173 = scalar_lea.vmem [#allocation2], %s1172
        %p1174 = pneg %p116
        %p1175 = pneg %p113
        %s1176 = sand.u32 %s95, 1
        %s1177 = scalar_lea.sflag [#allocation6], %s1176
        %s1178 = sand.u32 %s129, 1
        %s1179 = smul.addr %s1178, 8
        %s1180 = scalar_lea.vmem [#allocation5], %s1179
        %p1181 = pneg %p142
        %p1182 = pneg %p139
        %p1183 = pneg %p163
        %p1184 = pneg %p160
        %p1185 = pneg %p184
        %p1186 = pneg %p181
        %p1187 = pneg %p205
        %p1188 = pneg %p202
        %p1189 = pneg %p226
        %p1190 = pneg %p223
        %p1191 = pneg %p247
        %p1192 = pneg %p244
        %p1193 = pneg %p268
        %p1194 = pneg %p265
        %p1195 = pneg %p289
        %p1196 = pneg %p286
        %p1197 = pneg %p310
        %p1198 = pneg %p307
        %p1199 = pneg %p331
        %p1200 = pneg %p328
        %p1201 = pneg %p352
        %p1202 = pneg %p349
        %p1203 = pneg %p373
        %p1204 = pneg %p370
        %p1205 = pneg %p394
        %p1206 = pneg %p391
        %p1207 = pneg %p415
        %p1208 = pneg %p412
        %p1209 = pneg %p436
        %p1210 = pneg %p433
        %p1211 = pneg %p457
        %p1212 = pneg %p454
        %p1213 = pneg %p478
        %p1214 = pneg %p475
        %p1215 = pneg %p499
        %p1216 = pneg %p496
        %p1217 = pneg %p520
        %p1218 = pneg %p517
        %p1219 = pneg %p541
        %p1220 = pneg %p538
        %p1221 = pneg %p562
        %p1222 = pneg %p559
        %p1223 = pneg %p583
        %p1224 = pneg %p580
        %p1225 = pneg %p604
        %p1226 = pneg %p601
        %p1227 = pneg %p625
        %p1228 = pneg %p622
        %p1229 = pneg %p646
        %p1230 = pneg %p643
        %p1231 = pneg %p667
        %p1232 = pneg %p664
        %p1233 = pneg %p688
        %p1234 = pneg %p685
        %p1235 = pneg %p714
        %p1236 = pneg %p711
        %s1237 = sand.u32 %s701, 1
        %s1238 = scalar_lea.sflag [#allocation4], %s1237
        %s1239 = sand.u32 %s701, 1
        %s1240 = smul.addr %s1239, 16
        %s1241 = scalar_lea.vmem [#allocation32], %s1240
        %p1242 = pneg %p740
        %p1243 = pneg %p737
        %s1244 = sand.u32 %s95, 1
        %s1245 = scalar_lea.sflag [#allocation34], %s1244
        %s1246 = sand.u32 %s727, 1
        %s1247 = smul.addr %s1246, 16
        %s1248 = scalar_lea.vmem [#allocation33], %s1247
        %p1249 = pneg %p766
        %p1250 = pneg %p763
        %s1251 = sand.u32 %s95, 1
        %s1252 = scalar_lea.sflag [#allocation34], %s1251
        %s1253 = sand.u32 %s753, 1
        %s1254 = smul.addr %s1253, 8
        %s1255 = scalar_lea.vmem [#allocation35], %s1254
        %p1256 = pneg %p792
        %p1257 = pneg %p789
        %p1258 = scmp.lt.s32.totalorder %s95, 1
        %s1259 = scalar_select %p1258, %s95, 1
        %s1260 = smul.addr %s1259, 8
        %s1261 = scalar_lea.vmem %s63, %s1260
        %p1262 = scmp.lt.s32.totalorder %s95, 1
        %s1263 = scalar_select %p1262, %s95, 1
        %s1264 = smul.addr %s1263, 8
        %s1265 = scalar_lea.vmem %s63, %s1264
        %v1267 = vld [vmem:[%s1087] sm:$0xff]
        %v1268 = vld [vmem:[%s1087 + $0x8] sm:$0xff]
        %v1269 = vld [vmem:[%s1096] sm:$0xff]
        %v1270 = vld [vmem:[%s9] sm:$0xf]
        %v1271 = vld [vmem:[%s9 + $0x4] sm:$0xf]
        %v1272 = vld [vmem:[%s9 + $0x8] sm:$0xf]
        %v1273 = vld [vmem:[%s9 + $0xc] sm:$0xf]
        %v1274 = vld [vmem:[%s9 + $0x10] sm:$0xf]
        %v1275 = vld [vmem:[%s9 + $0x14] sm:$0xf]
        %v1276 = vld [vmem:[%s9 + $0x18] sm:$0xf]
        %v1277 = vld [vmem:[%s9 + $0x1c] sm:$0xf]
        %v1278 = vld [vmem:[%s9 + $0x20] sm:$0xf]
        %v1279 = vld [vmem:[%s9 + $0x24] sm:$0xf]
        %v1280 = vld [vmem:[%s9 + $0x28] sm:$0xf]
        %v1281 = vld [vmem:[%s9 + $0x2c] sm:$0xf]
        %v1282 = vld [vmem:[%s9 + $0x30] sm:$0xf]
        %v1283 = vld [vmem:[%s9 + $0x34] sm:$0xf]
        %v1284 = vld [vmem:[%s9 + $0x38] sm:$0xf]
        %v1285 = vld [vmem:[%s9 + $0x3c] sm:$0xf]
        %v1286 = vld [vmem:[%s9 + $0x40] sm:$0xf]
        %v1287 = vld [vmem:[%s9 + $0x44] sm:$0xf]
        %v1288 = vld [vmem:[%s9 + $0x48] sm:$0xf]
        %v1289 = vld [vmem:[%s9 + $0x4c] sm:$0xf]
        %v1290 = vld [vmem:[%s9 + $0x50] sm:$0xf]
        %v1291 = vld [vmem:[%s9 + $0x54] sm:$0xf]
        %v1292 = vld [vmem:[%s9 + $0x58] sm:$0xf]
        %v1293 = vld [vmem:[%s9 + $0x5c] sm:$0xf]
        %v1294 = vld [vmem:[%s9 + $0x60] sm:$0xf]
        %v1295 = vld [vmem:[%s9 + $0x64] sm:$0xf]
        %v1296 = vld [vmem:[%s9 + $0x68] sm:$0xf]
        %v1297 = vld [vmem:[%s9 + $0x6c] sm:$0xf]
        %v1298 = vld [vmem:[%s9 + $0x70] sm:$0xf]
        %v1299 = vld [vmem:[%s9 + $0x74] sm:$0xf]
        %v1300 = vld [vmem:[%s9 + $0x78] sm:$0xf]
        %v1301 = vld [vmem:[%s9 + $0x7c] sm:$0xf]
        %v1302 = vpack.c.bf16 %v1267, %v1267
        %v1303 = vpack.c.bf16 %v1268, %v1268
        %v1304 = vld [vmem:[#allocation10] sm:$0x1]
        %v1306 = vlaneseq
        %v1307 = vshrl.u32 %v1306, 7
        %v1308 = vsub.s32 0, %v1307
        %v1309 = vrot.slane %v1304, %v1308
        %v1343 = vunpack.c.l.b16 %v1270
        %v1344 = vunpack.c.l.b16 %v1271
        %v1345 = vunpack.c.l.b16 %v1272
        %v1346 = vunpack.c.l.b16 %v1273
        %v1347 = vunpack.c.l.b16 %v1274
        %v1348 = vunpack.c.l.b16 %v1275
        %v1349 = vunpack.c.l.b16 %v1276
        %v1350 = vunpack.c.l.b16 %v1277
        %v1351 = vunpack.c.l.b16 %v1278
        %v1352 = vunpack.c.l.b16 %v1279
        %v1353 = vunpack.c.l.b16 %v1280
        %v1354 = vunpack.c.l.b16 %v1281
        %v1355 = vunpack.c.l.b16 %v1282
        %v1356 = vunpack.c.l.b16 %v1283
        %v1357 = vunpack.c.l.b16 %v1284
        %v1358 = vunpack.c.l.b16 %v1285
        %v1359 = vunpack.c.l.b16 %v1286
        %v1360 = vunpack.c.l.b16 %v1287
        %v1361 = vunpack.c.l.b16 %v1288
        %v1362 = vunpack.c.l.b16 %v1289
        %v1363 = vunpack.c.l.b16 %v1290
        %v1364 = vunpack.c.l.b16 %v1291
        %v1365 = vunpack.c.l.b16 %v1292
        %v1366 = vunpack.c.l.b16 %v1293
        %v1367 = vunpack.c.l.b16 %v1294
        %v1368 = vunpack.c.l.b16 %v1295
        %v1369 = vunpack.c.l.b16 %v1296
        %v1370 = vunpack.c.l.b16 %v1297
        %v1371 = vunpack.c.l.b16 %v1298
        %v1372 = vunpack.c.l.b16 %v1299
        %v1373 = vunpack.c.l.b16 %v1300
        %v1374 = vunpack.c.l.b16 %v1301
        %v1375 = vpack.c.b16 %v1344, %v1343
        %v1376 = vpack.c.b16 %v1346, %v1345
        %v1377 = vpack.c.b16 %v1348, %v1347
        %v1378 = vpack.c.b16 %v1350, %v1349
        %v1379 = vpack.c.b16 %v1352, %v1351
        %v1380 = vpack.c.b16 %v1354, %v1353
        %v1381 = vpack.c.b16 %v1356, %v1355
        %v1382 = vpack.c.b16 %v1358, %v1357
        %v1383 = vpack.c.b16 %v1360, %v1359
        %v1384 = vpack.c.b16 %v1362, %v1361
        %v1385 = vpack.c.b16 %v1364, %v1363
        %v1386 = vpack.c.b16 %v1366, %v1365
        %v1387 = vpack.c.b16 %v1368, %v1367
        %v1388 = vpack.c.b16 %v1370, %v1369
        %v1389 = vpack.c.b16 %v1372, %v1371
        %v1390 = vpack.c.b16 %v1374, %v1373
        %1407 = vmatprep.subr.bf16.mxu0 0
        %1408 = vmatpush1.bf16.msra.mxu0 %v1382
        %1409 = vmatprep.subr.bf16.mxu0 0
        %1410 = vmatpush1.bf16.msra.mxu0 %v1381
        %1411 = vmatprep.subr.bf16.mxu0 0
        %1412 = vmatpush1.bf16.msra.mxu0 %v1380
        %1413 = vmatprep.subr.bf16.mxu0 0
        %1414 = vmatpush1.bf16.msra.mxu0 %v1379
        %1415 = vmatprep.subr.bf16.mxu0 0
        %1416 = vmatpush1.bf16.msra.mxu0 %v1378
        %1417 = vmatprep.subr.bf16.mxu0 0
        %1418 = vmatpush1.bf16.msra.mxu0 %v1377
        %1419 = vmatprep.subr.bf16.mxu0 0
        %1420 = vmatpush1.bf16.msra.mxu0 %v1376
        %1421 = vmatprep.subr.bf16.mxu0 0
        %1422 = vmatpush1.bf16.msra.mxu0 %v1375
        %1423 = vmatprep.subr.bf16.mxu0 0
        %1424 = vmatpush2.bf16.msra.mxu0 %v1390
        %1425 = vmatprep.subr.bf16.mxu0 0
        %1426 = vmatpush2.bf16.msra.mxu0 %v1389
        %1427 = vmatprep.subr.bf16.mxu0 0
        %1428 = vmatpush2.bf16.msra.mxu0 %v1388
        %1429 = vmatprep.subr.bf16.mxu0 0
        %1430 = vmatpush2.bf16.msra.mxu0 %v1387
        %1431 = vmatprep.subr.bf16.mxu0 0
        %1432 = vmatpush2.bf16.msra.mxu0 %v1386
        %1433 = vmatprep.subr.bf16.mxu0 0
        %1434 = vmatpush2.bf16.msra.mxu0 %v1385
        %1435 = vmatprep.subr.bf16.mxu0 0
        %1436 = vmatpush2.bf16.msra.mxu0 %v1384
        %1437 = vmatprep.subr.bf16.mxu0 0
        %1438 = vmatpush2.bf16.msra.mxu0 %v1383
        %1439 = vmatprep.mubr.bf16.mxu0 %v1303
        %1440 = vmatmul.mubr.bf16.gmra.mxu0 %v1302
        %v1441 = vpop.f32.mrf.mxu0
        %v1442 = vadd.f32 %v1309, %v1441
        %v1443 = vpop.f32.mrf.mxu0
        %v1444 = vpop.f32.mrf.mxu0
        %v1445 = vpop.f32.mrf.mxu0
        %1446 = vdwg.mxu0
        %vm1447 = vcmp.ge.f32.partialorder %v1442, 0.0
        %v1448 = vmul.f32 %v1442, 0.01
        %v1449 = vsel %vm1447, %v1442, %v1448
        %v1450 = vld [vmem:[#allocation11] sm:$0xf]
        %v1451 = vld [vmem:[#allocation11 + $0x4] sm:$0xf]
        %v1452 = vld [vmem:[#allocation11 + $0x8] sm:$0xf]
        %v1453 = vld [vmem:[#allocation11 + $0xc] sm:$0xf]
        %v1454 = vld [vmem:[#allocation11 + $0x10] sm:$0xf]
        %v1455 = vld [vmem:[#allocation11 + $0x14] sm:$0xf]
        %v1456 = vld [vmem:[#allocation11 + $0x18] sm:$0xf]
        %v1457 = vld [vmem:[#allocation11 + $0x1c] sm:$0xf]
        %v1458 = vld [vmem:[#allocation11 + $0x20] sm:$0xf]
        %v1459 = vld [vmem:[#allocation11 + $0x24] sm:$0xf]
        %v1460 = vld [vmem:[#allocation11 + $0x28] sm:$0xf]
        %v1461 = vld [vmem:[#allocation11 + $0x2c] sm:$0xf]
        %v1462 = vld [vmem:[#allocation11 + $0x30] sm:$0xf]
        %v1463 = vld [vmem:[#allocation11 + $0x34] sm:$0xf]
        %v1464 = vld [vmem:[#allocation11 + $0x38] sm:$0xf]
        %v1465 = vld [vmem:[#allocation11 + $0x3c] sm:$0xf]
        %v1466 = vpack.c.bf16 %v1449, %v1449
        %v1467 = vld [vmem:[#allocation13] sm:$0x1]
        %v1469 = vlaneseq
        %v1470 = vshrl.u32 %v1469, 7
        %v1471 = vsub.s32 0, %v1470
        %v1472 = vrot.slane %v1467, %v1471
        %v1490 = vunpack.c.l.b16 %v1450
        %v1491 = vunpack.c.l.b16 %v1451
        %v1492 = vunpack.c.l.b16 %v1452
        %v1493 = vunpack.c.l.b16 %v1453
        %v1494 = vunpack.c.l.b16 %v1454
        %v1495 = vunpack.c.l.b16 %v1455
        %v1496 = vunpack.c.l.b16 %v1456
        %v1497 = vunpack.c.l.b16 %v1457
        %v1498 = vunpack.c.l.b16 %v1458
        %v1499 = vunpack.c.l.b16 %v1459
        %v1500 = vunpack.c.l.b16 %v1460
        %v1501 = vunpack.c.l.b16 %v1461
        %v1502 = vunpack.c.l.b16 %v1462
        %v1503 = vunpack.c.l.b16 %v1463
        %v1504 = vunpack.c.l.b16 %v1464
        %v1505 = vunpack.c.l.b16 %v1465
        %v1506 = vpack.c.b16 %v1491, %v1490
        %v1507 = vpack.c.b16 %v1493, %v1492
        %v1508 = vpack.c.b16 %v1495, %v1494
        %v1509 = vpack.c.b16 %v1497, %v1496
        %v1510 = vpack.c.b16 %v1499, %v1498
        %v1511 = vpack.c.b16 %v1501, %v1500
        %v1512 = vpack.c.b16 %v1503, %v1502
        %v1513 = vpack.c.b16 %v1505, %v1504
        %1522 = vmatprep.subr.bf16.mxu0 0
        %1523 = vmatpush1.bf16.msra.mxu0 %v1513
        %1524 = vmatprep.subr.bf16.mxu0 0
        %1525 = vmatpush1.bf16.msra.mxu0 %v1512
        %1526 = vmatprep.subr.bf16.mxu0 0
        %1527 = vmatpush1.bf16.msra.mxu0 %v1511
        %1528 = vmatprep.subr.bf16.mxu0 0
        %1529 = vmatpush1.bf16.msra.mxu0 %v1510
        %1530 = vmatprep.subr.bf16.mxu0 0
        %1531 = vmatpush1.bf16.msra.mxu0 %v1509
        %1532 = vmatprep.subr.bf16.mxu0 0
        %1533 = vmatpush1.bf16.msra.mxu0 %v1508
        %1534 = vmatprep.subr.bf16.mxu0 0
        %1535 = vmatpush1.bf16.msra.mxu0 %v1507
        %1536 = vmatprep.subr.bf16.mxu0 0
        %1537 = vmatpush1.bf16.msra.mxu0 %v1506
        %1538 = vmatprep.subr.bf16.mxu0 0
        %1539 = vmatpush2.bf16.msra.mxu0 0
        %1540 = vmatprep.subr.bf16.mxu0 0
        %1541 = vmatpush2.bf16.msra.mxu0 0
        %1542 = vmatprep.subr.bf16.mxu0 0
        %1543 = vmatpush2.bf16.msra.mxu0 0
        %1544 = vmatprep.subr.bf16.mxu0 0
        %1545 = vmatpush2.bf16.msra.mxu0 0
        %1546 = vmatprep.subr.bf16.mxu0 0
        %1547 = vmatpush2.bf16.msra.mxu0 0
        %1548 = vmatprep.subr.bf16.mxu0 0
        %1549 = vmatpush2.bf16.msra.mxu0 0
        %1550 = vmatprep.subr.bf16.mxu0 0
        %1551 = vmatpush2.bf16.msra.mxu0 0
        %1552 = vmatprep.subr.bf16.mxu0 0
        %1553 = vmatpush2.bf16.msra.mxu0 0
        %1554 = vmatprep.mubr.bf16.mxu0 0
        %1555 = vmatmul.mubr.bf16.gmra.mxu0 %v1466
        %v1556 = vpop.f32.mrf.mxu0
        %v1557 = vadd.f32 %v1472, %v1556
        %v1558 = vpop.f32.mrf.mxu0
        %v1559 = vpop.f32.mrf.mxu0
        %v1560 = vpop.f32.mrf.mxu0
        %1561 = vdwg.mxu0
        %vm1562 = vcmp.ge.f32.partialorder %v1557, 0.0
        %v1563 = vmul.f32 %v1557, 0.01
        %v1564 = vsel %vm1562, %v1557, %v1563
        %v1565 = vld [vmem:[#allocation14] sm:$0xf]
        %v1566 = vld [vmem:[#allocation14 + $0x4] sm:$0xf]
        %v1567 = vld [vmem:[#allocation14 + $0x8] sm:$0xf]
        %v1568 = vld [vmem:[#allocation14 + $0xc] sm:$0xf]
        %v1569 = vld [vmem:[#allocation14 + $0x10] sm:$0xf]
        %v1570 = vld [vmem:[#allocation14 + $0x14] sm:$0xf]
        %v1571 = vld [vmem:[#allocation14 + $0x18] sm:$0xf]
        %v1572 = vld [vmem:[#allocation14 + $0x1c] sm:$0xf]
        %v1573 = vld [vmem:[#allocation14 + $0x20] sm:$0xf]
        %v1574 = vld [vmem:[#allocation14 + $0x24] sm:$0xf]
        %v1575 = vld [vmem:[#allocation14 + $0x28] sm:$0xf]
        %v1576 = vld [vmem:[#allocation14 + $0x2c] sm:$0xf]
        %v1577 = vld [vmem:[#allocation14 + $0x30] sm:$0xf]
        %v1578 = vld [vmem:[#allocation14 + $0x34] sm:$0xf]
        %v1579 = vld [vmem:[#allocation14 + $0x38] sm:$0xf]
        %v1580 = vld [vmem:[#allocation14 + $0x3c] sm:$0xf]
        %v1581 = vpack.c.bf16 %v1564, %v1564
        %v1582 = vld [vmem:[#allocation16] sm:$0x1]
        %v1584 = vlaneseq
        %v1585 = vshrl.u32 %v1584, 7
        %v1586 = vsub.s32 0, %v1585
        %v1587 = vrot.slane %v1582, %v1586
        %v1605 = vunpack.c.l.b16 %v1565
        %v1606 = vunpack.c.l.b16 %v1566
        %v1607 = vunpack.c.l.b16 %v1567
        %v1608 = vunpack.c.l.b16 %v1568
        %v1609 = vunpack.c.l.b16 %v1569
        %v1610 = vunpack.c.l.b16 %v1570
        %v1611 = vunpack.c.l.b16 %v1571
        %v1612 = vunpack.c.l.b16 %v1572
        %v1613 = vunpack.c.l.b16 %v1573
        %v1614 = vunpack.c.l.b16 %v1574
        %v1615 = vunpack.c.l.b16 %v1575
        %v1616 = vunpack.c.l.b16 %v1576
        %v1617 = vunpack.c.l.b16 %v1577
        %v1618 = vunpack.c.l.b16 %v1578
        %v1619 = vunpack.c.l.b16 %v1579
        %v1620 = vunpack.c.l.b16 %v1580
        %v1621 = vpack.c.b16 %v1606, %v1605
        %v1622 = vpack.c.b16 %v1608, %v1607
        %v1623 = vpack.c.b16 %v1610, %v1609
        %v1624 = vpack.c.b16 %v1612, %v1611
        %v1625 = vpack.c.b16 %v1614, %v1613
        %v1626 = vpack.c.b16 %v1616, %v1615
        %v1627 = vpack.c.b16 %v1618, %v1617
        %v1628 = vpack.c.b16 %v1620, %v1619
        %1637 = vmatprep.subr.bf16.mxu0 0
        %1638 = vmatpush1.bf16.msra.mxu0 %v1628
        %1639 = vmatprep.subr.bf16.mxu0 0
        %1640 = vmatpush1.bf16.msra.mxu0 %v1627
        %1641 = vmatprep.subr.bf16.mxu0 0
        %1642 = vmatpush1.bf16.msra.mxu0 %v1626
        %1643 = vmatprep.subr.bf16.mxu0 0
        %1644 = vmatpush1.bf16.msra.mxu0 %v1625
        %1645 = vmatprep.subr.bf16.mxu0 0
        %1646 = vmatpush1.bf16.msra.mxu0 %v1624
        %1647 = vmatprep.subr.bf16.mxu0 0
        %1648 = vmatpush1.bf16.msra.mxu0 %v1623
        %1649 = vmatprep.subr.bf16.mxu0 0
        %1650 = vmatpush1.bf16.msra.mxu0 %v1622
        %1651 = vmatprep.subr.bf16.mxu0 0
        %1652 = vmatpush1.bf16.msra.mxu0 %v1621
        %1653 = vmatprep.subr.bf16.mxu0 0
        %1654 = vmatpush2.bf16.msra.mxu0 0
        %1655 = vmatprep.subr.bf16.mxu0 0
        %1656 = vmatpush2.bf16.msra.mxu0 0
        %1657 = vmatprep.subr.bf16.mxu0 0
        %1658 = vmatpush2.bf16.msra.mxu0 0
        %1659 = vmatprep.subr.bf16.mxu0 0
        %1660 = vmatpush2.bf16.msra.mxu0 0
        %1661 = vmatprep.subr.bf16.mxu0 0
        %1662 = vmatpush2.bf16.msra.mxu0 0
        %1663 = vmatprep.subr.bf16.mxu0 0
        %1664 = vmatpush2.bf16.msra.mxu0 0
        %1665 = vmatprep.subr.bf16.mxu0 0
        %1666 = vmatpush2.bf16.msra.mxu0 0
        %1667 = vmatprep.subr.bf16.mxu0 0
        %1668 = vmatpush2.bf16.msra.mxu0 0
        %1669 = vmatprep.mubr.bf16.mxu0 0
        %1670 = vmatmul.mubr.bf16.gmra.mxu0 %v1581
        %v1671 = vpop.f32.mrf.mxu0
        %v1672 = vadd.f32 %v1587, %v1671
        %v1673 = vpop.f32.mrf.mxu0
        %v1674 = vpop.f32.mrf.mxu0
        %v1675 = vpop.f32.mrf.mxu0
        %1676 = vdwg.mxu0
        %v1677 = vmul.f32 %v1672, 0.5
        %v1678 = vmul.f32 %v1677, 1.442695
        %v1679 = vpow.pop %v1678
        %1681 = vrot.lane.b32.xlu0 %v1269, 64
        %v1682 = vpop.permute.xlu0 %1681
        %v1684 = vmul.f32 %v1679, %v1682
        %1686 = vrot.lane.b32.xlu0 %v1684, 64
        %v1687 = vpop.permute.xlu0 %1686
        %v1689 = vadd.f32 %v1672, %v1687
        %v1690 = vld [vmem:[#allocation17] sm:$0xf]
        %v1691 = vld [vmem:[#allocation17 + $0x4] sm:$0xf]
        %v1692 = vld [vmem:[#allocation17 + $0x8] sm:$0xf]
        %v1693 = vld [vmem:[#allocation17 + $0xc] sm:$0xf]
        %v1694 = vld [vmem:[#allocation17 + $0x10] sm:$0xf]
        %v1695 = vld [vmem:[#allocation17 + $0x14] sm:$0xf]
        %v1696 = vld [vmem:[#allocation17 + $0x18] sm:$0xf]
        %v1697 = vld [vmem:[#allocation17 + $0x1c] sm:$0xf]
        %v1698 = vpack.c.bf16 %v1689, %v1689
        %v1699 = vld [vmem:[#allocation19] sm:$0x1]
        %v1701 = vlaneseq
        %v1702 = vshrl.u32 %v1701, 7
        %v1703 = vsub.s32 0, %v1702
        %v1704 = vrot.slane %v1699, %v1703
        %v1714 = vunpack.c.l.b16 %v1690
        %v1715 = vunpack.c.l.b16 %v1691
        %v1716 = vunpack.c.l.b16 %v1692
        %v1717 = vunpack.c.l.b16 %v1693
        %v1718 = vunpack.c.l.b16 %v1694
        %v1719 = vunpack.c.l.b16 %v1695
        %v1720 = vunpack.c.l.b16 %v1696
        %v1721 = vunpack.c.l.b16 %v1697
        %v1722 = vpack.c.b16 %v1715, %v1714
        %v1723 = vpack.c.b16 %v1717, %v1716
        %v1724 = vpack.c.b16 %v1719, %v1718
        %v1725 = vpack.c.b16 %v1721, %v1720
        %vm1730 = vcmask 523264
        %v1732 = vsel %vm1730, %v1698, 0
        %1734 = vmatprep.subr.bf16.mxu0 0
        %1735 = vmatpush1.bf16.msra.mxu0 0
        %1736 = vmatprep.subr.bf16.mxu0 0
        %1737 = vmatpush1.bf16.msra.mxu0 0
        %1738 = vmatprep.subr.bf16.mxu0 0
        %1739 = vmatpush1.bf16.msra.mxu0 0
        %1740 = vmatprep.subr.bf16.mxu0 0
        %1741 = vmatpush1.bf16.msra.mxu0 0
        %1742 = vmatprep.subr.bf16.mxu0 0
        %1743 = vmatpush1.bf16.msra.mxu0 %v1725
        %1744 = vmatprep.subr.bf16.mxu0 0
        %1745 = vmatpush1.bf16.msra.mxu0 %v1724
        %1746 = vmatprep.subr.bf16.mxu0 0
        %1747 = vmatpush1.bf16.msra.mxu0 %v1723
        %1748 = vmatprep.subr.bf16.mxu0 0
        %1749 = vmatpush1.bf16.msra.mxu0 %v1722
        %1750 = vmatprep.subr.bf16.mxu0 0
        %1751 = vmatpush2.bf16.msra.mxu0 0
        %1752 = vmatprep.subr.bf16.mxu0 0
        %1753 = vmatpush2.bf16.msra.mxu0 0
        %1754 = vmatprep.subr.bf16.mxu0 0
        %1755 = vmatpush2.bf16.msra.mxu0 0
        %1756 = vmatprep.subr.bf16.mxu0 0
        %1757 = vmatpush2.bf16.msra.mxu0 0
        %1758 = vmatprep.subr.bf16.mxu0 0
        %1759 = vmatpush2.bf16.msra.mxu0 0
        %1760 = vmatprep.subr.bf16.mxu0 0
        %1761 = vmatpush2.bf16.msra.mxu0 0
        %1762 = vmatprep.subr.bf16.mxu0 0
        %1763 = vmatpush2.bf16.msra.mxu0 0
        %1764 = vmatprep.subr.bf16.mxu0 0
        %1765 = vmatpush2.bf16.msra.mxu0 0
        %1766 = vmatprep.mubr.bf16.mxu0 0
        %1767 = vmatmul.mubr.bf16.gmra.mxu0 %v1732
        %v1768 = vpop.f32.mrf.mxu0
        %v1769 = vadd.f32 %v1704, %v1768
        %v1770 = vpop.f32.mrf.mxu0
        %v1771 = vpop.f32.mrf.mxu0
        %v1772 = vpop.f32.mrf.mxu0
        %1773 = vdwg.mxu0
        %vm1774 = vcmp.ge.f32.partialorder %v1769, 0.0
        %v1775 = vmul.f32 %v1769, 0.01
        %v1776 = vsel %vm1774, %v1769, %v1775
        %v1777 = vld [vmem:[#allocation20] sm:$0xf]
        %v1778 = vld [vmem:[#allocation20 + $0x4] sm:$0xf]
        %v1779 = vld [vmem:[#allocation20 + $0x8] sm:$0xf]
        %v1780 = vld [vmem:[#allocation20 + $0xc] sm:$0xf]
        %v1781 = vld [vmem:[#allocation20 + $0x10] sm:$0xf]
        %v1782 = vld [vmem:[#allocation20 + $0x14] sm:$0xf]
        %v1783 = vld [vmem:[#allocation20 + $0x18] sm:$0xf]
        %v1784 = vld [vmem:[#allocation20 + $0x1c] sm:$0xf]
        %v1785 = vld [vmem:[#allocation20 + $0x20] sm:$0xf]
        %v1786 = vld [vmem:[#allocation20 + $0x24] sm:$0xf]
        %v1787 = vld [vmem:[#allocation20 + $0x28] sm:$0xf]
        %v1788 = vld [vmem:[#allocation20 + $0x2c] sm:$0xf]
        %v1789 = vld [vmem:[#allocation20 + $0x30] sm:$0xf]
        %v1790 = vld [vmem:[#allocation20 + $0x34] sm:$0xf]
        %v1791 = vld [vmem:[#allocation20 + $0x38] sm:$0xf]
        %v1792 = vld [vmem:[#allocation20 + $0x3c] sm:$0xf]
        %v1793 = vpack.c.bf16 %v1776, %v1776
        %v1794 = vld [vmem:[#allocation22] sm:$0x1]
        %v1796 = vlaneseq
        %v1797 = vshrl.u32 %v1796, 7
        %v1798 = vsub.s32 0, %v1797
        %v1799 = vrot.slane %v1794, %v1798
        %v1817 = vunpack.c.l.b16 %v1777
        %v1818 = vunpack.c.l.b16 %v1778
        %v1819 = vunpack.c.l.b16 %v1779
        %v1820 = vunpack.c.l.b16 %v1780
        %v1821 = vunpack.c.l.b16 %v1781
        %v1822 = vunpack.c.l.b16 %v1782
        %v1823 = vunpack.c.l.b16 %v1783
        %v1824 = vunpack.c.l.b16 %v1784
        %v1825 = vunpack.c.l.b16 %v1785
        %v1826 = vunpack.c.l.b16 %v1786
        %v1827 = vunpack.c.l.b16 %v1787
        %v1828 = vunpack.c.l.b16 %v1788
        %v1829 = vunpack.c.l.b16 %v1789
        %v1830 = vunpack.c.l.b16 %v1790
        %v1831 = vunpack.c.l.b16 %v1791
        %v1832 = vunpack.c.l.b16 %v1792
        %v1833 = vpack.c.b16 %v1818, %v1817
        %v1834 = vpack.c.b16 %v1820, %v1819
        %v1835 = vpack.c.b16 %v1822, %v1821
        %v1836 = vpack.c.b16 %v1824, %v1823
        %v1837 = vpack.c.b16 %v1826, %v1825
        %v1838 = vpack.c.b16 %v1828, %v1827
        %v1839 = vpack.c.b16 %v1830, %v1829
        %v1840 = vpack.c.b16 %v1832, %v1831
        %1849 = vmatprep.subr.bf16.mxu0 0
        %1850 = vmatpush1.bf16.msra.mxu0 %v1840
        %1851 = vmatprep.subr.bf16.mxu0 0
        %1852 = vmatpush1.bf16.msra.mxu0 %v1839
        %1853 = vmatprep.subr.bf16.mxu0 0
        %1854 = vmatpush1.bf16.msra.mxu0 %v1838
        %1855 = vmatprep.subr.bf16.mxu0 0
        %1856 = vmatpush1.bf16.msra.mxu0 %v1837
        %1857 = vmatprep.subr.bf16.mxu0 0
        %1858 = vmatpush1.bf16.msra.mxu0 %v1836
        %1859 = vmatprep.subr.bf16.mxu0 0
        %1860 = vmatpush1.bf16.msra.mxu0 %v1835
        %1861 = vmatprep.subr.bf16.mxu0 0
        %1862 = vmatpush1.bf16.msra.mxu0 %v1834
        %1863 = vmatprep.subr.bf16.mxu0 0
        %1864 = vmatpush1.bf16.msra.mxu0 %v1833
        %1865 = vmatprep.subr.bf16.mxu0 0
        %1866 = vmatpush2.bf16.msra.mxu0 0
        %1867 = vmatprep.subr.bf16.mxu0 0
        %1868 = vmatpush2.bf16.msra.mxu0 0
        %1869 = vmatprep.subr.bf16.mxu0 0
        %1870 = vmatpush2.bf16.msra.mxu0 0
        %1871 = vmatprep.subr.bf16.mxu0 0
        %1872 = vmatpush2.bf16.msra.mxu0 0
        %1873 = vmatprep.subr.bf16.mxu0 0
        %1874 = vmatpush2.bf16.msra.mxu0 0
        %1875 = vmatprep.subr.bf16.mxu0 0
        %1876 = vmatpush2.bf16.msra.mxu0 0
        %1877 = vmatprep.subr.bf16.mxu0 0
        %1878 = vmatpush2.bf16.msra.mxu0 0
        %1879 = vmatprep.subr.bf16.mxu0 0
        %1880 = vmatpush2.bf16.msra.mxu0 0
        %1881 = vmatprep.mubr.bf16.mxu0 0
        %1882 = vmatmul.mubr.bf16.gmra.mxu0 %v1793
        %v1883 = vpop.f32.mrf.mxu0
        %v1884 = vadd.f32 %v1799, %v1883
        %v1885 = vpop.f32.mrf.mxu0
        %v1886 = vpop.f32.mrf.mxu0
        %v1887 = vpop.f32.mrf.mxu0
        %1888 = vdwg.mxu0
        %vm1889 = vcmp.ge.f32.partialorder %v1884, 0.0
        %v1890 = vmul.f32 %v1884, 0.01
        %v1891 = vsel %vm1889, %v1884, %v1890
        %v1892 = vld [vmem:[#allocation23] sm:$0xff]
        %v1893 = vld [vmem:[#allocation23 + $0x8] sm:$0xff]
        %v1894 = vld [vmem:[#allocation23 + $0x10] sm:$0xff]
        %v1895 = vld [vmem:[#allocation23 + $0x18] sm:$0xff]
        %v1896 = vld [vmem:[#allocation23 + $0x20] sm:$0xff]
        %v1897 = vld [vmem:[#allocation23 + $0x28] sm:$0xff]
        %v1898 = vld [vmem:[#allocation23 + $0x30] sm:$0xff]
        %v1899 = vld [vmem:[#allocation23 + $0x38] sm:$0xff]
        %v1900 = vld [vmem:[#allocation23 + $0x40] sm:$0xff]
        %v1901 = vld [vmem:[#allocation23 + $0x48] sm:$0xff]
        %v1902 = vld [vmem:[#allocation23 + $0x50] sm:$0xff]
        %v1903 = vld [vmem:[#allocation23 + $0x58] sm:$0xff]
        %v1904 = vld [vmem:[#allocation23 + $0x60] sm:$0xff]
        %v1905 = vld [vmem:[#allocation23 + $0x68] sm:$0xff]
        %v1906 = vld [vmem:[#allocation23 + $0x70] sm:$0xff]
        %v1907 = vld [vmem:[#allocation23 + $0x78] sm:$0xff]
        %v1908 = vpack.c.bf16 %v1891, %v1891
        %v1909 = vld [vmem:[#allocation25] sm:$0x3]
        %v1911 = vlaneseq
        %v1912 = vshrl.u32 %v1911, 7
        %v1913 = vsub.s32 0, %v1912
        %v1914 = vrot.slane %v1909, %v1913
        %v1915 = vlaneseq
        %v1916 = vshrl.u32 %v1915, 7
        %v1917 = vsub.s32 1, %v1916
        %v1918 = vrot.slane %v1909, %v1917
        %v1937 = vunpack.c.l.b16 %v1892
        %v1938 = vunpack.c.h.b16 %v1892
        %v1939 = vunpack.c.l.b16 %v1893
        %v1940 = vunpack.c.h.b16 %v1893
        %v1941 = vunpack.c.l.b16 %v1894
        %v1942 = vunpack.c.h.b16 %v1894
        %v1943 = vunpack.c.l.b16 %v1895
        %v1944 = vunpack.c.h.b16 %v1895
        %v1945 = vunpack.c.l.b16 %v1896
        %v1946 = vunpack.c.h.b16 %v1896
        %v1947 = vunpack.c.l.b16 %v1897
        %v1948 = vunpack.c.h.b16 %v1897
        %v1949 = vunpack.c.l.b16 %v1898
        %v1950 = vunpack.c.h.b16 %v1898
        %v1951 = vunpack.c.l.b16 %v1899
        %v1952 = vunpack.c.h.b16 %v1899
        %v1953 = vunpack.c.l.b16 %v1900
        %v1954 = vunpack.c.h.b16 %v1900
        %v1955 = vunpack.c.l.b16 %v1901
        %v1956 = vunpack.c.h.b16 %v1901
        %v1957 = vunpack.c.l.b16 %v1902
        %v1958 = vunpack.c.h.b16 %v1902
        %v1959 = vunpack.c.l.b16 %v1903
        %v1960 = vunpack.c.h.b16 %v1903
        %v1961 = vunpack.c.l.b16 %v1904
        %v1962 = vunpack.c.h.b16 %v1904
        %v1963 = vunpack.c.l.b16 %v1905
        %v1964 = vunpack.c.h.b16 %v1905
        %v1965 = vunpack.c.l.b16 %v1906
        %v1966 = vunpack.c.h.b16 %v1906
        %v1967 = vunpack.c.l.b16 %v1907
        %v1968 = vunpack.c.h.b16 %v1907
        %v1969 = vpack.c.b16 %v1939, %v1937
        %v1970 = vpack.c.b16 %v1940, %v1938
        %v1971 = vpack.c.b16 %v1943, %v1941
        %v1972 = vpack.c.b16 %v1944, %v1942
        %v1973 = vpack.c.b16 %v1947, %v1945
        %v1974 = vpack.c.b16 %v1948, %v1946
        %v1975 = vpack.c.b16 %v1951, %v1949
        %v1976 = vpack.c.b16 %v1952, %v1950
        %v1977 = vpack.c.b16 %v1955, %v1953
        %v1978 = vpack.c.b16 %v1956, %v1954
        %v1979 = vpack.c.b16 %v1959, %v1957
        %v1980 = vpack.c.b16 %v1960, %v1958
        %v1981 = vpack.c.b16 %v1963, %v1961
        %v1982 = vpack.c.b16 %v1964, %v1962
        %v1983 = vpack.c.b16 %v1967, %v1965
        %v1984 = vpack.c.b16 %v1968, %v1966
        %2001 = vmatprep.subr.bf16.mxu0 %v1984
        %2002 = vmatpush1.bf16.msra.mxu0 %v1983
        %2003 = vmatprep.subr.bf16.mxu0 %v1982
        %2004 = vmatpush1.bf16.msra.mxu0 %v1981
        %2005 = vmatprep.subr.bf16.mxu0 %v1980
        %2006 = vmatpush1.bf16.msra.mxu0 %v1979
        %2007 = vmatprep.subr.bf16.mxu0 %v1978
        %2008 = vmatpush1.bf16.msra.mxu0 %v1977
        %2009 = vmatprep.subr.bf16.mxu0 %v1976
        %2010 = vmatpush1.bf16.msra.mxu0 %v1975
        %2011 = vmatprep.subr.bf16.mxu0 %v1974
        %2012 = vmatpush1.bf16.msra.mxu0 %v1973
        %2013 = vmatprep.subr.bf16.mxu0 %v1972
        %2014 = vmatpush1.bf16.msra.mxu0 %v1971
        %2015 = vmatprep.subr.bf16.mxu0 %v1970
        %2016 = vmatpush1.bf16.msra.mxu0 %v1969
        %2017 = vmatprep.subr.bf16.mxu0 0
        %2018 = vmatpush2.bf16.msra.mxu0 0
        %2019 = vmatprep.subr.bf16.mxu0 0
        %2020 = vmatpush2.bf16.msra.mxu0 0
        %2021 = vmatprep.subr.bf16.mxu0 0
        %2022 = vmatpush2.bf16.msra.mxu0 0
        %2023 = vmatprep.subr.bf16.mxu0 0
        %2024 = vmatpush2.bf16.msra.mxu0 0
        %2025 = vmatprep.subr.bf16.mxu0 0
        %2026 = vmatpush2.bf16.msra.mxu0 0
        %2027 = vmatprep.subr.bf16.mxu0 0
        %2028 = vmatpush2.bf16.msra.mxu0 0
        %2029 = vmatprep.subr.bf16.mxu0 0
        %2030 = vmatpush2.bf16.msra.mxu0 0
        %2031 = vmatprep.subr.bf16.mxu0 0
        %2032 = vmatpush2.bf16.msra.mxu0 0
        %2033 = vmatprep.mubr.bf16.mxu0 0
        %2034 = vmatmul.mubr.bf16.gmra.mxu0 %v1908
        %v2035 = vpop.f32.mrf.mxu0
        %v2036 = vadd.f32 %v1914, %v2035
        %v2037 = vpop.f32.mrf.mxu0
        %v2038 = vadd.f32 %v1918, %v2037
        %v2039 = vpop.f32.mrf.mxu0
        %v2040 = vpop.f32.mrf.mxu0
        %2041 = vdwg.mxu0
        %v2042 = vld [vmem:[#allocation26] sm:$0xf]
        %v2043 = vld [vmem:[#allocation26 + $0x4] sm:$0xf]
        %v2044 = vld [vmem:[#allocation26 + $0x8] sm:$0xf]
        %v2045 = vld [vmem:[#allocation26 + $0xc] sm:$0xf]
        %v2046 = vld [vmem:[#allocation26 + $0x10] sm:$0xf]
        %v2047 = vld [vmem:[#allocation26 + $0x14] sm:$0xf]
        %v2048 = vld [vmem:[#allocation26 + $0x18] sm:$0xf]
        %v2049 = vld [vmem:[#allocation26 + $0x1c] sm:$0xf]
        %v2050 = vld [vmem:[#allocation26 + $0x20] sm:$0xf]
        %v2051 = vld [vmem:[#allocation26 + $0x24] sm:$0xf]
        %v2052 = vld [vmem:[#allocation26 + $0x28] sm:$0xf]
        %v2053 = vld [vmem:[#allocation26 + $0x2c] sm:$0xf]
        %v2054 = vld [vmem:[#allocation26 + $0x30] sm:$0xf]
        %v2055 = vld [vmem:[#allocation26 + $0x34] sm:$0xf]
        %v2056 = vld [vmem:[#allocation26 + $0x38] sm:$0xf]
        %v2057 = vld [vmem:[#allocation26 + $0x3c] sm:$0xf]
        %v2058 = vld [vmem:[#allocation26 + $0x40] sm:$0xf]
        %v2059 = vld [vmem:[#allocation26 + $0x44] sm:$0xf]
        %v2060 = vld [vmem:[#allocation26 + $0x48] sm:$0xf]
        %v2061 = vld [vmem:[#allocation26 + $0x4c] sm:$0xf]
        %v2062 = vld [vmem:[#allocation26 + $0x50] sm:$0xf]
        %v2063 = vld [vmem:[#allocation26 + $0x54] sm:$0xf]
        %v2064 = vld [vmem:[#allocation26 + $0x58] sm:$0xf]
        %v2065 = vld [vmem:[#allocation26 + $0x5c] sm:$0xf]
        %v2066 = vld [vmem:[#allocation26 + $0x60] sm:$0xf]
        %v2067 = vld [vmem:[#allocation26 + $0x64] sm:$0xf]
        %v2068 = vld [vmem:[#allocation26 + $0x68] sm:$0xf]
        %v2069 = vld [vmem:[#allocation26 + $0x6c] sm:$0xf]
        %v2070 = vld [vmem:[#allocation26 + $0x70] sm:$0xf]
        %v2071 = vld [vmem:[#allocation26 + $0x74] sm:$0xf]
        %v2072 = vld [vmem:[#allocation26 + $0x78] sm:$0xf]
        %v2073 = vld [vmem:[#allocation26 + $0x7c] sm:$0xf]
        %v2074 = vld [vmem:[#allocation28] sm:$0x1]
        %v2076 = vlaneseq
        %v2077 = vshrl.u32 %v2076, 7
        %v2078 = vsub.s32 0, %v2077
        %v2079 = vrot.slane %v2074, %v2078
        %v2113 = vunpack.c.l.b16 %v2042
        %v2114 = vunpack.c.l.b16 %v2043
        %v2115 = vunpack.c.l.b16 %v2044
        %v2116 = vunpack.c.l.b16 %v2045
        %v2117 = vunpack.c.l.b16 %v2046
        %v2118 = vunpack.c.l.b16 %v2047
        %v2119 = vunpack.c.l.b16 %v2048
        %v2120 = vunpack.c.l.b16 %v2049
        %v2121 = vunpack.c.l.b16 %v2050
        %v2122 = vunpack.c.l.b16 %v2051
        %v2123 = vunpack.c.l.b16 %v2052
        %v2124 = vunpack.c.l.b16 %v2053
        %v2125 = vunpack.c.l.b16 %v2054
        %v2126 = vunpack.c.l.b16 %v2055
        %v2127 = vunpack.c.l.b16 %v2056
        %v2128 = vunpack.c.l.b16 %v2057
        %v2129 = vunpack.c.l.b16 %v2058
        %v2130 = vunpack.c.l.b16 %v2059
        %v2131 = vunpack.c.l.b16 %v2060
        %v2132 = vunpack.c.l.b16 %v2061
        %v2133 = vunpack.c.l.b16 %v2062
        %v2134 = vunpack.c.l.b16 %v2063
        %v2135 = vunpack.c.l.b16 %v2064
        %v2136 = vunpack.c.l.b16 %v2065
        %v2137 = vunpack.c.l.b16 %v2066
        %v2138 = vunpack.c.l.b16 %v2067
        %v2139 = vunpack.c.l.b16 %v2068
        %v2140 = vunpack.c.l.b16 %v2069
        %v2141 = vunpack.c.l.b16 %v2070
        %v2142 = vunpack.c.l.b16 %v2071
        %v2143 = vunpack.c.l.b16 %v2072
        %v2144 = vunpack.c.l.b16 %v2073
        %v2145 = vpack.c.b16 %v2114, %v2113
        %v2146 = vpack.c.b16 %v2116, %v2115
        %v2147 = vpack.c.b16 %v2118, %v2117
        %v2148 = vpack.c.b16 %v2120, %v2119
        %v2149 = vpack.c.b16 %v2122, %v2121
        %v2150 = vpack.c.b16 %v2124, %v2123
        %v2151 = vpack.c.b16 %v2126, %v2125
        %v2152 = vpack.c.b16 %v2128, %v2127
        %v2153 = vpack.c.b16 %v2130, %v2129
        %v2154 = vpack.c.b16 %v2132, %v2131
        %v2155 = vpack.c.b16 %v2134, %v2133
        %v2156 = vpack.c.b16 %v2136, %v2135
        %v2157 = vpack.c.b16 %v2138, %v2137
        %v2158 = vpack.c.b16 %v2140, %v2139
        %v2159 = vpack.c.b16 %v2142, %v2141
        %v2160 = vpack.c.b16 %v2144, %v2143
        %2177 = vmatprep.subr.bf16.mxu0 0
        %2178 = vmatpush1.bf16.msra.mxu0 %v2152
        %2179 = vmatprep.subr.bf16.mxu0 0
        %2180 = vmatpush1.bf16.msra.mxu0 %v2151
        %2181 = vmatprep.subr.bf16.mxu0 0
        %2182 = vmatpush1.bf16.msra.mxu0 %v2150
        %2183 = vmatprep.subr.bf16.mxu0 0
        %2184 = vmatpush1.bf16.msra.mxu0 %v2149
        %2185 = vmatprep.subr.bf16.mxu0 0
        %2186 = vmatpush1.bf16.msra.mxu0 %v2148
        %2187 = vmatprep.subr.bf16.mxu0 0
        %2188 = vmatpush1.bf16.msra.mxu0 %v2147
        %2189 = vmatprep.subr.bf16.mxu0 0
        %2190 = vmatpush1.bf16.msra.mxu0 %v2146
        %2191 = vmatprep.subr.bf16.mxu0 0
        %2192 = vmatpush1.bf16.msra.mxu0 %v2145
        %2193 = vmatprep.subr.bf16.mxu0 0
        %2194 = vmatpush2.bf16.msra.mxu0 %v2160
        %2195 = vmatprep.subr.bf16.mxu0 0
        %2196 = vmatpush2.bf16.msra.mxu0 %v2159
        %2197 = vmatprep.subr.bf16.mxu0 0
        %2198 = vmatpush2.bf16.msra.mxu0 %v2158
        %2199 = vmatprep.subr.bf16.mxu0 0
        %2200 = vmatpush2.bf16.msra.mxu0 %v2157
        %2201 = vmatprep.subr.bf16.mxu0 0
        %2202 = vmatpush2.bf16.msra.mxu0 %v2156
        %2203 = vmatprep.subr.bf16.mxu0 0
        %2204 = vmatpush2.bf16.msra.mxu0 %v2155
        %2205 = vmatprep.subr.bf16.mxu0 0
        %2206 = vmatpush2.bf16.msra.mxu0 %v2154
        %2207 = vmatprep.subr.bf16.mxu0 0
        %2208 = vmatpush2.bf16.msra.mxu0 %v2153
        %2209 = vmatprep.mubr.bf16.mxu0 %v1303
        %2210 = vmatmul.mubr.bf16.gmra.mxu0 %v1302
        %v2211 = vpop.f32.mrf.mxu0
        %v2212 = vadd.f32 %v2079, %v2211
        %v2213 = vpop.f32.mrf.mxu0
        %v2214 = vpop.f32.mrf.mxu0
        %v2215 = vpop.f32.mrf.mxu0
        %2216 = vdwg.mxu0
        %vm2217 = vcmp.ge.f32.partialorder %v2212, 0.0
        %v2218 = vmul.f32 %v2212, 0.01
        %v2219 = vsel %vm2217, %v2212, %v2218
        %v2220 = vld [vmem:[%s37] sm:$0xf]
        %v2221 = vld [vmem:[%s37 + $0x4] sm:$0xf]
        %v2222 = vld [vmem:[%s37 + $0x8] sm:$0xf]
        %v2223 = vld [vmem:[%s37 + $0xc] sm:$0xf]
        %v2224 = vld [vmem:[%s37 + $0x10] sm:$0xf]
        %v2225 = vld [vmem:[%s37 + $0x14] sm:$0xf]
        %v2226 = vld [vmem:[%s37 + $0x18] sm:$0xf]
        %v2227 = vld [vmem:[%s37 + $0x1c] sm:$0xf]
        %v2228 = vld [vmem:[%s37 + $0x20] sm:$0xf]
        %v2229 = vld [vmem:[%s37 + $0x24] sm:$0xf]
        %v2230 = vld [vmem:[%s37 + $0x28] sm:$0xf]
        %v2231 = vld [vmem:[%s37 + $0x2c] sm:$0xf]
        %v2232 = vld [vmem:[%s37 + $0x30] sm:$0xf]
        %v2233 = vld [vmem:[%s37 + $0x34] sm:$0xf]
        %v2234 = vld [vmem:[%s37 + $0x38] sm:$0xf]
        %v2235 = vld [vmem:[%s37 + $0x3c] sm:$0xf]
        %v2236 = vpack.c.bf16 %v2219, %v2219
        %v2237 = vld [vmem:[#allocation29] sm:$0x1]
        %v2239 = vlaneseq
        %v2240 = vshrl.u32 %v2239, 7
        %v2241 = vsub.s32 0, %v2240
        %v2242 = vrot.slane %v2237, %v2241
        %v2260 = vunpack.c.l.b16 %v2220
        %v2261 = vunpack.c.l.b16 %v2221
        %v2262 = vunpack.c.l.b16 %v2222
        %v2263 = vunpack.c.l.b16 %v2223
        %v2264 = vunpack.c.l.b16 %v2224
        %v2265 = vunpack.c.l.b16 %v2225
        %v2266 = vunpack.c.l.b16 %v2226
        %v2267 = vunpack.c.l.b16 %v2227
        %v2268 = vunpack.c.l.b16 %v2228
        %v2269 = vunpack.c.l.b16 %v2229
        %v2270 = vunpack.c.l.b16 %v2230
        %v2271 = vunpack.c.l.b16 %v2231
        %v2272 = vunpack.c.l.b16 %v2232
        %v2273 = vunpack.c.l.b16 %v2233
        %v2274 = vunpack.c.l.b16 %v2234
        %v2275 = vunpack.c.l.b16 %v2235
        %v2276 = vpack.c.b16 %v2261, %v2260
        %v2277 = vpack.c.b16 %v2263, %v2262
        %v2278 = vpack.c.b16 %v2265, %v2264
        %v2279 = vpack.c.b16 %v2267, %v2266
        %v2280 = vpack.c.b16 %v2269, %v2268
        %v2281 = vpack.c.b16 %v2271, %v2270
        %v2282 = vpack.c.b16 %v2273, %v2272
        %v2283 = vpack.c.b16 %v2275, %v2274
        %2292 = vmatprep.subr.bf16.mxu0 0
        %2293 = vmatpush1.bf16.msra.mxu0 %v2283
        %2294 = vmatprep.subr.bf16.mxu0 0
        %2295 = vmatpush1.bf16.msra.mxu0 %v2282
        %2296 = vmatprep.subr.bf16.mxu0 0
        %2297 = vmatpush1.bf16.msra.mxu0 %v2281
        %2298 = vmatprep.subr.bf16.mxu0 0
        %2299 = vmatpush1.bf16.msra.mxu0 %v2280
        %2300 = vmatprep.subr.bf16.mxu0 0
        %2301 = vmatpush1.bf16.msra.mxu0 %v2279
        %2302 = vmatprep.subr.bf16.mxu0 0
        %2303 = vmatpush1.bf16.msra.mxu0 %v2278
        %2304 = vmatprep.subr.bf16.mxu0 0
        %2305 = vmatpush1.bf16.msra.mxu0 %v2277
        %2306 = vmatprep.subr.bf16.mxu0 0
        %2307 = vmatpush1.bf16.msra.mxu0 %v2276
        %2308 = vmatprep.subr.bf16.mxu0 0
        %2309 = vmatpush2.bf16.msra.mxu0 0
        %2310 = vmatprep.subr.bf16.mxu0 0
        %2311 = vmatpush2.bf16.msra.mxu0 0
        %2312 = vmatprep.subr.bf16.mxu0 0
        %2313 = vmatpush2.bf16.msra.mxu0 0
        %2314 = vmatprep.subr.bf16.mxu0 0
        %2315 = vmatpush2.bf16.msra.mxu0 0
        %2316 = vmatprep.subr.bf16.mxu0 0
        %2317 = vmatpush2.bf16.msra.mxu0 0
        %2318 = vmatprep.subr.bf16.mxu0 0
        %2319 = vmatpush2.bf16.msra.mxu0 0
        %2320 = vmatprep.subr.bf16.mxu0 0
        %2321 = vmatpush2.bf16.msra.mxu0 0
        %2322 = vmatprep.subr.bf16.mxu0 0
        %2323 = vmatpush2.bf16.msra.mxu0 0
        %2324 = vmatprep.mubr.bf16.mxu0 0
        %2325 = vmatmul.mubr.bf16.gmra.mxu0 %v2236
        %v2326 = vpop.f32.mrf.mxu0
        %v2327 = vadd.f32 %v2242, %v2326
        %v2328 = vpop.f32.mrf.mxu0
        %v2329 = vpop.f32.mrf.mxu0
        %v2330 = vpop.f32.mrf.mxu0
        %2331 = vdwg.mxu0
        %vm2332 = vcmp.ge.f32.partialorder %v2327, 0.0
        %v2333 = vmul.f32 %v2327, 0.01
        %v2334 = vsel %vm2332, %v2327, %v2333
        %v2335 = vld [vmem:[%s41] sm:$0xf]
        %v2336 = vld [vmem:[%s41 + $0x4] sm:$0xf]
        %v2337 = vld [vmem:[%s41 + $0x8] sm:$0xf]
        %v2338 = vld [vmem:[%s41 + $0xc] sm:$0xf]
        %v2339 = vld [vmem:[%s41 + $0x10] sm:$0xf]
        %v2340 = vld [vmem:[%s41 + $0x14] sm:$0xf]
        %v2341 = vld [vmem:[%s41 + $0x18] sm:$0xf]
        %v2342 = vld [vmem:[%s41 + $0x1c] sm:$0xf]
        %v2343 = vld [vmem:[%s41 + $0x20] sm:$0xf]
        %v2344 = vld [vmem:[%s41 + $0x24] sm:$0xf]
        %v2345 = vld [vmem:[%s41 + $0x28] sm:$0xf]
        %v2346 = vld [vmem:[%s41 + $0x2c] sm:$0xf]
        %v2347 = vld [vmem:[%s41 + $0x30] sm:$0xf]
        %v2348 = vld [vmem:[%s41 + $0x34] sm:$0xf]
        %v2349 = vld [vmem:[%s41 + $0x38] sm:$0xf]
        %v2350 = vld [vmem:[%s41 + $0x3c] sm:$0xf]
        %v2351 = vpack.c.bf16 %v2334, %v2334
        %v2352 = vld [vmem:[%s43] sm:$0x1]
        %v2354 = vlaneseq
        %v2355 = vshrl.u32 %v2354, 7
        %v2356 = vsub.s32 0, %v2355
        %v2357 = vrot.slane %v2352, %v2356
        %v2375 = vunpack.c.l.b16 %v2335
        %v2376 = vunpack.c.l.b16 %v2336
        %v2377 = vunpack.c.l.b16 %v2337
        %v2378 = vunpack.c.l.b16 %v2338
        %v2379 = vunpack.c.l.b16 %v2339
        %v2380 = vunpack.c.l.b16 %v2340
        %v2381 = vunpack.c.l.b16 %v2341
        %v2382 = vunpack.c.l.b16 %v2342
        %v2383 = vunpack.c.l.b16 %v2343
        %v2384 = vunpack.c.l.b16 %v2344
        %v2385 = vunpack.c.l.b16 %v2345
        %v2386 = vunpack.c.l.b16 %v2346
        %v2387 = vunpack.c.l.b16 %v2347
        %v2388 = vunpack.c.l.b16 %v2348
        %v2389 = vunpack.c.l.b16 %v2349
        %v2390 = vunpack.c.l.b16 %v2350
        %v2391 = vpack.c.b16 %v2376, %v2375
        %v2392 = vpack.c.b16 %v2378, %v2377
        %v2393 = vpack.c.b16 %v2380, %v2379
        %v2394 = vpack.c.b16 %v2382, %v2381
        %v2395 = vpack.c.b16 %v2384, %v2383
        %v2396 = vpack.c.b16 %v2386, %v2385
        %v2397 = vpack.c.b16 %v2388, %v2387
        %v2398 = vpack.c.b16 %v2390, %v2389
        %2407 = vmatprep.subr.bf16.mxu0 0
        %2408 = vmatpush1.bf16.msra.mxu0 %v2398
        %2409 = vmatprep.subr.bf16.mxu0 0
        %2410 = vmatpush1.bf16.msra.mxu0 %v2397
        %2411 = vmatprep.subr.bf16.mxu0 0
        %2412 = vmatpush1.bf16.msra.mxu0 %v2396
        %2413 = vmatprep.subr.bf16.mxu0 0
        %2414 = vmatpush1.bf16.msra.mxu0 %v2395
        %2415 = vmatprep.subr.bf16.mxu0 0
        %2416 = vmatpush1.bf16.msra.mxu0 %v2394
        %2417 = vmatprep.subr.bf16.mxu0 0
        %2418 = vmatpush1.bf16.msra.mxu0 %v2393
        %2419 = vmatprep.subr.bf16.mxu0 0
        %2420 = vmatpush1.bf16.msra.mxu0 %v2392
        %2421 = vmatprep.subr.bf16.mxu0 0
        %2422 = vmatpush1.bf16.msra.mxu0 %v2391
        %2423 = vmatprep.subr.bf16.mxu0 0
        %2424 = vmatpush2.bf16.msra.mxu0 0
        %2425 = vmatprep.subr.bf16.mxu0 0
        %2426 = vmatpush2.bf16.msra.mxu0 0
        %2427 = vmatprep.subr.bf16.mxu0 0
        %2428 = vmatpush2.bf16.msra.mxu0 0
        %2429 = vmatprep.subr.bf16.mxu0 0
        %2430 = vmatpush2.bf16.msra.mxu0 0
        %2431 = vmatprep.subr.bf16.mxu0 0
        %2432 = vmatpush2.bf16.msra.mxu0 0
        %2433 = vmatprep.subr.bf16.mxu0 0
        %2434 = vmatpush2.bf16.msra.mxu0 0
        %2435 = vmatprep.subr.bf16.mxu0 0
        %2436 = vmatpush2.bf16.msra.mxu0 0
        %2437 = vmatprep.subr.bf16.mxu0 0
        %2438 = vmatpush2.bf16.msra.mxu0 0
        %2439 = vmatprep.mubr.bf16.mxu0 0
        %2440 = vmatmul.mubr.bf16.gmra.mxu0 %v2351
        %v2441 = vpop.f32.mrf.mxu0
        %v2442 = vadd.f32 %v2357, %v2441
        %v2443 = vpop.f32.mrf.mxu0
        %v2444 = vpop.f32.mrf.mxu0
        %v2445 = vpop.f32.mrf.mxu0
        %2446 = vdwg.mxu0
        %v2447 = vtanh.pop %v2442
        %v2448 = vmul.f32 %v2447, 1.442695
        %v2449 = vpow.pop %v2448
        %v2450 = vmul.f32 %v2449, 1.442695
        %v2451 = vpow.pop %v2450
        %vm2452 = vcmask 80896
        %v2453 = vsel %vm2452, %v2451, -inf
        %2454 = vmax.xlane.f32.xlu0 %v2453
        %v2455 = vpop.xlane.xlu0 %2454
        %v2456 = vsub.f32 %v2451, %v2455
        %v2457 = vmul.f32 %v2456, 1.442695
        %v2458 = vpow.pop %v2457
        %v2459 = vsel %vm2452, %v2458, 0.0
        %2460 = vadd.xlane.f32.xlu0 %v2459
        %v2461 = vpop.xlane.xlu0 %2460
        %v2462 = vrcp.pop %v2461
        %v2463 = vmul.f32 %v2458, %v2462
        %v2464 = vmul.f32 %v2463, 0.9999999
        %v2465 = vadd.f32 %v2464, 1e-08
        %v2466 = vld [vmem:[%s45] sm:$0xf]
        %v2467 = vld [vmem:[%s45 + $0x4] sm:$0x1]
        %v2468 = vpack.c.bf16 %v2465, %v2465
        %v2469 = vld [vmem:[%s47] sm:$0x1]
        %v2471 = vlaneseq
        %v2472 = vshrl.u32 %v2471, 7
        %v2473 = vsub.s32 0, %v2472
        %v2474 = vrot.slane %v2469, %v2473
        %v2478 = vunpack.c.l.b16 %v2466
        %v2479 = vunpack.c.l.b16 %v2467
        %v2480 = vpack.c.b16 %v2479, %v2478
        %v2482 = vsel %vm2452, %v2468, 0
        %vm2484 = vcmask 1044480
        %v2486 = vsel %vm2484, %v2480, 0
        %2488 = vmatprep.subr.bf16.mxu0 0
        %2489 = vmatpush1.bf16.msra.mxu0 0
        %2490 = vmatprep.subr.bf16.mxu0 0
        %2491 = vmatpush1.bf16.msra.mxu0 0
        %2492 = vmatprep.subr.bf16.mxu0 0
        %2493 = vmatpush1.bf16.msra.mxu0 0
        %2494 = vmatprep.subr.bf16.mxu0 0
        %2495 = vmatpush1.bf16.msra.mxu0 0
        %2496 = vmatprep.subr.bf16.mxu0 0
        %2497 = vmatpush1.bf16.msra.mxu0 0
        %2498 = vmatprep.subr.bf16.mxu0 0
        %2499 = vmatpush1.bf16.msra.mxu0 0
        %2500 = vmatprep.subr.bf16.mxu0 0
        %2501 = vmatpush1.bf16.msra.mxu0 0
        %2502 = vmatprep.subr.bf16.mxu0 0
        %2503 = vmatpush1.bf16.msra.mxu0 %v2486
        %2504 = vmatprep.subr.bf16.mxu0 0
        %2505 = vmatpush2.bf16.msra.mxu0 0
        %2506 = vmatprep.subr.bf16.mxu0 0
        %2507 = vmatpush2.bf16.msra.mxu0 0
        %2508 = vmatprep.subr.bf16.mxu0 0
        %2509 = vmatpush2.bf16.msra.mxu0 0
        %2510 = vmatprep.subr.bf16.mxu0 0
        %2511 = vmatpush2.bf16.msra.mxu0 0
        %2512 = vmatprep.subr.bf16.mxu0 0
        %2513 = vmatpush2.bf16.msra.mxu0 0
        %2514 = vmatprep.subr.bf16.mxu0 0
        %2515 = vmatpush2.bf16.msra.mxu0 0
        %2516 = vmatprep.subr.bf16.mxu0 0
        %2517 = vmatpush2.bf16.msra.mxu0 0
        %2518 = vmatprep.subr.bf16.mxu0 0
        %2519 = vmatpush2.bf16.msra.mxu0 0
        %2520 = vmatprep.mubr.bf16.mxu0 0
        %2521 = vmatmul.mubr.bf16.gmra.mxu0 %v2482
        %v2522 = vpop.f32.mrf.mxu0
        %v2523 = vadd.f32 %v2474, %v2522
        %v2524 = vpop.f32.mrf.mxu0
        %v2525 = vpop.f32.mrf.mxu0
        %v2526 = vpop.f32.mrf.mxu0
        %2527 = vdwg.mxu0
        %vm2528 = vcmp.ge.f32.partialorder %v2523, 0.0
        %v2529 = vmul.f32 %v2523, 0.01
        %v2530 = vsel %vm2528, %v2523, %v2529
        %v2531 = vld [vmem:[#allocation31] sm:$0xf]
        %v2532 = vld [vmem:[#allocation31 + $0x4] sm:$0xf]
        %v2533 = vld [vmem:[#allocation31 + $0x8] sm:$0xf]
        %v2534 = vld [vmem:[#allocation31 + $0xc] sm:$0xf]
        %v2535 = vld [vmem:[#allocation31 + $0x10] sm:$0xf]
        %v2536 = vld [vmem:[#allocation31 + $0x14] sm:$0xf]
        %v2537 = vld [vmem:[#allocation31 + $0x18] sm:$0xf]
        %v2538 = vld [vmem:[#allocation31 + $0x1c] sm:$0xf]
        %v2539 = vld [vmem:[#allocation31 + $0x20] sm:$0xf]
        %v2540 = vld [vmem:[#allocation31 + $0x24] sm:$0xf]
        %v2541 = vld [vmem:[#allocation31 + $0x28] sm:$0xf]
        %v2542 = vld [vmem:[#allocation31 + $0x2c] sm:$0xf]
        %v2543 = vld [vmem:[#allocation31 + $0x30] sm:$0xf]
        %v2544 = vld [vmem:[#allocation31 + $0x34] sm:$0xf]
        %v2545 = vld [vmem:[#allocation31 + $0x38] sm:$0xf]
        %v2546 = vld [vmem:[#allocation31 + $0x3c] sm:$0xf]
        %v2547 = vpack.c.bf16 %v2530, %v2530
        %v2548 = vld [vmem:[%s51] sm:$0x1]
        %v2550 = vlaneseq
        %v2551 = vshrl.u32 %v2550, 7
        %v2552 = vsub.s32 0, %v2551
        %v2553 = vrot.slane %v2548, %v2552
        %v2571 = vunpack.c.l.b16 %v2531
        %v2572 = vunpack.c.l.b16 %v2532
        %v2573 = vunpack.c.l.b16 %v2533
        %v2574 = vunpack.c.l.b16 %v2534
        %v2575 = vunpack.c.l.b16 %v2535
        %v2576 = vunpack.c.l.b16 %v2536
        %v2577 = vunpack.c.l.b16 %v2537
        %v2578 = vunpack.c.l.b16 %v2538
        %v2579 = vunpack.c.l.b16 %v2539
        %v2580 = vunpack.c.l.b16 %v2540
        %v2581 = vunpack.c.l.b16 %v2541
        %v2582 = vunpack.c.l.b16 %v2542
        %v2583 = vunpack.c.l.b16 %v2543
        %v2584 = vunpack.c.l.b16 %v2544
        %v2585 = vunpack.c.l.b16 %v2545
        %v2586 = vunpack.c.l.b16 %v2546
        %v2587 = vpack.c.b16 %v2572, %v2571
        %v2588 = vpack.c.b16 %v2574, %v2573
        %v2589 = vpack.c.b16 %v2576, %v2575
        %v2590 = vpack.c.b16 %v2578, %v2577
        %v2591 = vpack.c.b16 %v2580, %v2579
        %v2592 = vpack.c.b16 %v2582, %v2581
        %v2593 = vpack.c.b16 %v2584, %v2583
        %v2594 = vpack.c.b16 %v2586, %v2585
        %2603 = vmatprep.subr.bf16.mxu0 0
        %2604 = vmatpush1.bf16.msra.mxu0 %v2594
        %2605 = vmatprep.subr.bf16.mxu0 0
        %2606 = vmatpush1.bf16.msra.mxu0 %v2593
        %2607 = vmatprep.subr.bf16.mxu0 0
        %2608 = vmatpush1.bf16.msra.mxu0 %v2592
        %2609 = vmatprep.subr.bf16.mxu0 0
        %2610 = vmatpush1.bf16.msra.mxu0 %v2591
        %2611 = vmatprep.subr.bf16.mxu0 0
        %2612 = vmatpush1.bf16.msra.mxu0 %v2590
        %2613 = vmatprep.subr.bf16.mxu0 0
        %2614 = vmatpush1.bf16.msra.mxu0 %v2589
        %2615 = vmatprep.subr.bf16.mxu0 0
        %2616 = vmatpush1.bf16.msra.mxu0 %v2588
        %2617 = vmatprep.subr.bf16.mxu0 0
        %2618 = vmatpush1.bf16.msra.mxu0 %v2587
        %2619 = vmatprep.subr.bf16.mxu0 0
        %2620 = vmatpush2.bf16.msra.mxu0 0
        %2621 = vmatprep.subr.bf16.mxu0 0
        %2622 = vmatpush2.bf16.msra.mxu0 0
        %2623 = vmatprep.subr.bf16.mxu0 0
        %2624 = vmatpush2.bf16.msra.mxu0 0
        %2625 = vmatprep.subr.bf16.mxu0 0
        %2626 = vmatpush2.bf16.msra.mxu0 0
        %2627 = vmatprep.subr.bf16.mxu0 0
        %2628 = vmatpush2.bf16.msra.mxu0 0
        %2629 = vmatprep.subr.bf16.mxu0 0
        %2630 = vmatpush2.bf16.msra.mxu0 0
        %2631 = vmatprep.subr.bf16.mxu0 0
        %2632 = vmatpush2.bf16.msra.mxu0 0
        %2633 = vmatprep.subr.bf16.mxu0 0
        %2634 = vmatpush2.bf16.msra.mxu0 0
        %2635 = vmatprep.mubr.bf16.mxu0 0
        %2636 = vmatmul.mubr.bf16.gmra.mxu0 %v2547
        %v2637 = vpop.f32.mrf.mxu0
        %v2638 = vadd.f32 %v2553, %v2637
        %v2639 = vpop.f32.mrf.mxu0
        %v2640 = vpop.f32.mrf.mxu0
        %v2641 = vpop.f32.mrf.mxu0
        %2642 = vdwg.mxu0
        %vm2643 = vcmp.ge.f32.partialorder %v2638, 0.0
        %v2644 = vmul.f32 %v2638, 0.01
        %v2645 = vsel %vm2643, %v2638, %v2644
        %v2646 = vld [vmem:[%s53] sm:$0xf]
        %v2647 = vld [vmem:[%s53 + $0x4] sm:$0xf]
        %v2648 = vld [vmem:[%s53 + $0x8] sm:$0xf]
        %v2649 = vld [vmem:[%s53 + $0xc] sm:$0xf]
        %v2650 = vld [vmem:[%s53 + $0x10] sm:$0xf]
        %v2651 = vld [vmem:[%s53 + $0x14] sm:$0xf]
        %v2652 = vld [vmem:[%s53 + $0x18] sm:$0xf]
        %v2653 = vld [vmem:[%s53 + $0x1c] sm:$0xf]
        %v2654 = vld [vmem:[%s53 + $0x20] sm:$0xf]
        %v2655 = vld [vmem:[%s53 + $0x24] sm:$0xf]
        %v2656 = vld [vmem:[%s53 + $0x28] sm:$0xf]
        %v2657 = vld [vmem:[%s53 + $0x2c] sm:$0xf]
        %v2658 = vld [vmem:[%s53 + $0x30] sm:$0xf]
        %v2659 = vld [vmem:[%s53 + $0x34] sm:$0xf]
        %v2660 = vld [vmem:[%s53 + $0x38] sm:$0xf]
        %v2661 = vld [vmem:[%s53 + $0x3c] sm:$0xf]
        %v2662 = vpack.c.bf16 %v2645, %v2645
        %v2663 = vld [vmem:[%s55] sm:$0x1]
        %v2665 = vlaneseq
        %v2666 = vshrl.u32 %v2665, 7
        %v2667 = vsub.s32 0, %v2666
        %v2668 = vrot.slane %v2663, %v2667
        %v2686 = vunpack.c.l.b16 %v2646
        %v2687 = vunpack.c.l.b16 %v2647
        %v2688 = vunpack.c.l.b16 %v2648
        %v2689 = vunpack.c.l.b16 %v2649
        %v2690 = vunpack.c.l.b16 %v2650
        %v2691 = vunpack.c.l.b16 %v2651
        %v2692 = vunpack.c.l.b16 %v2652
        %v2693 = vunpack.c.l.b16 %v2653
        %v2694 = vunpack.c.l.b16 %v2654
        %v2695 = vunpack.c.l.b16 %v2655
        %v2696 = vunpack.c.l.b16 %v2656
        %v2697 = vunpack.c.l.b16 %v2657
        %v2698 = vunpack.c.l.b16 %v2658
        %v2699 = vunpack.c.l.b16 %v2659
        %v2700 = vunpack.c.l.b16 %v2660
        %v2701 = vunpack.c.l.b16 %v2661
        %v2702 = vpack.c.b16 %v2687, %v2686
        %v2703 = vpack.c.b16 %v2689, %v2688
        %v2704 = vpack.c.b16 %v2691, %v2690
        %v2705 = vpack.c.b16 %v2693, %v2692
        %v2706 = vpack.c.b16 %v2695, %v2694
        %v2707 = vpack.c.b16 %v2697, %v2696
        %v2708 = vpack.c.b16 %v2699, %v2698
        %v2709 = vpack.c.b16 %v2701, %v2700
        %2718 = vmatprep.subr.bf16.mxu0 0
        %2719 = vmatpush1.bf16.msra.mxu0 %v2709
        %2720 = vmatprep.subr.bf16.mxu0 0
        %2721 = vmatpush1.bf16.msra.mxu0 %v2708
        %2722 = vmatprep.subr.bf16.mxu0 0
        %2723 = vmatpush1.bf16.msra.mxu0 %v2707
        %2724 = vmatprep.subr.bf16.mxu0 0
        %2725 = vmatpush1.bf16.msra.mxu0 %v2706
        %2726 = vmatprep.subr.bf16.mxu0 0
        %2727 = vmatpush1.bf16.msra.mxu0 %v2705
        %2728 = vmatprep.subr.bf16.mxu0 0
        %2729 = vmatpush1.bf16.msra.mxu0 %v2704
        %2730 = vmatprep.subr.bf16.mxu0 0
        %2731 = vmatpush1.bf16.msra.mxu0 %v2703
        %2732 = vmatprep.subr.bf16.mxu0 0
        %2733 = vmatpush1.bf16.msra.mxu0 %v2702
        %2734 = vmatprep.subr.bf16.mxu0 0
        %2735 = vmatpush2.bf16.msra.mxu0 0
        %2736 = vmatprep.subr.bf16.mxu0 0
        %2737 = vmatpush2.bf16.msra.mxu0 0
        %2738 = vmatprep.subr.bf16.mxu0 0
        %2739 = vmatpush2.bf16.msra.mxu0 0
        %2740 = vmatprep.subr.bf16.mxu0 0
        %2741 = vmatpush2.bf16.msra.mxu0 0
        %2742 = vmatprep.subr.bf16.mxu0 0
        %2743 = vmatpush2.bf16.msra.mxu0 0
        %2744 = vmatprep.subr.bf16.mxu0 0
        %2745 = vmatpush2.bf16.msra.mxu0 0
        %2746 = vmatprep.subr.bf16.mxu0 0
        %2747 = vmatpush2.bf16.msra.mxu0 0
        %2748 = vmatprep.subr.bf16.mxu0 0
        %2749 = vmatpush2.bf16.msra.mxu0 0
        %2750 = vmatprep.mubr.bf16.mxu0 0
        %2751 = vmatmul.mubr.bf16.gmra.mxu0 %v2662
        %v2752 = vpop.f32.mrf.mxu0
        %v2753 = vadd.f32 %v2668, %v2752
        %v2754 = vpop.f32.mrf.mxu0
        %v2755 = vpop.f32.mrf.mxu0
        %v2756 = vpop.f32.mrf.mxu0
        %2757 = vdwg.mxu0
        %v2758 = vsub.f32 %v1267, %v2036
        %v2759 = vsub.f32 %v1268, %v2038
        %v2760 = vld [vmem:[#allocation8] sm:$0x3]
        %v2762 = vlaneseq
        %v2763 = vshrl.u32 %v2762, 7
        %v2764 = vsub.s32 0, %v2763
        %v2765 = vrot.slane %v2760, %v2764
        %v2766 = vlaneseq
        %v2767 = vshrl.u32 %v2766, 7
        %v2768 = vsub.s32 1, %v2767
        %v2769 = vrot.slane %v2760, %v2768
        %v2772 = vmul.f32 %v2758, %v2765
        %v2773 = vmul.f32 %v2759, %v2769
        %v2774 = vmul.f32 %v2772, 0.5
        %v2775 = vmul.f32 %v2773, 0.5
        %v2776 = vmul.f32 %v2774, %v2772
        %v2777 = vmul.f32 %v2775, %v2773
        %v2778 = vld [vmem:[#allocation7] sm:$0x3]
        %v2780 = vlaneseq
        %v2781 = vshrl.u32 %v2780, 7
        %v2782 = vsub.s32 0, %v2781
        %v2783 = vrot.slane %v2778, %v2782
        %v2784 = vlaneseq
        %v2785 = vshrl.u32 %v2784, 7
        %v2786 = vsub.s32 1, %v2785
        %v2787 = vrot.slane %v2778, %v2786
        %v2790 = vadd.f32 %v2776, %v2783
        %v2791 = vadd.f32 %v2777, %v2787
        %v2792 = vadd.f32 %v2790, 0.9189385
        %v2793 = vadd.f32 %v2791, 0.9189385
        %v2794 = vadd.f32 %v2792, %v2793
        %2795 = vadd.xlane.f32.xlu0 %v2794
        %v2796 = vpop.xlane.xlu0 %2795
        %v2797 = vsel %vm2452, %v2465, -inf
        %2798 = vmax.xlane.f32.xlu0 %v2797
        %v2799 = vpop.xlane.xlu0 %2798
        %v2800 = vmul.f32 %v1672, 1.442695
        %v2801 = vpow.pop %v2800
        %v2802 = vadd.f32 %v1672, 1.0
        %v2803 = vmul.f32 %v1672, %v1672
        %2805 = vrot.lane.b32.xlu0 %v2803, 64
        %v2806 = vpop.permute.xlu0 %2805
        %v2808 = vsub.f32 %v2802, %v2806
        %v2809 = vsub.f32 %v2808, %v2801
        %v2810 = vmul.f32 %v2809, -0.5
        %2812 = vrot.lane.b32.xlu0 %v2810, 64
        %v2813 = vpop.permute.xlu0 %2812
        %v2815 = vsel %vm1730, %v2813, 0.0
        %2816 = vadd.xlane.f32.xlu0 %v2815
        %v2817 = vpop.xlane.xlu0 %2816
        %v2818 = vsub.f32 %v2753, %v1672
        %v2819 = vsub.f32 -1.0, %v1672
        %v2820 = vadd.f32 %v2819, %v2801
        %v2821 = vmul.f32 %v2818, %v2818
        %2823 = vrot.lane.b32.xlu0 %v2821, 64
        %v2824 = vpop.permute.xlu0 %2823
        %v2826 = vadd.f32 %v2820, %v2824
        %v2827 = vmul.f32 %v2826, 0.5
        %2829 = vrot.lane.b32.xlu0 %v2827, 64
        %v2830 = vpop.permute.xlu0 %2829
        %v2832 = vsel %vm1730, %v2830, 0.0
        %2833 = vadd.xlane.f32.xlu0 %v2832
        %v2834 = vpop.xlane.xlu0 %2833
        %v2835 = vlog2.pop %v2465
        %v2836 = vmul.f32 %v2835, 0.6931472
        %v2837 = vsel %vm2452, %v2836, 0.0
        %2838 = vadd.xlane.f32.xlu0 %v2837
        %v2839 = vpop.xlane.xlu0 %2838
        %2840 = vst [vmem:[%s1241] sm:$0xff] %v2036
        %2841 = vst [vmem:[%s1241 + $0x8] sm:$0xff] %v2038
        %2842 = vst [vmem:[%s1248] sm:$0xff] %v1672
        %2843 = vst.msk [vmem:[%s1248 + $0x8] sm:$0xff] %vm1730, %v1689
        %2845 = vrot.lane.b32.xlu0 %v2753, 64
        %v2846 = vpop.permute.xlu0 %2845
        %vm2848 = vcmask 1048064
        %2849 = vst.msk [vmem:[%s1248 + $0x8] sm:$0xff] %vm2848, %v2846
        %2850 = vst.msk [vmem:[%s1255] sm:$0xff] %vm2452, %v2465
        %v2851 = vlaneseq
        %v2852 = vand.u32 %v2851, 127
        %vm2853 = vcmp.eq.s32.totalorder %v2852, 0
        %v2854 = vsel %vm2853, %v2796, 0.0
        %v2855 = vadd.f32 %v2854, 0.0
        %vm2856 = vcmp.eq.s32.totalorder %v2852, 1
        %v2857 = vsel %vm2856, %v2799, 0.0
        %v2858 = vadd.f32 %v2855, %v2857
        %vm2859 = vcmp.eq.s32.totalorder %v2852, 2
        %v2860 = vsel %vm2859, %v2817, 0.0
        %v2861 = vadd.f32 %v2858, %v2860
        %vm2862 = vcmp.eq.s32.totalorder %v2852, 3
        %v2863 = vsel %vm2862, %v2834, 0.0
        %v2864 = vadd.f32 %v2861, %v2863
        %vm2865 = vcmp.eq.s32.totalorder %v2852, 4
        %v2866 = vsel %vm2865, %v2839, 0.0
        %v2867 = vadd.f32 %v2864, %v2866
        %vm2868 = vcmask 64512
        %2869 = vst.msk [vmem:[%s1265] sm:$0xff] %vm2868, %v2867
        %s2870 = sand.u32 %s701, 1
        %s2871 = scalar_lea.sflag [#allocation4], %s2870
        %s2872 = sand.u32 %s701, 1
        %s2873 = smul.addr %s2872, 16
        %s2874 = scalar_lea.vmem [#allocation32], %s2873
        %s2875 = sand.u32 %s95, 1
        %s2876 = scalar_lea.sflag [#allocation34], %s2875
        %s2877 = sand.u32 %s727, 1
        %s2878 = smul.addr %s2877, 16
        %s2879 = scalar_lea.vmem [#allocation33], %s2878
        %s2880 = sand.u32 %s95, 1
        %s2881 = scalar_lea.sflag [#allocation34], %s2880
        %s2882 = sand.u32 %s753, 1
        %s2883 = smul.addr %s2882, 8
        %s2884 = scalar_lea.vmem [#allocation35], %s2883
        %p2885 = scmp.lt.s32.totalorder %s95, 1
        %s2886 = scalar_select %p2885, %s95, 1
        %s2887 = smul.addr %s2886, 8
        %s2888 = scalar_lea.vmem %s63, %s2887
        // Predicated region
        $region209: #{tpu_custom_call.1} parent=131 // pred_check
          %p2889 = pneg %p711
        $region210: #{tpu_custom_call.1} parent=131 // pred_check_branch
          %2891 = sbr.rel (%p2889) target = $region212
        $region211: #{tpu_custom_call.1} parent=131 // pred_region
          %s2893 = ssub.s32 256, 256
          %2894 = vsyncadd %s2871, %s2893
          %s2895 = smul.addr %s95, 2
          %s2896 = smul.addr %s2895, 128
          %s2897 = scalar_lea.hbm %s57, %s2896
          %s2899 = sshll.u32 %s2874, 4
          %s2900 = int_to_ptr.vmem [resolvable:$true] %s2899
          %2902 = dma.vmem_to_hbm [thread:$0]  %s2900, 256, %s2897, %s2871
        $region212: #{tpu_custom_call.1} parent=131 // pred_fallthru
          _
        // Predicated region
        $region213: #{tpu_custom_call.1} parent=131 // pred_check
          %p2903 = pneg %p737
        $region214: #{tpu_custom_call.1} parent=131 // pred_check_branch
          %2905 = sbr.rel (%p2903) target = $region216
        $region215: #{tpu_custom_call.1} parent=131 // pred_region
          %s2907 = ssub.s32 256, 256
          %2908 = vsyncadd %s2876, %s2907
          %s2909 = smul.addr %s95, 2
          %s2910 = smul.addr %s2909, 128
          %s2911 = scalar_lea.hbm %s59, %s2910
          %s2913 = sshll.u32 %s2879, 4
          %s2914 = int_to_ptr.vmem [resolvable:$true] %s2913
          %2916 = dma.vmem_to_hbm [thread:$0]  %s2914, 256, %s2911, %s2876
        $region216: #{tpu_custom_call.1} parent=131 // pred_fallthru
          _
        // Predicated region
        $region217: #{tpu_custom_call.1} parent=131 // pred_check
          %p2917 = pneg %p763
        $region218: #{tpu_custom_call.1} parent=131 // pred_check_branch
          %2919 = sbr.rel (%p2917) target = $region220
        $region219: #{tpu_custom_call.1} parent=131 // pred_region
          %s2921 = ssub.s32 128, 128
          %2922 = vsyncadd %s2881, %s2921
          %s2923 = smul.addr %s95, 128
          %s2924 = scalar_lea.hbm %s61, %s2923
          %s2926 = sshll.u32 %s2884, 4
          %s2927 = int_to_ptr.vmem [resolvable:$true] %s2926
          %2929 = dma.vmem_to_hbm [thread:$0]  %s2927, 128, %s2924, %s2881
        $region220: #{tpu_custom_call.1} parent=131 // pred_fallthru
          _
        // Predicated region
        $region221: #{tpu_custom_call.1} parent=131 // pred_check
          %p2930 = pneg %p789
        $region222: #{tpu_custom_call.1} parent=131 // pred_check_branch
          %2932 = sbr.rel (%p2930) target = $region224
        $region223: #{tpu_custom_call.1} parent=131 // pred_region
          _
        $region224: #{tpu_custom_call.1} parent=131 // pred_fallthru
          _
      $region132: #{tpu_custom_call.1} parent=5 // pred_fallthru
        _
      %p2933 = scmp.le.s32.totalorder 2, %s90
      // Predicated region
      $region225: #{tpu_custom_call.1} parent=5 // pred_check
        %p2934 = pneg %p2933
      $region226: #{tpu_custom_call.1} parent=5 // pred_check_branch
        %2936 = sbr.rel (%p2934) target = $region228
      $region227: #{tpu_custom_call.1} parent=5 // pred_region
        %s2937 = ssub.s32 %s90, 2
        // Predicated region
        $region229: #{tpu_custom_call.1} parent=227 // pred_check
          %p2938 = pneg %p717
        $region230: #{tpu_custom_call.1} parent=227 // pred_check_branch
          %2940 = sbr.rel (%p2938) target = $region232
        $region231: #{tpu_custom_call.1} parent=227 // pred_region
          %s2941 = sand.u32 %s702, 1
          %s2942 = scalar_lea.sflag [#allocation4], %s2941
          %s2943 = sand.u32 %s702, 1
          %s2944 = smul.addr %s2943, 16
          %s2945 = scalar_lea.vmem [#allocation32], %s2944
          %2946 = dma.done %s2942, 256
        $region232: #{tpu_custom_call.1} parent=227 // pred_fallthru
          _
        // Predicated region
        $region233: #{tpu_custom_call.1} parent=227 // pred_check
          %p2947 = pneg %p743
        $region234: #{tpu_custom_call.1} parent=227 // pred_check_branch
          %2949 = sbr.rel (%p2947) target = $region236
        $region235: #{tpu_custom_call.1} parent=227 // pred_region
          %s2950 = sand.u32 %s96, 1
          %s2951 = scalar_lea.sflag [#allocation34], %s2950
          %s2952 = sand.u32 %s728, 1
          %s2953 = smul.addr %s2952, 16
          %s2954 = scalar_lea.vmem [#allocation33], %s2953
          %2955 = dma.done %s2951, 256
        $region236: #{tpu_custom_call.1} parent=227 // pred_fallthru
          _
        // Predicated region
        $region237: #{tpu_custom_call.1} parent=227 // pred_check
          %p2956 = pneg %p769
        $region238: #{tpu_custom_call.1} parent=227 // pred_check_branch
          %2958 = sbr.rel (%p2956) target = $region240
        $region239: #{tpu_custom_call.1} parent=227 // pred_region
          %s2959 = sand.u32 %s96, 1
          %s2960 = scalar_lea.sflag [#allocation34], %s2959
          %s2961 = sand.u32 %s754, 1
          %s2962 = smul.addr %s2961, 8
          %s2963 = scalar_lea.vmem [#allocation35], %s2962
          %2964 = dma.done %s2960, 128
        $region240: #{tpu_custom_call.1} parent=227 // pred_fallthru
          _
        // Predicated region
        $region241: #{tpu_custom_call.1} parent=227 // pred_check
          %p2965 = pneg %p795
        $region242: #{tpu_custom_call.1} parent=227 // pred_check_branch
          %2967 = sbr.rel (%p2965) target = $region244
        $region243: #{tpu_custom_call.1} parent=227 // pred_region
          %p2968 = scmp.lt.s32.totalorder %s96, 1
          %s2969 = scalar_select %p2968, %s96, 1
          %s2970 = smul.addr %s2969, 8
          %s2971 = scalar_lea.vmem %s63, %s2970
        $region244: #{tpu_custom_call.1} parent=227 // pred_fallthru
          _
      $region228: #{tpu_custom_call.1} parent=5 // pred_fallthru
        _
    $region6: #{tpu_custom_call.1} parent=1 // loop_footer
      %s94 = sadd.s32 1, %s90
    $region7: #{tpu_custom_call.1} parent=1 // loop_footer_branch
      %89 = sbr.rel target = $region3
    $region8: #{tpu_custom_call.1} parent=1 // loop_exit
      _
    %2972 = vsyncpa [#allocation3], 1
    %s2973 = scalar_lea.sflag [#allocation3], 1
    %2974 = vsyncpa %s2973, 1
    %2975 = vsyncpa [#allocation6], 1
    %s2976 = scalar_lea.sflag [#allocation6], 1
    %2977 = vsyncpa %s2976, 1
    %2978 = vsyncpa [#allocation9], 1
    %2979 = vsyncpa [#allocation12], 1
    %2980 = vsyncpa [#allocation15], 1
    %2981 = vsyncpa [#allocation18], 1
    %2982 = vsyncpa [#allocation21], 1
    %2983 = vsyncpa [#allocation24], 1
    %2984 = vsyncpa [#allocation27], 1
    %2985 = vsyncpa [#allocation30], 1
    %2986 = vsyncpa [#allocation4], 1
    %s2987 = scalar_lea.sflag [#allocation4], 1
    %2988 = vsyncpa %s2987, 1
    %2989 = vsyncpa [#allocation34], 1
    %s2990 = scalar_lea.sflag [#allocation34], 1
    %2991 = vsyncpa %s2990, 1

</llo_original>
